<compile_context>
chip_gen: v7x
topology: tpu7x:2x2x1
jax: 0.10.0
libtpu: 0.0.40
codegen_flags: <defaults>
</compile_context>

<pallas_src>
import functools

import jax
import jax.numpy as jnp
from jax.experimental import pallas as pl
from jax.experimental.pallas import tpu as pltpu


# ----------------------------- in-kernel helpers -----------------------------

def _gelu_tanh(x):
    # tanh-form GELU (EUP transcendental); |err| vs exact erf GELU < ~1e-3.
    c = 0.7978845608028654  # sqrt(2/pi)
    return 0.5 * x * (1.0 + jnp.tanh(c * (x + 0.044715 * x * x * x)))


def _layer_norm(x, w, b, eps=1e-5):
    # Single-pass: mean and E[x^2] in one pair of lane reductions.
    mu = jnp.mean(x, axis=-1, keepdims=True)
    m2 = jnp.mean(x * x, axis=-1, keepdims=True)
    var = m2 - mu * mu
    return (x - mu) * jax.lax.rsqrt(var + eps) * w + b


def _softmax(x):
    m = jnp.max(x, axis=-1, keepdims=True)
    e = jnp.exp(x - m)
    s = jnp.sum(e, axis=-1, keepdims=True)
    return e * pl.reciprocal(s, approx=True)   # divide -> EUP approx reciprocal


# --------------------------------- kernel ------------------------------------

def mutual_self_block_kernel(rgb_ref, depth_ref, ln_ref, qkv_w_ref,
                             proj_w_ref, proj_b_ref, fc1_w_ref, fc1_b_ref,
                             fc2_w_ref, fc2_b_ref,
                             rgb_out_ref, depth_out_ref,
                             *, num_heads, tokens, batches):
    rgb = rgb_ref[...]        # (TM, C) f32, TM = batches * tokens
    depth = depth_ref[...]    # (TM, C) f32
    TM, C = rgb.shape
    hd = C // num_heads

    ln = ln_ref[...]          # (8, C)  rows: n1w,n1b,n2w,n2b,n3w,n3b,n4w,n4b
    proj_b = proj_b_ref[...]  # (2, C)  f32
    fc1_b = fc1_b_ref[...]    # (2, Hm) f32
    fc2_b = fc2_b_ref[...]    # (2, C)  f32

    # ---- norm1 / norm2 (f32, VPU) ----
    rgb_n = _layer_norm(rgb, ln[0], ln[1])
    depth_n = _layer_norm(depth, ln[2], ln[3])

    # ---- fused QKV: one (TM,C)x(C,3C) bf16 matmul per stream.
    #      The attention scale is already folded into the Q columns.
    rgb_qkv = jnp.dot(rgb_n.astype(jnp.bfloat16), qkv_w_ref[0],
                      preferred_element_type=jnp.float32)      # (TM, 3C) f32
    depth_qkv = jnp.dot(depth_n.astype(jnp.bfloat16), qkv_w_ref[1],
                        preferred_element_type=jnp.float32)

    def cross_attention(q_src, kv_src, stream):
        # q_src supplies the Q columns; kv_src supplies K and V columns
        # (mutual attention).  Head merge folded into the projection:
        #   out = sum_h softmax(q_h k_h^T) v_h @ W_proj[h*hd:(h+1)*hd, :]
        proj_base = stream * num_heads
        outs = []
        for b in range(batches):          # attention is per batch element
            rows = slice(b * tokens, (b + 1) * tokens)
            acc = None
            for h in range(num_heads):
                c0 = h * hd
                q = q_src[rows, c0:c0 + hd].astype(jnp.bfloat16)            # (N, hd)
                k = kv_src[rows, C + c0:C + c0 + hd].astype(jnp.bfloat16)   # (N, hd)
                v = kv_src[rows, 2 * C + c0:2 * C + c0 + hd].astype(jnp.bfloat16)
                s = jnp.einsum('nd,md->nm', q, k,
                               preferred_element_type=jnp.float32)          # (N, N)
                p = _softmax(s).astype(jnp.bfloat16)
                o = jnp.dot(p, v, preferred_element_type=jnp.float32)       # (N, hd)
                ph = jnp.dot(o.astype(jnp.bfloat16), proj_w_ref[proj_base + h],
                             preferred_element_type=jnp.float32)            # (N, C)
                acc = ph if acc is None else acc + ph
            outs.append(acc)
        out = outs[0] if batches == 1 else jnp.concatenate(outs, axis=0)
        return out + proj_b[stream]

    rgb_att = cross_attention(rgb_qkv, depth_qkv, 0)     # rgb queries, depth K/V
    depth_att = cross_attention(depth_qkv, rgb_qkv, 1)   # depth queries, rgb K/V

    # ---- residual 1 ----
    rgb = rgb + rgb_att
    depth = depth + depth_att

    # ---- norm3 / norm4 + MLP + residual 2 ----
    rgb_m = _layer_norm(rgb, ln[4], ln[5])
    depth_m = _layer_norm(depth, ln[6], ln[7])

    def mlp(x_n, stream):
        h = jnp.dot(x_n.astype(jnp.bfloat16), fc1_w_ref[stream],
                    preferred_element_type=jnp.float32) + fc1_b[stream]
        h = _gelu_tanh(h)
        return jnp.dot(h.astype(jnp.bfloat16), fc2_w_ref[stream],
                       preferred_element_type=jnp.float32) + fc2_b[stream]

    rgb_out_ref[...] = rgb + mlp(rgb_m, 0)
    depth_out_ref[...] = depth + mlp(depth_m, 1)


# ----------------------- one-time parameter packing ---------------------------

def pack_params(params, num_heads):
    """Init-time packing: do NOT call per forward pass."""
    C = params["proj_w"].shape[-1]
    hd = C // num_heads
    scale = hd ** (-0.5)
    # Fuse Q/K/V into one (C, 3C) matrix per stream; fold attention scale
    # into the Q columns; cast all matmul weights to bf16 (MXU-native).
    q_w = params["qkv_w"][:, 0] * scale
    k_w = params["qkv_w"][:, 1]
    v_w = params["qkv_w"][:, 2]
    qkv_packed = jnp.concatenate([q_w, k_w, v_w], axis=-1).astype(jnp.bfloat16)
    # Repack proj weights as per-head (hd, C) blocks so the head merge is
    # folded into the projection (no concat in the kernel).
    proj_heads = params["proj_w"].reshape(2, num_heads, hd, C)
    proj_heads = proj_heads.reshape(2 * num_heads, hd, C).astype(jnp.bfloat16)
    return {
        "ln": params["ln"].astype(jnp.float32),          # (8, C)
        "qkv_w": qkv_packed,                             # (2, C, 3C) bf16
        "proj_w": proj_heads,                            # (2*H, hd, C) bf16
        "proj_b": params["proj_b"].astype(jnp.float32),  # (2, C)
        "fc1_w": params["fc1_w"].astype(jnp.bfloat16),   # (2, C, Hm)
        "fc1_b": params["fc1_b"].astype(jnp.float32),    # (2, Hm)
        "fc2_w": params["fc2_w"].astype(jnp.bfloat16),   # (2, Hm, C)
        "fc2_b": params["fc2_b"].astype(jnp.float32),    # (2, C)
    }


# -------------------------------- wrapper -------------------------------------

def mutual_self_block(rgb, depth, packed, num_heads, *, block_tokens=256):
    # block_tokens ~ MXU tile height target: 256 for v6e/v7x, 128 for v5e.
    B, N, C = rgb.shape
    assert C % num_heads == 0, "num_heads must divide the channel dimension"
    assert C % 128 == 0, "channel dim must be lane-aligned (multiple of 128)"
    Hm = packed["fc1_w"].shape[-1]

    # Fold as many whole batch elements as possible into one token tile
    # (bigger M on every dense matmul) while keeping the grid parallel.
    b_tile = 1
    for d in range(B, 0, -1):
        if B % d == 0 and d * N <= max(N, block_tokens):
            b_tile = d
            break
    TM = b_tile * N
    assert TM % 8 == 0 or TM == B * N, "token tile must be sublane aligned"
    grid = (B // b_tile,)

    rgb_flat = rgb.reshape(B * N, C)
    depth_flat = depth.reshape(B * N, C)

    tok_spec = pl.BlockSpec((TM, C), lambda i: (i, 0))
    # Grid-invariant operands: whole array resident in VMEM, single copy,
    # no per-step DMA and no double buffering.
    res_spec = pl.BlockSpec(memory_space=pltpu.MemorySpace.VMEM)

    kernel = functools.partial(mutual_self_block_kernel, num_heads=num_heads,
                               tokens=N, batches=b_tile)

    # VMEM budget: resident weights + double-buffered activation tiles +
    # in-kernel temporaries (QKV, MLP hidden, per-head scores), with margin.
    weight_bytes = sum(int(v.size) * v.dtype.itemsize for v in packed.values())
    act_bytes = 2 * 2 * 2 * TM * C * 4                     # in+out, 2 streams, dbl buf
    tmp_bytes = 4 * (2 * TM * 3 * C + TM * Hm + N * N)
    vmem_limit = int(min(96 * 2 ** 20,
                         max(32 * 2 ** 20,
                             2 * (weight_bytes + act_bytes + tmp_bytes))))

    hd = C // num_heads
    flops = grid[0] * (
        2 * (2 * TM * C * 3 * C)                           # fused QKV (2 streams)
        + 2 * b_tile * num_heads * (2 * 2 * N * N * hd)    # scores + PV
        + 2 * (2 * TM * C * C)                             # proj (per-head folded)
        + 2 * (2 * TM * C * Hm + 2 * TM * Hm * C))         # MLP fc1 + fc2
    transcendentals = grid[0] * 2 * (b_tile * num_heads * N * N + TM * Hm)
    bytes_accessed = 2 * 2 * B * N * C * 4 + weight_bytes

    grid_spec = pltpu.PrefetchScalarGridSpec(
        num_scalar_prefetch=0,
        grid=grid,
        in_specs=[tok_spec, tok_spec,
                  res_spec, res_spec, res_spec, res_spec,
                  res_spec, res_spec, res_spec, res_spec],
        out_specs=[tok_spec, tok_spec],
    )

    rgb_out, depth_out = pl.pallas_call(
        kernel,
        out_shape=(jax.ShapeDtypeStruct((B * N, C), jnp.float32),
                   jax.ShapeDtypeStruct((B * N, C), jnp.float32)),
        grid_spec=grid_spec,
        compiler_params=pltpu.CompilerParams(
            dimension_semantics=("parallel",),
            vmem_limit_bytes=vmem_limit),
        input_output_aliases={0: 0, 1: 1},
        cost_estimate=pl.CostEstimate(flops=flops,
                                      transcendentals=transcendentals,
                                      bytes_accessed=bytes_accessed),
    )(rgb_flat, depth_flat, packed["ln"], packed["qkv_w"], packed["proj_w"],
      packed["proj_b"], packed["fc1_w"], packed["fc1_b"], packed["fc2_w"],
      packed["fc2_b"])

    return rgb_out.reshape(B, N, C), depth_out.reshape(B, N, C)


# --------------------------- pure-JAX reference --------------------------------

def reference(rgb, depth, p, num_heads):
    B, N, C = rgb.shape
    hd = C // num_heads
    scale = hd ** (-0.5)
    lnp = p["ln"]

    def ln(x, w, b):
        mu = x.mean(-1, keepdims=True)
        var = ((x - mu) ** 2).mean(-1, keepdims=True)
        return (x - mu) / jnp.sqrt(var + 1e-5) * w + b

    rgb_n = ln(rgb, lnp[0], lnp[1])
    depth_n = ln(depth, lnp[2], lnp[3])

    def heads(x, w):
        return (x @ w).reshape(B, N, num_heads, hd).transpose(0, 2, 1, 3)

    rq, rk, rv = (heads(rgb_n, p["qkv_w"][0, i]) for i in range(3))
    dq, dk, dv = (heads(depth_n, p["qkv_w"][1, i]) for i in range(3))

    def attn(q, k, v):
        a = jax.nn.softmax(jnp.einsum("bhnd,bhmd->bhnm", q, k) * scale, -1)
        o = jnp.einsum("bhnm,bhmd->bhnd", a, v)
        return o.transpose(0, 2, 1, 3).reshape(B, N, C)

    rgb = rgb + (attn(rq, dk, dv) @ p["proj_w"][0] + p["proj_b"][0])
    depth = depth + (attn(dq, rk, rv) @ p["proj_w"][1] + p["proj_b"][1])

    def mlp(x, i):
        h = jax.nn.gelu(x @ p["fc1_w"][i] + p["fc1_b"][i], approximate=False)
        return h @ p["fc2_w"][i] + p["fc2_b"][i]

    rgb = rgb + mlp(ln(rgb, lnp[4], lnp[5]), 0)
    depth = depth + mlp(ln(depth, lnp[6], lnp[7]), 1)
    return rgb, depth


# ---------------------------------- main ---------------------------------------

if __name__ == "__main__":
    # Lane-dense demo shapes: C = 128 so every activation / weight / output
    # last dim is a multiple of the 128-lane vreg width.
    B, N, C = 2, 8, 128
    num_heads = 4
    Hm = int(C * 4.0)   # mlp_ratio = 4.0 -> 512

    key = jax.random.PRNGKey(0)
    ks = jax.random.split(key, 12)

    rgb = jax.random.normal(ks[0], (B, N, C), jnp.float32)
    depth = jax.random.normal(ks[1], (B, N, C), jnp.float32)

    # Deterministic synthetic parameters (shapes match the PyTorch module).
    ln_w = 1.0 + 0.1 * jax.random.normal(ks[2], (4, C), jnp.float32)
    ln_b = 0.05 * jax.random.normal(ks[3], (4, C), jnp.float32)
    raw_params = {
        "ln": jnp.stack([ln_w[0], ln_b[0], ln_w[1], ln_b[1],
                         ln_w[2], ln_b[2], ln_w[3], ln_b[3]]),      # (8, C)
        "qkv_w": 0.05 * jax.random.normal(ks[4], (2, 3, C, C), jnp.float32),
        "proj_w": 0.05 * jax.random.normal(ks[5], (2, C, C), jnp.float32),
        "proj_b": 0.02 * jax.random.normal(ks[6], (2, C), jnp.float32),
        "fc1_w": 0.05 * jax.random.normal(ks[7], (2, C, Hm), jnp.float32),
        "fc1_b": 0.02 * jax.random.normal(ks[8], (2, Hm), jnp.float32),
        "fc2_w": 0.05 * jax.random.normal(ks[9], (2, Hm, C), jnp.float32),
        "fc2_b": 0.02 * jax.random.normal(ks[10], (2, C), jnp.float32),
    }

    # Reference first (uses the raw f32 parameters).
    rgb_expect, depth_expect = reference(rgb, depth, raw_params, num_heads)

    # One-time (init-style) weight packing, then the fused kernel.
    packed = pack_params(raw_params, num_heads)
    rgb_out, depth_out = mutual_self_block(rgb, depth, packed, num_heads)
    jax.block_until_ready((rgb_out, depth_out))

    # Tolerance loosened (bf16 MXU inputs + tanh-GELU + approx reciprocal).
    assert jnp.allclose(rgb_out, rgb_expect, atol=2e-2, rtol=2e-2)
    assert jnp.allclose(depth_out, depth_expect, atol=2e-2, rtol=2e-2)

    print("KERNEL_OK")
</pallas_src>

<mosaic_0001>
module attributes {stable_mosaic.version = 11 : i64} {
  func.func @mutual_self_block_kernel(%arg0: i32, %arg1: memref<16x128xf32, #tpu.memory_space<vmem>>, %arg2: memref<16x128xf32, #tpu.memory_space<vmem>>, %arg3: memref<8x128xf32, #tpu.memory_space<vmem>>, %arg4: memref<2x128x384xbf16, #tpu.memory_space<vmem>>, %arg5: memref<8x32x128xbf16, #tpu.memory_space<vmem>>, %arg6: memref<2x128xf32, #tpu.memory_space<vmem>>, %arg7: memref<2x128x512xbf16, #tpu.memory_space<vmem>>, %arg8: memref<2x512xf32, #tpu.memory_space<vmem>>, %arg9: memref<2x512x128xbf16, #tpu.memory_space<vmem>>, %arg10: memref<2x128xf32, #tpu.memory_space<vmem>>, %arg11: memref<16x128xf32, #tpu.memory_space<vmem>>, %arg12: memref<16x128xf32, #tpu.memory_space<vmem>>) attributes {dimension_semantics = [#tpu.dimension_semantics<parallel>], iteration_bounds = array<i64: 1>, scalar_prefetch = 0 : i64, scratch_operands = 0 : i64, tpu.core_type = #tpu.core_type<tc>, window_params = [{transform_indices = @transform_0, window_bounds = array<i64: 16, 128>}, {transform_indices = @transform_1, window_bounds = array<i64: 16, 128>}, {pipeline_mode = #tpu.pipeline_mode<synchronous>, transform_indices = @transform_2, window_bounds = array<i64: 8, 128>}, {pipeline_mode = #tpu.pipeline_mode<synchronous>, transform_indices = @transform_3, window_bounds = array<i64: 2, 128, 384>}, {pipeline_mode = #tpu.pipeline_mode<synchronous>, transform_indices = @transform_4, window_bounds = array<i64: 8, 32, 128>}, {pipeline_mode = #tpu.pipeline_mode<synchronous>, transform_indices = @transform_5, window_bounds = array<i64: 2, 128>}, {pipeline_mode = #tpu.pipeline_mode<synchronous>, transform_indices = @transform_6, window_bounds = array<i64: 2, 128, 512>}, {pipeline_mode = #tpu.pipeline_mode<synchronous>, transform_indices = @transform_7, window_bounds = array<i64: 2, 512>}, {pipeline_mode = #tpu.pipeline_mode<synchronous>, transform_indices = @transform_8, window_bounds = array<i64: 2, 512, 128>}, {pipeline_mode = #tpu.pipeline_mode<synchronous>, transform_indices = @transform_9, window_bounds = array<i64: 2, 128>}, {transform_indices = @transform_10, window_bounds = array<i64: 16, 128>}, {transform_indices = @transform_11, window_bounds = array<i64: 16, 128>}]} {
    %c0 = arith.constant 0 : index
    %c0_0 = arith.constant 0 : index
    %0 = vector.load %arg1[%c0, %c0_0] : memref<16x128xf32, #tpu.memory_space<vmem>>, vector<16x128xf32>
    %c0_1 = arith.constant 0 : index
    %c0_2 = arith.constant 0 : index
    %1 = vector.load %arg2[%c0_1, %c0_2] : memref<16x128xf32, #tpu.memory_space<vmem>>, vector<16x128xf32>
    %c0_3 = arith.constant 0 : index
    %c0_4 = arith.constant 0 : index
    %2 = vector.load %arg3[%c0_3, %c0_4] : memref<8x128xf32, #tpu.memory_space<vmem>>, vector<8x128xf32>
    %c0_5 = arith.constant 0 : index
    %c0_6 = arith.constant 0 : index
    %3 = vector.load %arg6[%c0_5, %c0_6] : memref<2x128xf32, #tpu.memory_space<vmem>>, vector<2x128xf32>
    %c0_7 = arith.constant 0 : index
    %c0_8 = arith.constant 0 : index
    %4 = vector.load %arg8[%c0_7, %c0_8] : memref<2x512xf32, #tpu.memory_space<vmem>>, vector<2x512xf32>
    %c0_9 = arith.constant 0 : index
    %c0_10 = arith.constant 0 : index
    %5 = vector.load %arg10[%c0_9, %c0_10] : memref<2x128xf32, #tpu.memory_space<vmem>>, vector<2x128xf32>
    %6 = vector.extract_strided_slice %2 {offsets = [0, 0], sizes = [1, 128], strides = [1, 1]} : vector<8x128xf32> to vector<1x128xf32>
    %7 = vector.shape_cast %6 : vector<1x128xf32> to vector<128xf32>
    %8 = vector.extract_strided_slice %2 {offsets = [1, 0], sizes = [1, 128], strides = [1, 1]} : vector<8x128xf32> to vector<1x128xf32>
    %9 = vector.shape_cast %8 : vector<1x128xf32> to vector<128xf32>
    %cst = arith.constant dense<0.000000e+00> : vector<16xf32>
    %10 = vector.multi_reduction <add>, %0, %cst [1] : vector<16x128xf32> to vector<16xf32>
    %11 = vector.shape_cast %10 : vector<16xf32> to vector<16x1xf32>
    %cst_11 = arith.constant 1.280000e+02 : f32
    %12 = vector.broadcast %cst_11 : f32 to vector<16x1xf32>
    %13 = arith.divf %11, %12 : vector<16x1xf32>
    %14 = arith.mulf %0, %0 : vector<16x128xf32>
    %cst_12 = arith.constant dense<0.000000e+00> : vector<16xf32>
    %15 = vector.multi_reduction <add>, %14, %cst_12 [1] : vector<16x128xf32> to vector<16xf32>
    %16 = vector.shape_cast %15 : vector<16xf32> to vector<16x1xf32>
    %cst_13 = arith.constant 1.280000e+02 : f32
    %17 = vector.broadcast %cst_13 : f32 to vector<16x1xf32>
    %18 = arith.divf %16, %17 : vector<16x1xf32>
    %19 = arith.mulf %13, %13 : vector<16x1xf32>
    %20 = arith.subf %18, %19 : vector<16x1xf32>
    %21 = vector.broadcast %13 : vector<16x1xf32> to vector<16x128xf32>
    %22 = arith.subf %0, %21 : vector<16x128xf32>
    %cst_14 = arith.constant 9.99999974E-6 : f32
    %23 = vector.broadcast %cst_14 : f32 to vector<16x1xf32>
    %24 = arith.addf %20, %23 : vector<16x1xf32>
    %25 = math.rsqrt %24 : vector<16x1xf32>
    %26 = vector.broadcast %25 : vector<16x1xf32> to vector<16x128xf32>
    %27 = arith.mulf %22, %26 : vector<16x128xf32>
    %28 = vector.shape_cast %7 : vector<128xf32> to vector<1x128xf32>
    %29 = vector.broadcast %28 : vector<1x128xf32> to vector<16x128xf32>
    %30 = arith.mulf %27, %29 : vector<16x128xf32>
    %31 = vector.shape_cast %9 : vector<128xf32> to vector<1x128xf32>
    %32 = vector.broadcast %31 : vector<1x128xf32> to vector<16x128xf32>
    %33 = arith.addf %30, %32 : vector<16x128xf32>
    %34 = vector.extract_strided_slice %2 {offsets = [2, 0], sizes = [1, 128], strides = [1, 1]} : vector<8x128xf32> to vector<1x128xf32>
    %35 = vector.shape_cast %34 : vector<1x128xf32> to vector<128xf32>
    %36 = vector.extract_strided_slice %2 {offsets = [3, 0], sizes = [1, 128], strides = [1, 1]} : vector<8x128xf32> to vector<1x128xf32>
    %37 = vector.shape_cast %36 : vector<1x128xf32> to vector<128xf32>
    %cst_15 = arith.constant dense<0.000000e+00> : vector<16xf32>
    %38 = vector.multi_reduction <add>, %1, %cst_15 [1] : vector<16x128xf32> to vector<16xf32>
    %39 = vector.shape_cast %38 : vector<16xf32> to vector<16x1xf32>
    %cst_16 = arith.constant 1.280000e+02 : f32
    %40 = vector.broadcast %cst_16 : f32 to vector<16x1xf32>
    %41 = arith.divf %39, %40 : vector<16x1xf32>
    %42 = arith.mulf %1, %1 : vector<16x128xf32>
    %cst_17 = arith.constant dense<0.000000e+00> : vector<16xf32>
    %43 = vector.multi_reduction <add>, %42, %cst_17 [1] : vector<16x128xf32> to vector<16xf32>
    %44 = vector.shape_cast %43 : vector<16xf32> to vector<16x1xf32>
    %cst_18 = arith.constant 1.280000e+02 : f32
    %45 = vector.broadcast %cst_18 : f32 to vector<16x1xf32>
    %46 = arith.divf %44, %45 : vector<16x1xf32>
    %47 = arith.mulf %41, %41 : vector<16x1xf32>
    %48 = arith.subf %46, %47 : vector<16x1xf32>
    %49 = vector.broadcast %41 : vector<16x1xf32> to vector<16x128xf32>
    %50 = arith.subf %1, %49 : vector<16x128xf32>
    %cst_19 = arith.constant 9.99999974E-6 : f32
    %51 = vector.broadcast %cst_19 : f32 to vector<16x1xf32>
    %52 = arith.addf %48, %51 : vector<16x1xf32>
    %53 = math.rsqrt %52 : vector<16x1xf32>
    %54 = vector.broadcast %53 : vector<16x1xf32> to vector<16x128xf32>
    %55 = arith.mulf %50, %54 : vector<16x128xf32>
    %56 = vector.shape_cast %35 : vector<128xf32> to vector<1x128xf32>
    %57 = vector.broadcast %56 : vector<1x128xf32> to vector<16x128xf32>
    %58 = arith.mulf %55, %57 : vector<16x128xf32>
    %59 = vector.shape_cast %37 : vector<128xf32> to vector<1x128xf32>
    %60 = vector.broadcast %59 : vector<1x128xf32> to vector<16x128xf32>
    %61 = arith.addf %58, %60 : vector<16x128xf32>
    %62 = arith.truncf %33 : vector<16x128xf32> to vector<16x128xbf16>
    %c0_20 = arith.constant 0 : index
    %c0_21 = arith.constant 0 : index
    %c0_22 = arith.constant 0 : index
    %63 = vector.load %arg4[%c0_20, %c0_21, %c0_22] : memref<2x128x384xbf16, #tpu.memory_space<vmem>>, vector<1x128x384xbf16>
    %64 = vector.shape_cast %63 : vector<1x128x384xbf16> to vector<128x384xbf16>
    %cst_23 = arith.constant dense<0.000000e+00> : vector<16x384xf32>
    %65 = tpu.matmul %62, %64, %cst_23 {dimension_numbers = #tpu.dot_dimension_numbers<[1], [0], [0], [1], [0, 0, 1, 1], [], []>} : vector<16x128xbf16>, vector<128x384xbf16>, vector<16x384xf32> -> vector<16x384xf32>
    %66 = arith.truncf %61 : vector<16x128xf32> to vector<16x128xbf16>
    %c1 = arith.constant 1 : index
    %c0_24 = arith.constant 0 : index
    %c0_25 = arith.constant 0 : index
    %67 = vector.load %arg4[%c1, %c0_24, %c0_25] : memref<2x128x384xbf16, #tpu.memory_space<vmem>>, vector<1x128x384xbf16>
    %68 = vector.shape_cast %67 : vector<1x128x384xbf16> to vector<128x384xbf16>
    %cst_26 = arith.constant dense<0.000000e+00> : vector<16x384xf32>
    %69 = tpu.matmul %66, %68, %cst_26 {dimension_numbers = #tpu.dot_dimension_numbers<[1], [0], [0], [1], [0, 0, 1, 1], [], []>} : vector<16x128xbf16>, vector<128x384xbf16>, vector<16x384xf32> -> vector<16x384xf32>
    %70 = vector.extract_strided_slice %65 {offsets = [0, 0], sizes = [8, 32], strides = [1, 1]} : vector<16x384xf32> to vector<8x32xf32>
    %71 = arith.truncf %70 : vector<8x32xf32> to vector<8x32xbf16>
    %72 = vector.extract_strided_slice %69 {offsets = [0, 128], sizes = [8, 32], strides = [1, 1]} : vector<16x384xf32> to vector<8x32xf32>
    %73 = arith.truncf %72 : vector<8x32xf32> to vector<8x32xbf16>
    %74 = vector.extract_strided_slice %69 {offsets = [0, 256], sizes = [8, 32], strides = [1, 1]} : vector<16x384xf32> to vector<8x32xf32>
    %75 = arith.truncf %74 : vector<8x32xf32> to vector<8x32xbf16>
    "tpu.trace_start"() <{level = 10 : i32, message = "nd,md->nm"}> : () -> ()
    %cst_27 = arith.constant dense<0.000000e+00> : vector<8x8xf32>
    %76 = tpu.matmul %71, %73, %cst_27 {dimension_numbers = #tpu.dot_dimension_numbers<[1], [1], [0], [0], [0, 0, 1, 0], [], []>} : vector<8x32xbf16>, vector<8x32xbf16>, vector<8x8xf32> -> vector<8x8xf32>
    "tpu.trace_stop"() : () -> ()
    %cst_28 = arith.constant dense<0xFF800000> : vector<8xf32>
    %77 = vector.multi_reduction <maximumf>, %76, %cst_28 [1] : vector<8x8xf32> to vector<8xf32>
    %78 = vector.shape_cast %77 : vector<8xf32> to vector<8x1xf32>
    %79 = vector.broadcast %78 : vector<8x1xf32> to vector<8x8xf32>
    %80 = arith.subf %76, %79 : vector<8x8xf32>
    %81 = math.exp %80 : vector<8x8xf32>
    %cst_29 = arith.constant dense<0.000000e+00> : vector<8xf32>
    %82 = vector.multi_reduction <add>, %81, %cst_29 [1] : vector<8x8xf32> to vector<8xf32>
    %83 = vector.shape_cast %82 : vector<8xf32> to vector<8x1xf32>
    %84 = tpu.reciprocal %83 {approx = true} : vector<8x1xf32> -> vector<8x1xf32>
    %85 = vector.broadcast %84 : vector<8x1xf32> to vector<8x8xf32>
    %86 = arith.mulf %81, %85 : vector<8x8xf32>
    %87 = arith.truncf %86 : vector<8x8xf32> to vector<8x8xbf16>
    %cst_30 = arith.constant dense<0.000000e+00> : vector<8x32xf32>
    %88 = tpu.matmul %87, %75, %cst_30 {dimension_numbers = #tpu.dot_dimension_numbers<[1], [0], [0], [1], [0, 0, 1, 1], [], []>} : vector<8x8xbf16>, vector<8x32xbf16>, vector<8x32xf32> -> vector<8x32xf32>
    %89 = arith.truncf %88 : vector<8x32xf32> to vector<8x32xbf16>
    %c0_31 = arith.constant 0 : index
    %c0_32 = arith.constant 0 : index
    %c0_33 = arith.constant 0 : index
    %90 = vector.load %arg5[%c0_31, %c0_32, %c0_33] : memref<8x32x128xbf16, #tpu.memory_space<vmem>>, vector<1x32x128xbf16>
    %91 = vector.shape_cast %90 : vector<1x32x128xbf16> to vector<32x128xbf16>
    %cst_34 = arith.constant dense<0.000000e+00> : vector<8x128xf32>
    %92 = tpu.matmul %89, %91, %cst_34 {dimension_numbers = #tpu.dot_dimension_numbers<[1], [0], [0], [1], [0, 0, 1, 1], [], []>} : vector<8x32xbf16>, vector<32x128xbf16>, vector<8x128xf32> -> vector<8x128xf32>
    %93 = vector.extract_strided_slice %65 {offsets = [0, 32], sizes = [8, 32], strides = [1, 1]} : vector<16x384xf32> to vector<8x32xf32>
    %94 = arith.truncf %93 : vector<8x32xf32> to vector<8x32xbf16>
    %95 = vector.extract_strided_slice %69 {offsets = [0, 160], sizes = [8, 32], strides = [1, 1]} : vector<16x384xf32> to vector<8x32xf32>
    %96 = arith.truncf %95 : vector<8x32xf32> to vector<8x32xbf16>
    %97 = vector.extract_strided_slice %69 {offsets = [0, 288], sizes = [8, 32], strides = [1, 1]} : vector<16x384xf32> to vector<8x32xf32>
    %98 = arith.truncf %97 : vector<8x32xf32> to vector<8x32xbf16>
    "tpu.trace_start"() <{level = 10 : i32, message = "nd,md->nm"}> : () -> ()
    %cst_35 = arith.constant dense<0.000000e+00> : vector<8x8xf32>
    %99 = tpu.matmul %94, %96, %cst_35 {dimension_numbers = #tpu.dot_dimension_numbers<[1], [1], [0], [0], [0, 0, 1, 0], [], []>} : vector<8x32xbf16>, vector<8x32xbf16>, vector<8x8xf32> -> vector<8x8xf32>
    "tpu.trace_stop"() : () -> ()
    %cst_36 = arith.constant dense<0xFF800000> : vector<8xf32>
    %100 = vector.multi_reduction <maximumf>, %99, %cst_36 [1] : vector<8x8xf32> to vector<8xf32>
    %101 = vector.shape_cast %100 : vector<8xf32> to vector<8x1xf32>
    %102 = vector.broadcast %101 : vector<8x1xf32> to vector<8x8xf32>
    %103 = arith.subf %99, %102 : vector<8x8xf32>
    %104 = math.exp %103 : vector<8x8xf32>
    %cst_37 = arith.constant dense<0.000000e+00> : vector<8xf32>
    %105 = vector.multi_reduction <add>, %104, %cst_37 [1] : vector<8x8xf32> to vector<8xf32>
    %106 = vector.shape_cast %105 : vector<8xf32> to vector<8x1xf32>
    %107 = tpu.reciprocal %106 {approx = true} : vector<8x1xf32> -> vector<8x1xf32>
    %108 = vector.broadcast %107 : vector<8x1xf32> to vector<8x8xf32>
    %109 = arith.mulf %104, %108 : vector<8x8xf32>
    %110 = arith.truncf %109 : vector<8x8xf32> to vector<8x8xbf16>
    %cst_38 = arith.constant dense<0.000000e+00> : vector<8x32xf32>
    %111 = tpu.matmul %110, %98, %cst_38 {dimension_numbers = #tpu.dot_dimension_numbers<[1], [0], [0], [1], [0, 0, 1, 1], [], []>} : vector<8x8xbf16>, vector<8x32xbf16>, vector<8x32xf32> -> vector<8x32xf32>
    %112 = arith.truncf %111 : vector<8x32xf32> to vector<8x32xbf16>
    %c1_39 = arith.constant 1 : index
    %c0_40 = arith.constant 0 : index
    %c0_41 = arith.constant 0 : index
    %113 = vector.load %arg5[%c1_39, %c0_40, %c0_41] : memref<8x32x128xbf16, #tpu.memory_space<vmem>>, vector<1x32x128xbf16>
    %114 = vector.shape_cast %113 : vector<1x32x128xbf16> to vector<32x128xbf16>
    %cst_42 = arith.constant dense<0.000000e+00> : vector<8x128xf32>
    %115 = tpu.matmul %112, %114, %cst_42 {dimension_numbers = #tpu.dot_dimension_numbers<[1], [0], [0], [1], [0, 0, 1, 1], [], []>} : vector<8x32xbf16>, vector<32x128xbf16>, vector<8x128xf32> -> vector<8x128xf32>
    %116 = arith.addf %92, %115 : vector<8x128xf32>
    %117 = vector.extract_strided_slice %65 {offsets = [0, 64], sizes = [8, 32], strides = [1, 1]} : vector<16x384xf32> to vector<8x32xf32>
    %118 = arith.truncf %117 : vector<8x32xf32> to vector<8x32xbf16>
    %119 = vector.extract_strided_slice %69 {offsets = [0, 192], sizes = [8, 32], strides = [1, 1]} : vector<16x384xf32> to vector<8x32xf32>
    %120 = arith.truncf %119 : vector<8x32xf32> to vector<8x32xbf16>
    %121 = vector.extract_strided_slice %69 {offsets = [0, 320], sizes = [8, 32], strides = [1, 1]} : vector<16x384xf32> to vector<8x32xf32>
    %122 = arith.truncf %121 : vector<8x32xf32> to vector<8x32xbf16>
    "tpu.trace_start"() <{level = 10 : i32, message = "nd,md->nm"}> : () -> ()
    %cst_43 = arith.constant dense<0.000000e+00> : vector<8x8xf32>
    %123 = tpu.matmul %118, %120, %cst_43 {dimension_numbers = #tpu.dot_dimension_numbers<[1], [1], [0], [0], [0, 0, 1, 0], [], []>} : vector<8x32xbf16>, vector<8x32xbf16>, vector<8x8xf32> -> vector<8x8xf32>
    "tpu.trace_stop"() : () -> ()
    %cst_44 = arith.constant dense<0xFF800000> : vector<8xf32>
    %124 = vector.multi_reduction <maximumf>, %123, %cst_44 [1] : vector<8x8xf32> to vector<8xf32>
    %125 = vector.shape_cast %124 : vector<8xf32> to vector<8x1xf32>
    %126 = vector.broadcast %125 : vector<8x1xf32> to vector<8x8xf32>
    %127 = arith.subf %123, %126 : vector<8x8xf32>
    %128 = math.exp %127 : vector<8x8xf32>
    %cst_45 = arith.constant dense<0.000000e+00> : vector<8xf32>
    %129 = vector.multi_reduction <add>, %128, %cst_45 [1] : vector<8x8xf32> to vector<8xf32>
    %130 = vector.shape_cast %129 : vector<8xf32> to vector<8x1xf32>
    %131 = tpu.reciprocal %130 {approx = true} : vector<8x1xf32> -> vector<8x1xf32>
    %132 = vector.broadcast %131 : vector<8x1xf32> to vector<8x8xf32>
    %133 = arith.mulf %128, %132 : vector<8x8xf32>
    %134 = arith.truncf %133 : vector<8x8xf32> to vector<8x8xbf16>
    %cst_46 = arith.constant dense<0.000000e+00> : vector<8x32xf32>
    %135 = tpu.matmul %134, %122, %cst_46 {dimension_numbers = #tpu.dot_dimension_numbers<[1], [0], [0], [1], [0, 0, 1, 1], [], []>} : vector<8x8xbf16>, vector<8x32xbf16>, vector<8x32xf32> -> vector<8x32xf32>
    %136 = arith.truncf %135 : vector<8x32xf32> to vector<8x32xbf16>
    %c2 = arith.constant 2 : index
    %c0_47 = arith.constant 0 : index
    %c0_48 = arith.constant 0 : index
    %137 = vector.load %arg5[%c2, %c0_47, %c0_48] : memref<8x32x128xbf16, #tpu.memory_space<vmem>>, vector<1x32x128xbf16>
    %138 = vector.shape_cast %137 : vector<1x32x128xbf16> to vector<32x128xbf16>
    %cst_49 = arith.constant dense<0.000000e+00> : vector<8x128xf32>
    %139 = tpu.matmul %136, %138, %cst_49 {dimension_numbers = #tpu.dot_dimension_numbers<[1], [0], [0], [1], [0, 0, 1, 1], [], []>} : vector<8x32xbf16>, vector<32x128xbf16>, vector<8x128xf32> -> vector<8x128xf32>
    %140 = arith.addf %116, %139 : vector<8x128xf32>
    %141 = vector.extract_strided_slice %65 {offsets = [0, 96], sizes = [8, 32], strides = [1, 1]} : vector<16x384xf32> to vector<8x32xf32>
    %142 = arith.truncf %141 : vector<8x32xf32> to vector<8x32xbf16>
    %143 = vector.extract_strided_slice %69 {offsets = [0, 224], sizes = [8, 32], strides = [1, 1]} : vector<16x384xf32> to vector<8x32xf32>
    %144 = arith.truncf %143 : vector<8x32xf32> to vector<8x32xbf16>
    %145 = vector.extract_strided_slice %69 {offsets = [0, 352], sizes = [8, 32], strides = [1, 1]} : vector<16x384xf32> to vector<8x32xf32>
    %146 = arith.truncf %145 : vector<8x32xf32> to vector<8x32xbf16>
    "tpu.trace_start"() <{level = 10 : i32, message = "nd,md->nm"}> : () -> ()
    %cst_50 = arith.constant dense<0.000000e+00> : vector<8x8xf32>
    %147 = tpu.matmul %142, %144, %cst_50 {dimension_numbers = #tpu.dot_dimension_numbers<[1], [1], [0], [0], [0, 0, 1, 0], [], []>} : vector<8x32xbf16>, vector<8x32xbf16>, vector<8x8xf32> -> vector<8x8xf32>
    "tpu.trace_stop"() : () -> ()
    %cst_51 = arith.constant dense<0xFF800000> : vector<8xf32>
    %148 = vector.multi_reduction <maximumf>, %147, %cst_51 [1] : vector<8x8xf32> to vector<8xf32>
    %149 = vector.shape_cast %148 : vector<8xf32> to vector<8x1xf32>
    %150 = vector.broadcast %149 : vector<8x1xf32> to vector<8x8xf32>
    %151 = arith.subf %147, %150 : vector<8x8xf32>
    %152 = math.exp %151 : vector<8x8xf32>
    %cst_52 = arith.constant dense<0.000000e+00> : vector<8xf32>
    %153 = vector.multi_reduction <add>, %152, %cst_52 [1] : vector<8x8xf32> to vector<8xf32>
    %154 = vector.shape_cast %153 : vector<8xf32> to vector<8x1xf32>
    %155 = tpu.reciprocal %154 {approx = true} : vector<8x1xf32> -> vector<8x1xf32>
    %156 = vector.broadcast %155 : vector<8x1xf32> to vector<8x8xf32>
    %157 = arith.mulf %152, %156 : vector<8x8xf32>
    %158 = arith.truncf %157 : vector<8x8xf32> to vector<8x8xbf16>
    %cst_53 = arith.constant dense<0.000000e+00> : vector<8x32xf32>
    %159 = tpu.matmul %158, %146, %cst_53 {dimension_numbers = #tpu.dot_dimension_numbers<[1], [0], [0], [1], [0, 0, 1, 1], [], []>} : vector<8x8xbf16>, vector<8x32xbf16>, vector<8x32xf32> -> vector<8x32xf32>
    %160 = arith.truncf %159 : vector<8x32xf32> to vector<8x32xbf16>
    %c3 = arith.constant 3 : index
    %c0_54 = arith.constant 0 : index
    %c0_55 = arith.constant 0 : index
    %161 = vector.load %arg5[%c3, %c0_54, %c0_55] : memref<8x32x128xbf16, #tpu.memory_space<vmem>>, vector<1x32x128xbf16>
    %162 = vector.shape_cast %161 : vector<1x32x128xbf16> to vector<32x128xbf16>
    %cst_56 = arith.constant dense<0.000000e+00> : vector<8x128xf32>
    %163 = tpu.matmul %160, %162, %cst_56 {dimension_numbers = #tpu.dot_dimension_numbers<[1], [0], [0], [1], [0, 0, 1, 1], [], []>} : vector<8x32xbf16>, vector<32x128xbf16>, vector<8x128xf32> -> vector<8x128xf32>
    %164 = arith.addf %140, %163 : vector<8x128xf32>
    %165 = vector.extract_strided_slice %65 {offsets = [8, 0], sizes = [8, 32], strides = [1, 1]} : vector<16x384xf32> to vector<8x32xf32>
    %166 = arith.truncf %165 : vector<8x32xf32> to vector<8x32xbf16>
    %167 = vector.extract_strided_slice %69 {offsets = [8, 128], sizes = [8, 32], strides = [1, 1]} : vector<16x384xf32> to vector<8x32xf32>
    %168 = arith.truncf %167 : vector<8x32xf32> to vector<8x32xbf16>
    %169 = vector.extract_strided_slice %69 {offsets = [8, 256], sizes = [8, 32], strides = [1, 1]} : vector<16x384xf32> to vector<8x32xf32>
    %170 = arith.truncf %169 : vector<8x32xf32> to vector<8x32xbf16>
    "tpu.trace_start"() <{level = 10 : i32, message = "nd,md->nm"}> : () -> ()
    %cst_57 = arith.constant dense<0.000000e+00> : vector<8x8xf32>
    %171 = tpu.matmul %166, %168, %cst_57 {dimension_numbers = #tpu.dot_dimension_numbers<[1], [1], [0], [0], [0, 0, 1, 0], [], []>} : vector<8x32xbf16>, vector<8x32xbf16>, vector<8x8xf32> -> vector<8x8xf32>
    "tpu.trace_stop"() : () -> ()
    %cst_58 = arith.constant dense<0xFF800000> : vector<8xf32>
    %172 = vector.multi_reduction <maximumf>, %171, %cst_58 [1] : vector<8x8xf32> to vector<8xf32>
    %173 = vector.shape_cast %172 : vector<8xf32> to vector<8x1xf32>
    %174 = vector.broadcast %173 : vector<8x1xf32> to vector<8x8xf32>
    %175 = arith.subf %171, %174 : vector<8x8xf32>
    %176 = math.exp %175 : vector<8x8xf32>
    %cst_59 = arith.constant dense<0.000000e+00> : vector<8xf32>
    %177 = vector.multi_reduction <add>, %176, %cst_59 [1] : vector<8x8xf32> to vector<8xf32>
    %178 = vector.shape_cast %177 : vector<8xf32> to vector<8x1xf32>
    %179 = tpu.reciprocal %178 {approx = true} : vector<8x1xf32> -> vector<8x1xf32>
    %180 = vector.broadcast %179 : vector<8x1xf32> to vector<8x8xf32>
    %181 = arith.mulf %176, %180 : vector<8x8xf32>
    %182 = arith.truncf %181 : vector<8x8xf32> to vector<8x8xbf16>
    %cst_60 = arith.constant dense<0.000000e+00> : vector<8x32xf32>
    %183 = tpu.matmul %182, %170, %cst_60 {dimension_numbers = #tpu.dot_dimension_numbers<[1], [0], [0], [1], [0, 0, 1, 1], [], []>} : vector<8x8xbf16>, vector<8x32xbf16>, vector<8x32xf32> -> vector<8x32xf32>
    %184 = arith.truncf %183 : vector<8x32xf32> to vector<8x32xbf16>
    %c0_61 = arith.constant 0 : index
    %c0_62 = arith.constant 0 : index
    %c0_63 = arith.constant 0 : index
    %185 = vector.load %arg5[%c0_61, %c0_62, %c0_63] : memref<8x32x128xbf16, #tpu.memory_space<vmem>>, vector<1x32x128xbf16>
    %186 = vector.shape_cast %185 : vector<1x32x128xbf16> to vector<32x128xbf16>
    %cst_64 = arith.constant dense<0.000000e+00> : vector<8x128xf32>
    %187 = tpu.matmul %184, %186, %cst_64 {dimension_numbers = #tpu.dot_dimension_numbers<[1], [0], [0], [1], [0, 0, 1, 1], [], []>} : vector<8x32xbf16>, vector<32x128xbf16>, vector<8x128xf32> -> vector<8x128xf32>
    %188 = vector.extract_strided_slice %65 {offsets = [8, 32], sizes = [8, 32], strides = [1, 1]} : vector<16x384xf32> to vector<8x32xf32>
    %189 = arith.truncf %188 : vector<8x32xf32> to vector<8x32xbf16>
    %190 = vector.extract_strided_slice %69 {offsets = [8, 160], sizes = [8, 32], strides = [1, 1]} : vector<16x384xf32> to vector<8x32xf32>
    %191 = arith.truncf %190 : vector<8x32xf32> to vector<8x32xbf16>
    %192 = vector.extract_strided_slice %69 {offsets = [8, 288], sizes = [8, 32], strides = [1, 1]} : vector<16x384xf32> to vector<8x32xf32>
    %193 = arith.truncf %192 : vector<8x32xf32> to vector<8x32xbf16>
    "tpu.trace_start"() <{level = 10 : i32, message = "nd,md->nm"}> : () -> ()
    %cst_65 = arith.constant dense<0.000000e+00> : vector<8x8xf32>
    %194 = tpu.matmul %189, %191, %cst_65 {dimension_numbers = #tpu.dot_dimension_numbers<[1], [1], [0], [0], [0, 0, 1, 0], [], []>} : vector<8x32xbf16>, vector<8x32xbf16>, vector<8x8xf32> -> vector<8x8xf32>
    "tpu.trace_stop"() : () -> ()
    %cst_66 = arith.constant dense<0xFF800000> : vector<8xf32>
    %195 = vector.multi_reduction <maximumf>, %194, %cst_66 [1] : vector<8x8xf32> to vector<8xf32>
    %196 = vector.shape_cast %195 : vector<8xf32> to vector<8x1xf32>
    %197 = vector.broadcast %196 : vector<8x1xf32> to vector<8x8xf32>
    %198 = arith.subf %194, %197 : vector<8x8xf32>
    %199 = math.exp %198 : vector<8x8xf32>
    %cst_67 = arith.constant dense<0.000000e+00> : vector<8xf32>
    %200 = vector.multi_reduction <add>, %199, %cst_67 [1] : vector<8x8xf32> to vector<8xf32>
    %201 = vector.shape_cast %200 : vector<8xf32> to vector<8x1xf32>
    %202 = tpu.reciprocal %201 {approx = true} : vector<8x1xf32> -> vector<8x1xf32>
    %203 = vector.broadcast %202 : vector<8x1xf32> to vector<8x8xf32>
    %204 = arith.mulf %199, %203 : vector<8x8xf32>
    %205 = arith.truncf %204 : vector<8x8xf32> to vector<8x8xbf16>
    %cst_68 = arith.constant dense<0.000000e+00> : vector<8x32xf32>
    %206 = tpu.matmul %205, %193, %cst_68 {dimension_numbers = #tpu.dot_dimension_numbers<[1], [0], [0], [1], [0, 0, 1, 1], [], []>} : vector<8x8xbf16>, vector<8x32xbf16>, vector<8x32xf32> -> vector<8x32xf32>
    %207 = arith.truncf %206 : vector<8x32xf32> to vector<8x32xbf16>
    %c1_69 = arith.constant 1 : index
    %c0_70 = arith.constant 0 : index
    %c0_71 = arith.constant 0 : index
    %208 = vector.load %arg5[%c1_69, %c0_70, %c0_71] : memref<8x32x128xbf16, #tpu.memory_space<vmem>>, vector<1x32x128xbf16>
    %209 = vector.shape_cast %208 : vector<1x32x128xbf16> to vector<32x128xbf16>
    %cst_72 = arith.constant dense<0.000000e+00> : vector<8x128xf32>
    %210 = tpu.matmul %207, %209, %cst_72 {dimension_numbers = #tpu.dot_dimension_numbers<[1], [0], [0], [1], [0, 0, 1, 1], [], []>} : vector<8x32xbf16>, vector<32x128xbf16>, vector<8x128xf32> -> vector<8x128xf32>
    %211 = arith.addf %187, %210 : vector<8x128xf32>
    %212 = vector.extract_strided_slice %65 {offsets = [8, 64], sizes = [8, 32], strides = [1, 1]} : vector<16x384xf32> to vector<8x32xf32>
    %213 = arith.truncf %212 : vector<8x32xf32> to vector<8x32xbf16>
    %214 = vector.extract_strided_slice %69 {offsets = [8, 192], sizes = [8, 32], strides = [1, 1]} : vector<16x384xf32> to vector<8x32xf32>
    %215 = arith.truncf %214 : vector<8x32xf32> to vector<8x32xbf16>
    %216 = vector.extract_strided_slice %69 {offsets = [8, 320], sizes = [8, 32], strides = [1, 1]} : vector<16x384xf32> to vector<8x32xf32>
    %217 = arith.truncf %216 : vector<8x32xf32> to vector<8x32xbf16>
    "tpu.trace_start"() <{level = 10 : i32, message = "nd,md->nm"}> : () -> ()
    %cst_73 = arith.constant dense<0.000000e+00> : vector<8x8xf32>
    %218 = tpu.matmul %213, %215, %cst_73 {dimension_numbers = #tpu.dot_dimension_numbers<[1], [1], [0], [0], [0, 0, 1, 0], [], []>} : vector<8x32xbf16>, vector<8x32xbf16>, vector<8x8xf32> -> vector<8x8xf32>
    "tpu.trace_stop"() : () -> ()
    %cst_74 = arith.constant dense<0xFF800000> : vector<8xf32>
    %219 = vector.multi_reduction <maximumf>, %218, %cst_74 [1] : vector<8x8xf32> to vector<8xf32>
    %220 = vector.shape_cast %219 : vector<8xf32> to vector<8x1xf32>
    %221 = vector.broadcast %220 : vector<8x1xf32> to vector<8x8xf32>
    %222 = arith.subf %218, %221 : vector<8x8xf32>
    %223 = math.exp %222 : vector<8x8xf32>
    %cst_75 = arith.constant dense<0.000000e+00> : vector<8xf32>
    %224 = vector.multi_reduction <add>, %223, %cst_75 [1] : vector<8x8xf32> to vector<8xf32>
    %225 = vector.shape_cast %224 : vector<8xf32> to vector<8x1xf32>
    %226 = tpu.reciprocal %225 {approx = true} : vector<8x1xf32> -> vector<8x1xf32>
    %227 = vector.broadcast %226 : vector<8x1xf32> to vector<8x8xf32>
    %228 = arith.mulf %223, %227 : vector<8x8xf32>
    %229 = arith.truncf %228 : vector<8x8xf32> to vector<8x8xbf16>
    %cst_76 = arith.constant dense<0.000000e+00> : vector<8x32xf32>
    %230 = tpu.matmul %229, %217, %cst_76 {dimension_numbers = #tpu.dot_dimension_numbers<[1], [0], [0], [1], [0, 0, 1, 1], [], []>} : vector<8x8xbf16>, vector<8x32xbf16>, vector<8x32xf32> -> vector<8x32xf32>
    %231 = arith.truncf %230 : vector<8x32xf32> to vector<8x32xbf16>
    %c2_77 = arith.constant 2 : index
    %c0_78 = arith.constant 0 : index
    %c0_79 = arith.constant 0 : index
    %232 = vector.load %arg5[%c2_77, %c0_78, %c0_79] : memref<8x32x128xbf16, #tpu.memory_space<vmem>>, vector<1x32x128xbf16>
    %233 = vector.shape_cast %232 : vector<1x32x128xbf16> to vector<32x128xbf16>
    %cst_80 = arith.constant dense<0.000000e+00> : vector<8x128xf32>
    %234 = tpu.matmul %231, %233, %cst_80 {dimension_numbers = #tpu.dot_dimension_numbers<[1], [0], [0], [1], [0, 0, 1, 1], [], []>} : vector<8x32xbf16>, vector<32x128xbf16>, vector<8x128xf32> -> vector<8x128xf32>
    %235 = arith.addf %211, %234 : vector<8x128xf32>
    %236 = vector.extract_strided_slice %65 {offsets = [8, 96], sizes = [8, 32], strides = [1, 1]} : vector<16x384xf32> to vector<8x32xf32>
    %237 = arith.truncf %236 : vector<8x32xf32> to vector<8x32xbf16>
    %238 = vector.extract_strided_slice %69 {offsets = [8, 224], sizes = [8, 32], strides = [1, 1]} : vector<16x384xf32> to vector<8x32xf32>
    %239 = arith.truncf %238 : vector<8x32xf32> to vector<8x32xbf16>
    %240 = vector.extract_strided_slice %69 {offsets = [8, 352], sizes = [8, 32], strides = [1, 1]} : vector<16x384xf32> to vector<8x32xf32>
    %241 = arith.truncf %240 : vector<8x32xf32> to vector<8x32xbf16>
    "tpu.trace_start"() <{level = 10 : i32, message = "nd,md->nm"}> : () -> ()
    %cst_81 = arith.constant dense<0.000000e+00> : vector<8x8xf32>
    %242 = tpu.matmul %237, %239, %cst_81 {dimension_numbers = #tpu.dot_dimension_numbers<[1], [1], [0], [0], [0, 0, 1, 0], [], []>} : vector<8x32xbf16>, vector<8x32xbf16>, vector<8x8xf32> -> vector<8x8xf32>
    "tpu.trace_stop"() : () -> ()
    %cst_82 = arith.constant dense<0xFF800000> : vector<8xf32>
    %243 = vector.multi_reduction <maximumf>, %242, %cst_82 [1] : vector<8x8xf32> to vector<8xf32>
    %244 = vector.shape_cast %243 : vector<8xf32> to vector<8x1xf32>
    %245 = vector.broadcast %244 : vector<8x1xf32> to vector<8x8xf32>
    %246 = arith.subf %242, %245 : vector<8x8xf32>
    %247 = math.exp %246 : vector<8x8xf32>
    %cst_83 = arith.constant dense<0.000000e+00> : vector<8xf32>
    %248 = vector.multi_reduction <add>, %247, %cst_83 [1] : vector<8x8xf32> to vector<8xf32>
    %249 = vector.shape_cast %248 : vector<8xf32> to vector<8x1xf32>
    %250 = tpu.reciprocal %249 {approx = true} : vector<8x1xf32> -> vector<8x1xf32>
    %251 = vector.broadcast %250 : vector<8x1xf32> to vector<8x8xf32>
    %252 = arith.mulf %247, %251 : vector<8x8xf32>
    %253 = arith.truncf %252 : vector<8x8xf32> to vector<8x8xbf16>
    %cst_84 = arith.constant dense<0.000000e+00> : vector<8x32xf32>
    %254 = tpu.matmul %253, %241, %cst_84 {dimension_numbers = #tpu.dot_dimension_numbers<[1], [0], [0], [1], [0, 0, 1, 1], [], []>} : vector<8x8xbf16>, vector<8x32xbf16>, vector<8x32xf32> -> vector<8x32xf32>
    %255 = arith.truncf %254 : vector<8x32xf32> to vector<8x32xbf16>
    %c3_85 = arith.constant 3 : index
    %c0_86 = arith.constant 0 : index
    %c0_87 = arith.constant 0 : index
    %256 = vector.load %arg5[%c3_85, %c0_86, %c0_87] : memref<8x32x128xbf16, #tpu.memory_space<vmem>>, vector<1x32x128xbf16>
    %257 = vector.shape_cast %256 : vector<1x32x128xbf16> to vector<32x128xbf16>
    %cst_88 = arith.constant dense<0.000000e+00> : vector<8x128xf32>
    %258 = tpu.matmul %255, %257, %cst_88 {dimension_numbers = #tpu.dot_dimension_numbers<[1], [0], [0], [1], [0, 0, 1, 1], [], []>} : vector<8x32xbf16>, vector<32x128xbf16>, vector<8x128xf32> -> vector<8x128xf32>
    %259 = arith.addf %235, %258 : vector<8x128xf32>
    %260 = tpu.concatenate %164, %259 in 0 : vector<8x128xf32>, vector<8x128xf32> -> vector<16x128xf32>
    %261 = vector.extract_strided_slice %3 {offsets = [0, 0], sizes = [1, 128], strides = [1, 1]} : vector<2x128xf32> to vector<1x128xf32>
    %262 = vector.shape_cast %261 : vector<1x128xf32> to vector<128xf32>
    %263 = vector.shape_cast %262 : vector<128xf32> to vector<1x128xf32>
    %264 = vector.broadcast %263 : vector<1x128xf32> to vector<16x128xf32>
    %265 = arith.addf %260, %264 : vector<16x128xf32>
    %266 = vector.extract_strided_slice %69 {offsets = [0, 0], sizes = [8, 32], strides = [1, 1]} : vector<16x384xf32> to vector<8x32xf32>
    %267 = arith.truncf %266 : vector<8x32xf32> to vector<8x32xbf16>
    %268 = vector.extract_strided_slice %65 {offsets = [0, 128], sizes = [8, 32], strides = [1, 1]} : vector<16x384xf32> to vector<8x32xf32>
    %269 = arith.truncf %268 : vector<8x32xf32> to vector<8x32xbf16>
    %270 = vector.extract_strided_slice %65 {offsets = [0, 256], sizes = [8, 32], strides = [1, 1]} : vector<16x384xf32> to vector<8x32xf32>
    %271 = arith.truncf %270 : vector<8x32xf32> to vector<8x32xbf16>
    "tpu.trace_start"() <{level = 10 : i32, message = "nd,md->nm"}> : () -> ()
    %cst_89 = arith.constant dense<0.000000e+00> : vector<8x8xf32>
    %272 = tpu.matmul %267, %269, %cst_89 {dimension_numbers = #tpu.dot_dimension_numbers<[1], [1], [0], [0], [0, 0, 1, 0], [], []>} : vector<8x32xbf16>, vector<8x32xbf16>, vector<8x8xf32> -> vector<8x8xf32>
    "tpu.trace_stop"() : () -> ()
    %cst_90 = arith.constant dense<0xFF800000> : vector<8xf32>
    %273 = vector.multi_reduction <maximumf>, %272, %cst_90 [1] : vector<8x8xf32> to vector<8xf32>
    %274 = vector.shape_cast %273 : vector<8xf32> to vector<8x1xf32>
    %275 = vector.broadcast %274 : vector<8x1xf32> to vector<8x8xf32>
    %276 = arith.subf %272, %275 : vector<8x8xf32>
    %277 = math.exp %276 : vector<8x8xf32>
    %cst_91 = arith.constant dense<0.000000e+00> : vector<8xf32>
    %278 = vector.multi_reduction <add>, %277, %cst_91 [1] : vector<8x8xf32> to vector<8xf32>
    %279 = vector.shape_cast %278 : vector<8xf32> to vector<8x1xf32>
    %280 = tpu.reciprocal %279 {approx = true} : vector<8x1xf32> -> vector<8x1xf32>
    %281 = vector.broadcast %280 : vector<8x1xf32> to vector<8x8xf32>
    %282 = arith.mulf %277, %281 : vector<8x8xf32>
    %283 = arith.truncf %282 : vector<8x8xf32> to vector<8x8xbf16>
    %cst_92 = arith.constant dense<0.000000e+00> : vector<8x32xf32>
    %284 = tpu.matmul %283, %271, %cst_92 {dimension_numbers = #tpu.dot_dimension_numbers<[1], [0], [0], [1], [0, 0, 1, 1], [], []>} : vector<8x8xbf16>, vector<8x32xbf16>, vector<8x32xf32> -> vector<8x32xf32>
    %285 = arith.truncf %284 : vector<8x32xf32> to vector<8x32xbf16>
    %c4 = arith.constant 4 : index
    %c0_93 = arith.constant 0 : index
    %c0_94 = arith.constant 0 : index
    %286 = vector.load %arg5[%c4, %c0_93, %c0_94] : memref<8x32x128xbf16, #tpu.memory_space<vmem>>, vector<1x32x128xbf16>
    %287 = vector.shape_cast %286 : vector<1x32x128xbf16> to vector<32x128xbf16>
    %cst_95 = arith.constant dense<0.000000e+00> : vector<8x128xf32>
    %288 = tpu.matmul %285, %287, %cst_95 {dimension_numbers = #tpu.dot_dimension_numbers<[1], [0], [0], [1], [0, 0, 1, 1], [], []>} : vector<8x32xbf16>, vector<32x128xbf16>, vector<8x128xf32> -> vector<8x128xf32>
    %289 = vector.extract_strided_slice %69 {offsets = [0, 32], sizes = [8, 32], strides = [1, 1]} : vector<16x384xf32> to vector<8x32xf32>
    %290 = arith.truncf %289 : vector<8x32xf32> to vector<8x32xbf16>
    %291 = vector.extract_strided_slice %65 {offsets = [0, 160], sizes = [8, 32], strides = [1, 1]} : vector<16x384xf32> to vector<8x32xf32>
    %292 = arith.truncf %291 : vector<8x32xf32> to vector<8x32xbf16>
    %293 = vector.extract_strided_slice %65 {offsets = [0, 288], sizes = [8, 32], strides = [1, 1]} : vector<16x384xf32> to vector<8x32xf32>
    %294 = arith.truncf %293 : vector<8x32xf32> to vector<8x32xbf16>
    "tpu.trace_start"() <{level = 10 : i32, message = "nd,md->nm"}> : () -> ()
    %cst_96 = arith.constant dense<0.000000e+00> : vector<8x8xf32>
    %295 = tpu.matmul %290, %292, %cst_96 {dimension_numbers = #tpu.dot_dimension_numbers<[1], [1], [0], [0], [0, 0, 1, 0], [], []>} : vector<8x32xbf16>, vector<8x32xbf16>, vector<8x8xf32> -> vector<8x8xf32>
    "tpu.trace_stop"() : () -> ()
    %cst_97 = arith.constant dense<0xFF800000> : vector<8xf32>
    %296 = vector.multi_reduction <maximumf>, %295, %cst_97 [1] : vector<8x8xf32> to vector<8xf32>
    %297 = vector.shape_cast %296 : vector<8xf32> to vector<8x1xf32>
    %298 = vector.broadcast %297 : vector<8x1xf32> to vector<8x8xf32>
    %299 = arith.subf %295, %298 : vector<8x8xf32>
    %300 = math.exp %299 : vector<8x8xf32>
    %cst_98 = arith.constant dense<0.000000e+00> : vector<8xf32>
    %301 = vector.multi_reduction <add>, %300, %cst_98 [1] : vector<8x8xf32> to vector<8xf32>
    %302 = vector.shape_cast %301 : vector<8xf32> to vector<8x1xf32>
    %303 = tpu.reciprocal %302 {approx = true} : vector<8x1xf32> -> vector<8x1xf32>
    %304 = vector.broadcast %303 : vector<8x1xf32> to vector<8x8xf32>
    %305 = arith.mulf %300, %304 : vector<8x8xf32>
    %306 = arith.truncf %305 : vector<8x8xf32> to vector<8x8xbf16>
    %cst_99 = arith.constant dense<0.000000e+00> : vector<8x32xf32>
    %307 = tpu.matmul %306, %294, %cst_99 {dimension_numbers = #tpu.dot_dimension_numbers<[1], [0], [0], [1], [0, 0, 1, 1], [], []>} : vector<8x8xbf16>, vector<8x32xbf16>, vector<8x32xf32> -> vector<8x32xf32>
    %308 = arith.truncf %307 : vector<8x32xf32> to vector<8x32xbf16>
    %c5 = arith.constant 5 : index
    %c0_100 = arith.constant 0 : index
    %c0_101 = arith.constant 0 : index
    %309 = vector.load %arg5[%c5, %c0_100, %c0_101] : memref<8x32x128xbf16, #tpu.memory_space<vmem>>, vector<1x32x128xbf16>
    %310 = vector.shape_cast %309 : vector<1x32x128xbf16> to vector<32x128xbf16>
    %cst_102 = arith.constant dense<0.000000e+00> : vector<8x128xf32>
    %311 = tpu.matmul %308, %310, %cst_102 {dimension_numbers = #tpu.dot_dimension_numbers<[1], [0], [0], [1], [0, 0, 1, 1], [], []>} : vector<8x32xbf16>, vector<32x128xbf16>, vector<8x128xf32> -> vector<8x128xf32>
    %312 = arith.addf %288, %311 : vector<8x128xf32>
    %313 = vector.extract_strided_slice %69 {offsets = [0, 64], sizes = [8, 32], strides = [1, 1]} : vector<16x384xf32> to vector<8x32xf32>
    %314 = arith.truncf %313 : vector<8x32xf32> to vector<8x32xbf16>
    %315 = vector.extract_strided_slice %65 {offsets = [0, 192], sizes = [8, 32], strides = [1, 1]} : vector<16x384xf32> to vector<8x32xf32>
    %316 = arith.truncf %315 : vector<8x32xf32> to vector<8x32xbf16>
    %317 = vector.extract_strided_slice %65 {offsets = [0, 320], sizes = [8, 32], strides = [1, 1]} : vector<16x384xf32> to vector<8x32xf32>
    %318 = arith.truncf %317 : vector<8x32xf32> to vector<8x32xbf16>
    "tpu.trace_start"() <{level = 10 : i32, message = "nd,md->nm"}> : () -> ()
    %cst_103 = arith.constant dense<0.000000e+00> : vector<8x8xf32>
    %319 = tpu.matmul %314, %316, %cst_103 {dimension_numbers = #tpu.dot_dimension_numbers<[1], [1], [0], [0], [0, 0, 1, 0], [], []>} : vector<8x32xbf16>, vector<8x32xbf16>, vector<8x8xf32> -> vector<8x8xf32>
    "tpu.trace_stop"() : () -> ()
    %cst_104 = arith.constant dense<0xFF800000> : vector<8xf32>
    %320 = vector.multi_reduction <maximumf>, %319, %cst_104 [1] : vector<8x8xf32> to vector<8xf32>
    %321 = vector.shape_cast %320 : vector<8xf32> to vector<8x1xf32>
    %322 = vector.broadcast %321 : vector<8x1xf32> to vector<8x8xf32>
    %323 = arith.subf %319, %322 : vector<8x8xf32>
    %324 = math.exp %323 : vector<8x8xf32>
    %cst_105 = arith.constant dense<0.000000e+00> : vector<8xf32>
    %325 = vector.multi_reduction <add>, %324, %cst_105 [1] : vector<8x8xf32> to vector<8xf32>
    %326 = vector.shape_cast %325 : vector<8xf32> to vector<8x1xf32>
    %327 = tpu.reciprocal %326 {approx = true} : vector<8x1xf32> -> vector<8x1xf32>
    %328 = vector.broadcast %327 : vector<8x1xf32> to vector<8x8xf32>
    %329 = arith.mulf %324, %328 : vector<8x8xf32>
    %330 = arith.truncf %329 : vector<8x8xf32> to vector<8x8xbf16>
    %cst_106 = arith.constant dense<0.000000e+00> : vector<8x32xf32>
    %331 = tpu.matmul %330, %318, %cst_106 {dimension_numbers = #tpu.dot_dimension_numbers<[1], [0], [0], [1], [0, 0, 1, 1], [], []>} : vector<8x8xbf16>, vector<8x32xbf16>, vector<8x32xf32> -> vector<8x32xf32>
    %332 = arith.truncf %331 : vector<8x32xf32> to vector<8x32xbf16>
    %c6 = arith.constant 6 : index
    %c0_107 = arith.constant 0 : index
    %c0_108 = arith.constant 0 : index
    %333 = vector.load %arg5[%c6, %c0_107, %c0_108] : memref<8x32x128xbf16, #tpu.memory_space<vmem>>, vector<1x32x128xbf16>
    %334 = vector.shape_cast %333 : vector<1x32x128xbf16> to vector<32x128xbf16>
    %cst_109 = arith.constant dense<0.000000e+00> : vector<8x128xf32>
    %335 = tpu.matmul %332, %334, %cst_109 {dimension_numbers = #tpu.dot_dimension_numbers<[1], [0], [0], [1], [0, 0, 1, 1], [], []>} : vector<8x32xbf16>, vector<32x128xbf16>, vector<8x128xf32> -> vector<8x128xf32>
    %336 = arith.addf %312, %335 : vector<8x128xf32>
    %337 = vector.extract_strided_slice %69 {offsets = [0, 96], sizes = [8, 32], strides = [1, 1]} : vector<16x384xf32> to vector<8x32xf32>
    %338 = arith.truncf %337 : vector<8x32xf32> to vector<8x32xbf16>
    %339 = vector.extract_strided_slice %65 {offsets = [0, 224], sizes = [8, 32], strides = [1, 1]} : vector<16x384xf32> to vector<8x32xf32>
    %340 = arith.truncf %339 : vector<8x32xf32> to vector<8x32xbf16>
    %341 = vector.extract_strided_slice %65 {offsets = [0, 352], sizes = [8, 32], strides = [1, 1]} : vector<16x384xf32> to vector<8x32xf32>
    %342 = arith.truncf %341 : vector<8x32xf32> to vector<8x32xbf16>
    "tpu.trace_start"() <{level = 10 : i32, message = "nd,md->nm"}> : () -> ()
    %cst_110 = arith.constant dense<0.000000e+00> : vector<8x8xf32>
    %343 = tpu.matmul %338, %340, %cst_110 {dimension_numbers = #tpu.dot_dimension_numbers<[1], [1], [0], [0], [0, 0, 1, 0], [], []>} : vector<8x32xbf16>, vector<8x32xbf16>, vector<8x8xf32> -> vector<8x8xf32>
    "tpu.trace_stop"() : () -> ()
    %cst_111 = arith.constant dense<0xFF800000> : vector<8xf32>
    %344 = vector.multi_reduction <maximumf>, %343, %cst_111 [1] : vector<8x8xf32> to vector<8xf32>
    %345 = vector.shape_cast %344 : vector<8xf32> to vector<8x1xf32>
    %346 = vector.broadcast %345 : vector<8x1xf32> to vector<8x8xf32>
    %347 = arith.subf %343, %346 : vector<8x8xf32>
    %348 = math.exp %347 : vector<8x8xf32>
    %cst_112 = arith.constant dense<0.000000e+00> : vector<8xf32>
    %349 = vector.multi_reduction <add>, %348, %cst_112 [1] : vector<8x8xf32> to vector<8xf32>
    %350 = vector.shape_cast %349 : vector<8xf32> to vector<8x1xf32>
    %351 = tpu.reciprocal %350 {approx = true} : vector<8x1xf32> -> vector<8x1xf32>
    %352 = vector.broadcast %351 : vector<8x1xf32> to vector<8x8xf32>
    %353 = arith.mulf %348, %352 : vector<8x8xf32>
    %354 = arith.truncf %353 : vector<8x8xf32> to vector<8x8xbf16>
    %cst_113 = arith.constant dense<0.000000e+00> : vector<8x32xf32>
    %355 = tpu.matmul %354, %342, %cst_113 {dimension_numbers = #tpu.dot_dimension_numbers<[1], [0], [0], [1], [0, 0, 1, 1], [], []>} : vector<8x8xbf16>, vector<8x32xbf16>, vector<8x32xf32> -> vector<8x32xf32>
    %356 = arith.truncf %355 : vector<8x32xf32> to vector<8x32xbf16>
    %c7 = arith.constant 7 : index
    %c0_114 = arith.constant 0 : index
    %c0_115 = arith.constant 0 : index
    %357 = vector.load %arg5[%c7, %c0_114, %c0_115] : memref<8x32x128xbf16, #tpu.memory_space<vmem>>, vector<1x32x128xbf16>
    %358 = vector.shape_cast %357 : vector<1x32x128xbf16> to vector<32x128xbf16>
    %cst_116 = arith.constant dense<0.000000e+00> : vector<8x128xf32>
    %359 = tpu.matmul %356, %358, %cst_116 {dimension_numbers = #tpu.dot_dimension_numbers<[1], [0], [0], [1], [0, 0, 1, 1], [], []>} : vector<8x32xbf16>, vector<32x128xbf16>, vector<8x128xf32> -> vector<8x128xf32>
    %360 = arith.addf %336, %359 : vector<8x128xf32>
    %361 = vector.extract_strided_slice %69 {offsets = [8, 0], sizes = [8, 32], strides = [1, 1]} : vector<16x384xf32> to vector<8x32xf32>
    %362 = arith.truncf %361 : vector<8x32xf32> to vector<8x32xbf16>
    %363 = vector.extract_strided_slice %65 {offsets = [8, 128], sizes = [8, 32], strides = [1, 1]} : vector<16x384xf32> to vector<8x32xf32>
    %364 = arith.truncf %363 : vector<8x32xf32> to vector<8x32xbf16>
    %365 = vector.extract_strided_slice %65 {offsets = [8, 256], sizes = [8, 32], strides = [1, 1]} : vector<16x384xf32> to vector<8x32xf32>
    %366 = arith.truncf %365 : vector<8x32xf32> to vector<8x32xbf16>
    "tpu.trace_start"() <{level = 10 : i32, message = "nd,md->nm"}> : () -> ()
    %cst_117 = arith.constant dense<0.000000e+00> : vector<8x8xf32>
    %367 = tpu.matmul %362, %364, %cst_117 {dimension_numbers = #tpu.dot_dimension_numbers<[1], [1], [0], [0], [0, 0, 1, 0], [], []>} : vector<8x32xbf16>, vector<8x32xbf16>, vector<8x8xf32> -> vector<8x8xf32>
    "tpu.trace_stop"() : () -> ()
    %cst_118 = arith.constant dense<0xFF800000> : vector<8xf32>
    %368 = vector.multi_reduction <maximumf>, %367, %cst_118 [1] : vector<8x8xf32> to vector<8xf32>
    %369 = vector.shape_cast %368 : vector<8xf32> to vector<8x1xf32>
    %370 = vector.broadcast %369 : vector<8x1xf32> to vector<8x8xf32>
    %371 = arith.subf %367, %370 : vector<8x8xf32>
    %372 = math.exp %371 : vector<8x8xf32>
    %cst_119 = arith.constant dense<0.000000e+00> : vector<8xf32>
    %373 = vector.multi_reduction <add>, %372, %cst_119 [1] : vector<8x8xf32> to vector<8xf32>
    %374 = vector.shape_cast %373 : vector<8xf32> to vector<8x1xf32>
    %375 = tpu.reciprocal %374 {approx = true} : vector<8x1xf32> -> vector<8x1xf32>
    %376 = vector.broadcast %375 : vector<8x1xf32> to vector<8x8xf32>
    %377 = arith.mulf %372, %376 : vector<8x8xf32>
    %378 = arith.truncf %377 : vector<8x8xf32> to vector<8x8xbf16>
    %cst_120 = arith.constant dense<0.000000e+00> : vector<8x32xf32>
    %379 = tpu.matmul %378, %366, %cst_120 {dimension_numbers = #tpu.dot_dimension_numbers<[1], [0], [0], [1], [0, 0, 1, 1], [], []>} : vector<8x8xbf16>, vector<8x32xbf16>, vector<8x32xf32> -> vector<8x32xf32>
    %380 = arith.truncf %379 : vector<8x32xf32> to vector<8x32xbf16>
    %c4_121 = arith.constant 4 : index
    %c0_122 = arith.constant 0 : index
    %c0_123 = arith.constant 0 : index
    %381 = vector.load %arg5[%c4_121, %c0_122, %c0_123] : memref<8x32x128xbf16, #tpu.memory_space<vmem>>, vector<1x32x128xbf16>
    %382 = vector.shape_cast %381 : vector<1x32x128xbf16> to vector<32x128xbf16>
    %cst_124 = arith.constant dense<0.000000e+00> : vector<8x128xf32>
    %383 = tpu.matmul %380, %382, %cst_124 {dimension_numbers = #tpu.dot_dimension_numbers<[1], [0], [0], [1], [0, 0, 1, 1], [], []>} : vector<8x32xbf16>, vector<32x128xbf16>, vector<8x128xf32> -> vector<8x128xf32>
    %384 = vector.extract_strided_slice %69 {offsets = [8, 32], sizes = [8, 32], strides = [1, 1]} : vector<16x384xf32> to vector<8x32xf32>
    %385 = arith.truncf %384 : vector<8x32xf32> to vector<8x32xbf16>
    %386 = vector.extract_strided_slice %65 {offsets = [8, 160], sizes = [8, 32], strides = [1, 1]} : vector<16x384xf32> to vector<8x32xf32>
    %387 = arith.truncf %386 : vector<8x32xf32> to vector<8x32xbf16>
    %388 = vector.extract_strided_slice %65 {offsets = [8, 288], sizes = [8, 32], strides = [1, 1]} : vector<16x384xf32> to vector<8x32xf32>
    %389 = arith.truncf %388 : vector<8x32xf32> to vector<8x32xbf16>
    "tpu.trace_start"() <{level = 10 : i32, message = "nd,md->nm"}> : () -> ()
    %cst_125 = arith.constant dense<0.000000e+00> : vector<8x8xf32>
    %390 = tpu.matmul %385, %387, %cst_125 {dimension_numbers = #tpu.dot_dimension_numbers<[1], [1], [0], [0], [0, 0, 1, 0], [], []>} : vector<8x32xbf16>, vector<8x32xbf16>, vector<8x8xf32> -> vector<8x8xf32>
    "tpu.trace_stop"() : () -> ()
    %cst_126 = arith.constant dense<0xFF800000> : vector<8xf32>
    %391 = vector.multi_reduction <maximumf>, %390, %cst_126 [1] : vector<8x8xf32> to vector<8xf32>
    %392 = vector.shape_cast %391 : vector<8xf32> to vector<8x1xf32>
    %393 = vector.broadcast %392 : vector<8x1xf32> to vector<8x8xf32>
    %394 = arith.subf %390, %393 : vector<8x8xf32>
    %395 = math.exp %394 : vector<8x8xf32>
    %cst_127 = arith.constant dense<0.000000e+00> : vector<8xf32>
    %396 = vector.multi_reduction <add>, %395, %cst_127 [1] : vector<8x8xf32> to vector<8xf32>
    %397 = vector.shape_cast %396 : vector<8xf32> to vector<8x1xf32>
    %398 = tpu.reciprocal %397 {approx = true} : vector<8x1xf32> -> vector<8x1xf32>
    %399 = vector.broadcast %398 : vector<8x1xf32> to vector<8x8xf32>
    %400 = arith.mulf %395, %399 : vector<8x8xf32>
    %401 = arith.truncf %400 : vector<8x8xf32> to vector<8x8xbf16>
    %cst_128 = arith.constant dense<0.000000e+00> : vector<8x32xf32>
    %402 = tpu.matmul %401, %389, %cst_128 {dimension_numbers = #tpu.dot_dimension_numbers<[1], [0], [0], [1], [0, 0, 1, 1], [], []>} : vector<8x8xbf16>, vector<8x32xbf16>, vector<8x32xf32> -> vector<8x32xf32>
    %403 = arith.truncf %402 : vector<8x32xf32> to vector<8x32xbf16>
    %c5_129 = arith.constant 5 : index
    %c0_130 = arith.constant 0 : index
    %c0_131 = arith.constant 0 : index
    %404 = vector.load %arg5[%c5_129, %c0_130, %c0_131] : memref<8x32x128xbf16, #tpu.memory_space<vmem>>, vector<1x32x128xbf16>
    %405 = vector.shape_cast %404 : vector<1x32x128xbf16> to vector<32x128xbf16>
    %cst_132 = arith.constant dense<0.000000e+00> : vector<8x128xf32>
    %406 = tpu.matmul %403, %405, %cst_132 {dimension_numbers = #tpu.dot_dimension_numbers<[1], [0], [0], [1], [0, 0, 1, 1], [], []>} : vector<8x32xbf16>, vector<32x128xbf16>, vector<8x128xf32> -> vector<8x128xf32>
    %407 = arith.addf %383, %406 : vector<8x128xf32>
    %408 = vector.extract_strided_slice %69 {offsets = [8, 64], sizes = [8, 32], strides = [1, 1]} : vector<16x384xf32> to vector<8x32xf32>
    %409 = arith.truncf %408 : vector<8x32xf32> to vector<8x32xbf16>
    %410 = vector.extract_strided_slice %65 {offsets = [8, 192], sizes = [8, 32], strides = [1, 1]} : vector<16x384xf32> to vector<8x32xf32>
    %411 = arith.truncf %410 : vector<8x32xf32> to vector<8x32xbf16>
    %412 = vector.extract_strided_slice %65 {offsets = [8, 320], sizes = [8, 32], strides = [1, 1]} : vector<16x384xf32> to vector<8x32xf32>
    %413 = arith.truncf %412 : vector<8x32xf32> to vector<8x32xbf16>
    "tpu.trace_start"() <{level = 10 : i32, message = "nd,md->nm"}> : () -> ()
    %cst_133 = arith.constant dense<0.000000e+00> : vector<8x8xf32>
    %414 = tpu.matmul %409, %411, %cst_133 {dimension_numbers = #tpu.dot_dimension_numbers<[1], [1], [0], [0], [0, 0, 1, 0], [], []>} : vector<8x32xbf16>, vector<8x32xbf16>, vector<8x8xf32> -> vector<8x8xf32>
    "tpu.trace_stop"() : () -> ()
    %cst_134 = arith.constant dense<0xFF800000> : vector<8xf32>
    %415 = vector.multi_reduction <maximumf>, %414, %cst_134 [1] : vector<8x8xf32> to vector<8xf32>
    %416 = vector.shape_cast %415 : vector<8xf32> to vector<8x1xf32>
    %417 = vector.broadcast %416 : vector<8x1xf32> to vector<8x8xf32>
    %418 = arith.subf %414, %417 : vector<8x8xf32>
    %419 = math.exp %418 : vector<8x8xf32>
    %cst_135 = arith.constant dense<0.000000e+00> : vector<8xf32>
    %420 = vector.multi_reduction <add>, %419, %cst_135 [1] : vector<8x8xf32> to vector<8xf32>
    %421 = vector.shape_cast %420 : vector<8xf32> to vector<8x1xf32>
    %422 = tpu.reciprocal %421 {approx = true} : vector<8x1xf32> -> vector<8x1xf32>
    %423 = vector.broadcast %422 : vector<8x1xf32> to vector<8x8xf32>
    %424 = arith.mulf %419, %423 : vector<8x8xf32>
    %425 = arith.truncf %424 : vector<8x8xf32> to vector<8x8xbf16>
    %cst_136 = arith.constant dense<0.000000e+00> : vector<8x32xf32>
    %426 = tpu.matmul %425, %413, %cst_136 {dimension_numbers = #tpu.dot_dimension_numbers<[1], [0], [0], [1], [0, 0, 1, 1], [], []>} : vector<8x8xbf16>, vector<8x32xbf16>, vector<8x32xf32> -> vector<8x32xf32>
    %427 = arith.truncf %426 : vector<8x32xf32> to vector<8x32xbf16>
    %c6_137 = arith.constant 6 : index
    %c0_138 = arith.constant 0 : index
    %c0_139 = arith.constant 0 : index
    %428 = vector.load %arg5[%c6_137, %c0_138, %c0_139] : memref<8x32x128xbf16, #tpu.memory_space<vmem>>, vector<1x32x128xbf16>
    %429 = vector.shape_cast %428 : vector<1x32x128xbf16> to vector<32x128xbf16>
    %cst_140 = arith.constant dense<0.000000e+00> : vector<8x128xf32>
    %430 = tpu.matmul %427, %429, %cst_140 {dimension_numbers = #tpu.dot_dimension_numbers<[1], [0], [0], [1], [0, 0, 1, 1], [], []>} : vector<8x32xbf16>, vector<32x128xbf16>, vector<8x128xf32> -> vector<8x128xf32>
    %431 = arith.addf %407, %430 : vector<8x128xf32>
    %432 = vector.extract_strided_slice %69 {offsets = [8, 96], sizes = [8, 32], strides = [1, 1]} : vector<16x384xf32> to vector<8x32xf32>
    %433 = arith.truncf %432 : vector<8x32xf32> to vector<8x32xbf16>
    %434 = vector.extract_strided_slice %65 {offsets = [8, 224], sizes = [8, 32], strides = [1, 1]} : vector<16x384xf32> to vector<8x32xf32>
    %435 = arith.truncf %434 : vector<8x32xf32> to vector<8x32xbf16>
    %436 = vector.extract_strided_slice %65 {offsets = [8, 352], sizes = [8, 32], strides = [1, 1]} : vector<16x384xf32> to vector<8x32xf32>
    %437 = arith.truncf %436 : vector<8x32xf32> to vector<8x32xbf16>
    "tpu.trace_start"() <{level = 10 : i32, message = "nd,md->nm"}> : () -> ()
    %cst_141 = arith.constant dense<0.000000e+00> : vector<8x8xf32>
    %438 = tpu.matmul %433, %435, %cst_141 {dimension_numbers = #tpu.dot_dimension_numbers<[1], [1], [0], [0], [0, 0, 1, 0], [], []>} : vector<8x32xbf16>, vector<8x32xbf16>, vector<8x8xf32> -> vector<8x8xf32>
    "tpu.trace_stop"() : () -> ()
    %cst_142 = arith.constant dense<0xFF800000> : vector<8xf32>
    %439 = vector.multi_reduction <maximumf>, %438, %cst_142 [1] : vector<8x8xf32> to vector<8xf32>
    %440 = vector.shape_cast %439 : vector<8xf32> to vector<8x1xf32>
    %441 = vector.broadcast %440 : vector<8x1xf32> to vector<8x8xf32>
    %442 = arith.subf %438, %441 : vector<8x8xf32>
    %443 = math.exp %442 : vector<8x8xf32>
    %cst_143 = arith.constant dense<0.000000e+00> : vector<8xf32>
    %444 = vector.multi_reduction <add>, %443, %cst_143 [1] : vector<8x8xf32> to vector<8xf32>
    %445 = vector.shape_cast %444 : vector<8xf32> to vector<8x1xf32>
    %446 = tpu.reciprocal %445 {approx = true} : vector<8x1xf32> -> vector<8x1xf32>
    %447 = vector.broadcast %446 : vector<8x1xf32> to vector<8x8xf32>
    %448 = arith.mulf %443, %447 : vector<8x8xf32>
    %449 = arith.truncf %448 : vector<8x8xf32> to vector<8x8xbf16>
    %cst_144 = arith.constant dense<0.000000e+00> : vector<8x32xf32>
    %450 = tpu.matmul %449, %437, %cst_144 {dimension_numbers = #tpu.dot_dimension_numbers<[1], [0], [0], [1], [0, 0, 1, 1], [], []>} : vector<8x8xbf16>, vector<8x32xbf16>, vector<8x32xf32> -> vector<8x32xf32>
    %451 = arith.truncf %450 : vector<8x32xf32> to vector<8x32xbf16>
    %c7_145 = arith.constant 7 : index
    %c0_146 = arith.constant 0 : index
    %c0_147 = arith.constant 0 : index
    %452 = vector.load %arg5[%c7_145, %c0_146, %c0_147] : memref<8x32x128xbf16, #tpu.memory_space<vmem>>, vector<1x32x128xbf16>
    %453 = vector.shape_cast %452 : vector<1x32x128xbf16> to vector<32x128xbf16>
    %cst_148 = arith.constant dense<0.000000e+00> : vector<8x128xf32>
    %454 = tpu.matmul %451, %453, %cst_148 {dimension_numbers = #tpu.dot_dimension_numbers<[1], [0], [0], [1], [0, 0, 1, 1], [], []>} : vector<8x32xbf16>, vector<32x128xbf16>, vector<8x128xf32> -> vector<8x128xf32>
    %455 = arith.addf %431, %454 : vector<8x128xf32>
    %456 = tpu.concatenate %360, %455 in 0 : vector<8x128xf32>, vector<8x128xf32> -> vector<16x128xf32>
    %457 = vector.extract_strided_slice %3 {offsets = [1, 0], sizes = [1, 128], strides = [1, 1]} : vector<2x128xf32> to vector<1x128xf32>
    %458 = vector.shape_cast %457 : vector<1x128xf32> to vector<128xf32>
    %459 = vector.shape_cast %458 : vector<128xf32> to vector<1x128xf32>
    %460 = vector.broadcast %459 : vector<1x128xf32> to vector<16x128xf32>
    %461 = arith.addf %456, %460 : vector<16x128xf32>
    %462 = arith.addf %0, %265 : vector<16x128xf32>
    %463 = arith.addf %1, %461 : vector<16x128xf32>
    %464 = vector.extract_strided_slice %2 {offsets = [4, 0], sizes = [1, 128], strides = [1, 1]} : vector<8x128xf32> to vector<1x128xf32>
    %465 = vector.shape_cast %464 : vector<1x128xf32> to vector<128xf32>
    %466 = vector.extract_strided_slice %2 {offsets = [5, 0], sizes = [1, 128], strides = [1, 1]} : vector<8x128xf32> to vector<1x128xf32>
    %467 = vector.shape_cast %466 : vector<1x128xf32> to vector<128xf32>
    %cst_149 = arith.constant dense<0.000000e+00> : vector<16xf32>
    %468 = vector.multi_reduction <add>, %462, %cst_149 [1] : vector<16x128xf32> to vector<16xf32>
    %469 = vector.shape_cast %468 : vector<16xf32> to vector<16x1xf32>
    %cst_150 = arith.constant 1.280000e+02 : f32
    %470 = vector.broadcast %cst_150 : f32 to vector<16x1xf32>
    %471 = arith.divf %469, %470 : vector<16x1xf32>
    %472 = arith.mulf %462, %462 : vector<16x128xf32>
    %cst_151 = arith.constant dense<0.000000e+00> : vector<16xf32>
    %473 = vector.multi_reduction <add>, %472, %cst_151 [1] : vector<16x128xf32> to vector<16xf32>
    %474 = vector.shape_cast %473 : vector<16xf32> to vector<16x1xf32>
    %cst_152 = arith.constant 1.280000e+02 : f32
    %475 = vector.broadcast %cst_152 : f32 to vector<16x1xf32>
    %476 = arith.divf %474, %475 : vector<16x1xf32>
    %477 = arith.mulf %471, %471 : vector<16x1xf32>
    %478 = arith.subf %476, %477 : vector<16x1xf32>
    %479 = vector.broadcast %471 : vector<16x1xf32> to vector<16x128xf32>
    %480 = arith.subf %462, %479 : vector<16x128xf32>
    %cst_153 = arith.constant 9.99999974E-6 : f32
    %481 = vector.broadcast %cst_153 : f32 to vector<16x1xf32>
    %482 = arith.addf %478, %481 : vector<16x1xf32>
    %483 = math.rsqrt %482 : vector<16x1xf32>
    %484 = vector.broadcast %483 : vector<16x1xf32> to vector<16x128xf32>
    %485 = arith.mulf %480, %484 : vector<16x128xf32>
    %486 = vector.shape_cast %465 : vector<128xf32> to vector<1x128xf32>
    %487 = vector.broadcast %486 : vector<1x128xf32> to vector<16x128xf32>
    %488 = arith.mulf %485, %487 : vector<16x128xf32>
    %489 = vector.shape_cast %467 : vector<128xf32> to vector<1x128xf32>
    %490 = vector.broadcast %489 : vector<1x128xf32> to vector<16x128xf32>
    %491 = arith.addf %488, %490 : vector<16x128xf32>
    %492 = vector.extract_strided_slice %2 {offsets = [6, 0], sizes = [1, 128], strides = [1, 1]} : vector<8x128xf32> to vector<1x128xf32>
    %493 = vector.shape_cast %492 : vector<1x128xf32> to vector<128xf32>
    %494 = vector.extract_strided_slice %2 {offsets = [7, 0], sizes = [1, 128], strides = [1, 1]} : vector<8x128xf32> to vector<1x128xf32>
    %495 = vector.shape_cast %494 : vector<1x128xf32> to vector<128xf32>
    %cst_154 = arith.constant dense<0.000000e+00> : vector<16xf32>
    %496 = vector.multi_reduction <add>, %463, %cst_154 [1] : vector<16x128xf32> to vector<16xf32>
    %497 = vector.shape_cast %496 : vector<16xf32> to vector<16x1xf32>
    %cst_155 = arith.constant 1.280000e+02 : f32
    %498 = vector.broadcast %cst_155 : f32 to vector<16x1xf32>
    %499 = arith.divf %497, %498 : vector<16x1xf32>
    %500 = arith.mulf %463, %463 : vector<16x128xf32>
    %cst_156 = arith.constant dense<0.000000e+00> : vector<16xf32>
    %501 = vector.multi_reduction <add>, %500, %cst_156 [1] : vector<16x128xf32> to vector<16xf32>
    %502 = vector.shape_cast %501 : vector<16xf32> to vector<16x1xf32>
    %cst_157 = arith.constant 1.280000e+02 : f32
    %503 = vector.broadcast %cst_157 : f32 to vector<16x1xf32>
    %504 = arith.divf %502, %503 : vector<16x1xf32>
    %505 = arith.mulf %499, %499 : vector<16x1xf32>
    %506 = arith.subf %504, %505 : vector<16x1xf32>
    %507 = vector.broadcast %499 : vector<16x1xf32> to vector<16x128xf32>
    %508 = arith.subf %463, %507 : vector<16x128xf32>
    %cst_158 = arith.constant 9.99999974E-6 : f32
    %509 = vector.broadcast %cst_158 : f32 to vector<16x1xf32>
    %510 = arith.addf %506, %509 : vector<16x1xf32>
    %511 = math.rsqrt %510 : vector<16x1xf32>
    %512 = vector.broadcast %511 : vector<16x1xf32> to vector<16x128xf32>
    %513 = arith.mulf %508, %512 : vector<16x128xf32>
    %514 = vector.shape_cast %493 : vector<128xf32> to vector<1x128xf32>
    %515 = vector.broadcast %514 : vector<1x128xf32> to vector<16x128xf32>
    %516 = arith.mulf %513, %515 : vector<16x128xf32>
    %517 = vector.shape_cast %495 : vector<128xf32> to vector<1x128xf32>
    %518 = vector.broadcast %517 : vector<1x128xf32> to vector<16x128xf32>
    %519 = arith.addf %516, %518 : vector<16x128xf32>
    %520 = arith.truncf %491 : vector<16x128xf32> to vector<16x128xbf16>
    %c0_159 = arith.constant 0 : index
    %c0_160 = arith.constant 0 : index
    %c0_161 = arith.constant 0 : index
    %521 = vector.load %arg7[%c0_159, %c0_160, %c0_161] : memref<2x128x512xbf16, #tpu.memory_space<vmem>>, vector<1x128x512xbf16>
    %522 = vector.shape_cast %521 : vector<1x128x512xbf16> to vector<128x512xbf16>
    %cst_162 = arith.constant dense<0.000000e+00> : vector<16x512xf32>
    %523 = tpu.matmul %520, %522, %cst_162 {dimension_numbers = #tpu.dot_dimension_numbers<[1], [0], [0], [1], [0, 0, 1, 1], [], []>} : vector<16x128xbf16>, vector<128x512xbf16>, vector<16x512xf32> -> vector<16x512xf32>
    %524 = vector.extract_strided_slice %4 {offsets = [0, 0], sizes = [1, 512], strides = [1, 1]} : vector<2x512xf32> to vector<1x512xf32>
    %525 = vector.shape_cast %524 : vector<1x512xf32> to vector<512xf32>
    %526 = vector.shape_cast %525 : vector<512xf32> to vector<1x512xf32>
    %527 = vector.broadcast %526 : vector<1x512xf32> to vector<16x512xf32>
    %528 = arith.addf %523, %527 : vector<16x512xf32>
    %cst_163 = arith.constant 5.000000e-01 : f32
    %529 = vector.broadcast %cst_163 : f32 to vector<16x512xf32>
    %530 = arith.mulf %529, %528 : vector<16x512xf32>
    %cst_164 = arith.constant 4.471500e-02 : f32
    %531 = vector.broadcast %cst_164 : f32 to vector<16x512xf32>
    %532 = arith.mulf %531, %528 : vector<16x512xf32>
    %533 = arith.mulf %532, %528 : vector<16x512xf32>
    %534 = arith.mulf %533, %528 : vector<16x512xf32>
    %535 = arith.addf %528, %534 : vector<16x512xf32>
    %cst_165 = arith.constant 0.797884583 : f32
    %536 = vector.broadcast %cst_165 : f32 to vector<16x512xf32>
    %537 = arith.mulf %536, %535 : vector<16x512xf32>
    %538 = math.tanh %537 : vector<16x512xf32>
    %cst_166 = arith.constant 1.000000e+00 : f32
    %539 = vector.broadcast %cst_166 : f32 to vector<16x512xf32>
    %540 = arith.addf %539, %538 : vector<16x512xf32>
    %541 = arith.mulf %530, %540 : vector<16x512xf32>
    %542 = arith.truncf %541 : vector<16x512xf32> to vector<16x512xbf16>
    %c0_167 = arith.constant 0 : index
    %c0_168 = arith.constant 0 : index
    %c0_169 = arith.constant 0 : index
    %543 = vector.load %arg9[%c0_167, %c0_168, %c0_169] : memref<2x512x128xbf16, #tpu.memory_space<vmem>>, vector<1x512x128xbf16>
    %544 = vector.shape_cast %543 : vector<1x512x128xbf16> to vector<512x128xbf16>
    %cst_170 = arith.constant dense<0.000000e+00> : vector<16x128xf32>
    %545 = tpu.matmul %542, %544, %cst_170 {dimension_numbers = #tpu.dot_dimension_numbers<[1], [0], [0], [1], [0, 0, 1, 1], [], []>} : vector<16x512xbf16>, vector<512x128xbf16>, vector<16x128xf32> -> vector<16x128xf32>
    %546 = vector.extract_strided_slice %5 {offsets = [0, 0], sizes = [1, 128], strides = [1, 1]} : vector<2x128xf32> to vector<1x128xf32>
    %547 = vector.shape_cast %546 : vector<1x128xf32> to vector<128xf32>
    %548 = vector.shape_cast %547 : vector<128xf32> to vector<1x128xf32>
    %549 = vector.broadcast %548 : vector<1x128xf32> to vector<16x128xf32>
    %550 = arith.addf %545, %549 : vector<16x128xf32>
    %551 = arith.addf %462, %550 : vector<16x128xf32>
    %c0_171 = arith.constant 0 : index
    %c0_172 = arith.constant 0 : index
    %552 = vector.load %arg11[%c0_171, %c0_172] : memref<16x128xf32, #tpu.memory_space<vmem>>, vector<16x128xf32>
    tpu.vector_store %arg11[%c0_171, %c0_172], %551 {strides = array<i32>} : memref<16x128xf32, #tpu.memory_space<vmem>>, vector<16x128xf32>,
    %553 = arith.truncf %519 : vector<16x128xf32> to vector<16x128xbf16>
    %c1_173 = arith.constant 1 : index
    %c0_174 = arith.constant 0 : index
    %c0_175 = arith.constant 0 : index
    %554 = vector.load %arg7[%c1_173, %c0_174, %c0_175] : memref<2x128x512xbf16, #tpu.memory_space<vmem>>, vector<1x128x512xbf16>
    %555 = vector.shape_cast %554 : vector<1x128x512xbf16> to vector<128x512xbf16>
    %cst_176 = arith.constant dense<0.000000e+00> : vector<16x512xf32>
    %556 = tpu.matmul %553, %555, %cst_176 {dimension_numbers = #tpu.dot_dimension_numbers<[1], [0], [0], [1], [0, 0, 1, 1], [], []>} : vector<16x128xbf16>, vector<128x512xbf16>, vector<16x512xf32> -> vector<16x512xf32>
    %557 = vector.extract_strided_slice %4 {offsets = [1, 0], sizes = [1, 512], strides = [1, 1]} : vector<2x512xf32> to vector<1x512xf32>
    %558 = vector.shape_cast %557 : vector<1x512xf32> to vector<512xf32>
    %559 = vector.shape_cast %558 : vector<512xf32> to vector<1x512xf32>
    %560 = vector.broadcast %559 : vector<1x512xf32> to vector<16x512xf32>
    %561 = arith.addf %556, %560 : vector<16x512xf32>
    %cst_177 = arith.constant 5.000000e-01 : f32
    %562 = vector.broadcast %cst_177 : f32 to vector<16x512xf32>
    %563 = arith.mulf %562, %561 : vector<16x512xf32>
    %cst_178 = arith.constant 4.471500e-02 : f32
    %564 = vector.broadcast %cst_178 : f32 to vector<16x512xf32>
    %565 = arith.mulf %564, %561 : vector<16x512xf32>
    %566 = arith.mulf %565, %561 : vector<16x512xf32>
    %567 = arith.mulf %566, %561 : vector<16x512xf32>
    %568 = arith.addf %561, %567 : vector<16x512xf32>
    %cst_179 = arith.constant 0.797884583 : f32
    %569 = vector.broadcast %cst_179 : f32 to vector<16x512xf32>
    %570 = arith.mulf %569, %568 : vector<16x512xf32>
    %571 = math.tanh %570 : vector<16x512xf32>
    %cst_180 = arith.constant 1.000000e+00 : f32
    %572 = vector.broadcast %cst_180 : f32 to vector<16x512xf32>
    %573 = arith.addf %572, %571 : vector<16x512xf32>
    %574 = arith.mulf %563, %573 : vector<16x512xf32>
    %575 = arith.truncf %574 : vector<16x512xf32> to vector<16x512xbf16>
    %c1_181 = arith.constant 1 : index
    %c0_182 = arith.constant 0 : index
    %c0_183 = arith.constant 0 : index
    %576 = vector.load %arg9[%c1_181, %c0_182, %c0_183] : memref<2x512x128xbf16, #tpu.memory_space<vmem>>, vector<1x512x128xbf16>
    %577 = vector.shape_cast %576 : vector<1x512x128xbf16> to vector<512x128xbf16>
    %cst_184 = arith.constant dense<0.000000e+00> : vector<16x128xf32>
    %578 = tpu.matmul %575, %577, %cst_184 {dimension_numbers = #tpu.dot_dimension_numbers<[1], [0], [0], [1], [0, 0, 1, 1], [], []>} : vector<16x512xbf16>, vector<512x128xbf16>, vector<16x128xf32> -> vector<16x128xf32>
    %579 = vector.extract_strided_slice %5 {offsets = [1, 0], sizes = [1, 128], strides = [1, 1]} : vector<2x128xf32> to vector<1x128xf32>
    %580 = vector.shape_cast %579 : vector<1x128xf32> to vector<128xf32>
    %581 = vector.shape_cast %580 : vector<128xf32> to vector<1x128xf32>
    %582 = vector.broadcast %581 : vector<1x128xf32> to vector<16x128xf32>
    %583 = arith.addf %578, %582 : vector<16x128xf32>
    %584 = arith.addf %463, %583 : vector<16x128xf32>
    %c0_185 = arith.constant 0 : index
    %c0_186 = arith.constant 0 : index
    %585 = vector.load %arg12[%c0_185, %c0_186] : memref<16x128xf32, #tpu.memory_space<vmem>>, vector<16x128xf32>
    tpu.vector_store %arg12[%c0_185, %c0_186], %584 {strides = array<i32>} : memref<16x128xf32, #tpu.memory_space<vmem>>, vector<16x128xf32>,
    return
  }
  func.func @transform_0(%arg0: i32) -> (i32, i32) {
    %c0_i32 = arith.constant 0 : i32
    %c0_i32_0 = arith.constant 0 : i32
    return %arg0, %c0_i32 : i32, i32
  }
  func.func @transform_1(%arg0: i32) -> (i32, i32) {
    %c0_i32 = arith.constant 0 : i32
    %c0_i32_0 = arith.constant 0 : i32
    return %arg0, %c0_i32 : i32, i32
  }
  func.func @transform_2(%arg0: i32) -> (i32, i32) {
    %c0_i32 = arith.constant 0 : i32
    %c0_i32_0 = arith.constant 0 : i32
    %c0_i32_1 = arith.constant 0 : i32
    return %c0_i32, %c0_i32_0 : i32, i32
  }
  func.func @transform_3(%arg0: i32) -> (i32, i32, i32) {
    %c0_i32 = arith.constant 0 : i32
    %c0_i32_0 = arith.constant 0 : i32
    %c0_i32_1 = arith.constant 0 : i32
    %c0_i32_2 = arith.constant 0 : i32
    return %c0_i32, %c0_i32_0, %c0_i32_1 : i32, i32, i32
  }
  func.func @transform_4(%arg0: i32) -> (i32, i32, i32) {
    %c0_i32 = arith.constant 0 : i32
    %c0_i32_0 = arith.constant 0 : i32
    %c0_i32_1 = arith.constant 0 : i32
    %c0_i32_2 = arith.constant 0 : i32
    return %c0_i32, %c0_i32_0, %c0_i32_1 : i32, i32, i32
  }
  func.func @transform_5(%arg0: i32) -> (i32, i32) {
    %c0_i32 = arith.constant 0 : i32
    %c0_i32_0 = arith.constant 0 : i32
    %c0_i32_1 = arith.constant 0 : i32
    return %c0_i32, %c0_i32_0 : i32, i32
  }
  func.func @transform_6(%arg0: i32) -> (i32, i32, i32) {
    %c0_i32 = arith.constant 0 : i32
    %c0_i32_0 = arith.constant 0 : i32
    %c0_i32_1 = arith.constant 0 : i32
    %c0_i32_2 = arith.constant 0 : i32
    return %c0_i32, %c0_i32_0, %c0_i32_1 : i32, i32, i32
  }
  func.func @transform_7(%arg0: i32) -> (i32, i32) {
    %c0_i32 = arith.constant 0 : i32
    %c0_i32_0 = arith.constant 0 : i32
    %c0_i32_1 = arith.constant 0 : i32
    return %c0_i32, %c0_i32_0 : i32, i32
  }
  func.func @transform_8(%arg0: i32) -> (i32, i32, i32) {
    %c0_i32 = arith.constant 0 : i32
    %c0_i32_0 = arith.constant 0 : i32
    %c0_i32_1 = arith.constant 0 : i32
    %c0_i32_2 = arith.constant 0 : i32
    return %c0_i32, %c0_i32_0, %c0_i32_1 : i32, i32, i32
  }
  func.func @transform_9(%arg0: i32) -> (i32, i32) {
    %c0_i32 = arith.constant 0 : i32
    %c0_i32_0 = arith.constant 0 : i32
    %c0_i32_1 = arith.constant 0 : i32
    return %c0_i32, %c0_i32_0 : i32, i32
  }
  func.func @transform_10(%arg0: i32) -> (i32, i32) {
    %c0_i32 = arith.constant 0 : i32
    %c0_i32_0 = arith.constant 0 : i32
    return %arg0, %c0_i32 : i32, i32
  }
  func.func @transform_11(%arg0: i32) -> (i32, i32) {
    %c0_i32 = arith.constant 0 : i32
    %c0_i32_0 = arith.constant 0 : i32
    return %arg0, %c0_i32 : i32, i32
  }
}

</mosaic_0001>

<llo_original>
// kernel: tpu_custom_call.1
$region0: #{tpu_custom_call.1}
  #allocation0 [shape = 'u32[]', space=smem, size = 0x4, offset = 0x4, fixed_abs, tag = 'smem constant byte address 0x4 - core index']
  #allocation1 [shape = 'u32[144,128]{1,0:T(1,128)}', space=vmem, size = 0x12000, scoped, tag = 'internal scratch']
  %s0 = inlined_call_operand.hbm [shape: f32[16,128], index: 0, kind: input, shape index: {}, may-alias: {0,10}]
  %s1 = inlined_call_operand.hbm [shape: f32[16,128], index: 1, kind: input, shape index: {}, may-alias: {1,11}]
  %s2 = inlined_call_operand.vmem [shape: f32[8,128], index: 2, kind: input, shape index: {}]
  %s3 = inlined_call_operand.hbm [shape: bf16[2,128,384], index: 3, kind: input, shape index: {}]
  %s4 = inlined_call_operand.hbm [shape: bf16[8,32,128], index: 4, kind: input, shape index: {}]
  %s5 = inlined_call_operand.vmem [shape: f32[2,128], index: 5, kind: input, shape index: {}]
  %s6 = inlined_call_operand.hbm [shape: bf16[2,128,512], index: 6, kind: input, shape index: {}]
  %s7 = inlined_call_operand.vmem [shape: f32[2,512], index: 7, kind: input, shape index: {}]
  %s8 = inlined_call_operand.hbm [shape: bf16[2,512,128], index: 8, kind: input, shape index: {}]
  %s9 = inlined_call_operand.vmem [shape: f32[2,128], index: 9, kind: input, shape index: {}]
  %s10 = inlined_call_operand.hbm [shape: f32[16,128], index: 10, kind: output, shape index: {0}, may-alias: {0,10}]
  %s11 = inlined_call_operand.hbm [shape: f32[16,128], index: 11, kind: output, shape index: {1}, may-alias: {1,11}]
  %12 = xla_tuple %s10, %s11
  %s13 = sld [smem:[#allocation0]]
  $region82: #{tpu_custom_call.1} parent=0
    _
  %s15 = ssub.s32 1, %s13
  %s16 = scalar_select 0, %s15, %s13
  $region1: #{tpu_custom_call.1} parent=0
    #allocation2 [shape = 'u8[8192]{0}', space=vmem, size = 0x2000, scoped, tag = 'input window, operand 0, single buffered']
    #allocation3 [shape = 's32[1]{0}', space=sflag, size = 0x4, scoped, tag = 'scoped memory for tpu_custom_call.1']
    #allocation4 [shape = 's32[1]{0}', space=sflag, size = 0x4, scoped, tag = 'scoped memory for tpu_custom_call.1']
    #allocation5 [shape = 'u8[8192]{0}', space=vmem, size = 0x2000, scoped, tag = 'input window, operand 1, single buffered']
    #allocation6 [shape = 's32[1]{0}', space=sflag, size = 0x4, scoped, tag = 'scoped memory for tpu_custom_call.1']
    #allocation7 [shape = 'u8[196608]{0}', space=vmem, size = 0x30000, scoped, tag = 'input window, operand 3, single buffered']
    #allocation8 [shape = 'u8[65536]{0}', space=vmem, size = 0x10000, scoped, tag = 'input window, operand 4, single buffered']
    #allocation9 [shape = 's32[1]{0}', space=sflag, size = 0x4, scoped, tag = 'scoped memory for tpu_custom_call.1']
    #allocation10 [shape = 'u8[262144]{0}', space=vmem, size = 0x40000, scoped, tag = 'input window, operand 6, single buffered']
    #allocation11 [shape = 'u8[262144]{0}', space=vmem, size = 0x40000, scoped, tag = 'input window, operand 8, single buffered']
    #allocation12 [shape = 's32[1]{0}', space=sflag, size = 0x4, scoped, tag = 'scoped memory for tpu_custom_call.1']
    #allocation13 [shape = 'u8[8192]{0}', space=vmem, size = 0x2000, scoped, tag = 'output window, operand 0, single buffered']
    #allocation14 [shape = 'u8[8192]{0}', space=vmem, size = 0x2000, scoped, tag = 'output window, operand 1, single buffered']
    #allocation15 [shape = 's32[1]{0}', space=sflag, size = 0x4, scoped, tag = 'scoped memory for tpu_custom_call.1']
    %17 = vsyncpa [#allocation3], 0
    %18 = vsyncpa [#allocation6], 0
    %19 = vsyncpa [#allocation9], 0
    %20 = vsyncpa [#allocation12], 0
    %21 = vsyncpa [#allocation4], 0
    %22 = vsyncpa [#allocation15], 0
    // Predicated region
    $region2: #{tpu_custom_call.1} parent=1 // pred_check
      _
    $region3: #{tpu_custom_call.1} parent=1 // pred_check_branch
      %24 = sbr.rel (0) target = $region5
    $region4: #{tpu_custom_call.1} parent=1 // pred_region
      %s26 = ssub.s32 256, 256
      %27 = vsyncadd [#allocation3], %s26
      %s28 = sshll.u32 [#allocation2], 4
      %s29 = int_to_ptr.vmem [resolvable:$true] %s28
      %34 = dma.hbm_to_vmem [thread:$0]  %s0, 256, %s29, [#allocation3], 128, 128, 8
    $region5: #{tpu_custom_call.1} parent=1 // pred_fallthru
      _
    // Predicated region
    $region6: #{tpu_custom_call.1} parent=1 // pred_check
      _
    $region7: #{tpu_custom_call.1} parent=1 // pred_check_branch
      %36 = sbr.rel (0) target = $region9
    $region8: #{tpu_custom_call.1} parent=1 // pred_region
      %s38 = ssub.s32 256, 256
      %39 = vsyncadd [#allocation6], %s38
      %s40 = sshll.u32 [#allocation5], 4
      %s41 = int_to_ptr.vmem [resolvable:$true] %s40
      %46 = dma.hbm_to_vmem [thread:$0]  %s1, 256, %s41, [#allocation6], 128, 128, 8
    $region9: #{tpu_custom_call.1} parent=1 // pred_fallthru
      _
    // Predicated region
    $region10: #{tpu_custom_call.1} parent=1 // pred_check
      _
    $region11: #{tpu_custom_call.1} parent=1 // pred_check_branch
      %48 = sbr.rel (0) target = $region13
    $region12: #{tpu_custom_call.1} parent=1 // pred_region
      _
    $region13: #{tpu_custom_call.1} parent=1 // pred_fallthru
      _
    // Predicated region
    $region14: #{tpu_custom_call.1} parent=1 // pred_check
      _
    $region15: #{tpu_custom_call.1} parent=1 // pred_check_branch
      %50 = sbr.rel (0) target = $region17
    $region16: #{tpu_custom_call.1} parent=1 // pred_region
      %s52 = ssub.s32 6144, 6144
      %53 = vsyncadd [#allocation6], %s52
      %s54 = sshll.u32 [#allocation7], 4
      %s55 = int_to_ptr.vmem [resolvable:$true] %s54
      %60 = dma.hbm_to_vmem [thread:$0]  %s3, 6144, %s55, [#allocation6], 192, 192, 12
    $region17: #{tpu_custom_call.1} parent=1 // pred_fallthru
      _
    // Predicated region
    $region18: #{tpu_custom_call.1} parent=1 // pred_check
      _
    $region19: #{tpu_custom_call.1} parent=1 // pred_check_branch
      %62 = sbr.rel (0) target = $region21
    $region20: #{tpu_custom_call.1} parent=1 // pred_region
      %s64 = ssub.s32 2048, 2048
      %65 = vsyncadd [#allocation9], %s64
      %s66 = sshll.u32 [#allocation8], 4
      %s67 = int_to_ptr.vmem [resolvable:$true] %s66
      %72 = dma.hbm_to_vmem [thread:$0]  %s4, 2048, %s67, [#allocation9], 64, 64, 4
    $region21: #{tpu_custom_call.1} parent=1 // pred_fallthru
      _
    // Predicated region
    $region22: #{tpu_custom_call.1} parent=1 // pred_check
      _
    $region23: #{tpu_custom_call.1} parent=1 // pred_check_branch
      %74 = sbr.rel (0) target = $region25
    $region24: #{tpu_custom_call.1} parent=1 // pred_region
      _
    $region25: #{tpu_custom_call.1} parent=1 // pred_fallthru
      _
    // Predicated region
    $region26: #{tpu_custom_call.1} parent=1 // pred_check
      _
    $region27: #{tpu_custom_call.1} parent=1 // pred_check_branch
      %76 = sbr.rel (0) target = $region29
    $region28: #{tpu_custom_call.1} parent=1 // pred_region
      %s78 = ssub.s32 8192, 8192
      %79 = vsyncadd [#allocation9], %s78
      %s80 = sshll.u32 [#allocation10], 4
      %s81 = int_to_ptr.vmem [resolvable:$true] %s80
      %86 = dma.hbm_to_vmem [thread:$0]  %s6, 8192, %s81, [#allocation9], 256, 256, 16
    $region29: #{tpu_custom_call.1} parent=1 // pred_fallthru
      _
    // Predicated region
    $region30: #{tpu_custom_call.1} parent=1 // pred_check
      _
    $region31: #{tpu_custom_call.1} parent=1 // pred_check_branch
      %88 = sbr.rel (0) target = $region33
    $region32: #{tpu_custom_call.1} parent=1 // pred_region
      _
    $region33: #{tpu_custom_call.1} parent=1 // pred_fallthru
      _
    // Predicated region
    $region34: #{tpu_custom_call.1} parent=1 // pred_check
      _
    $region35: #{tpu_custom_call.1} parent=1 // pred_check_branch
      %90 = sbr.rel (0) target = $region37
    $region36: #{tpu_custom_call.1} parent=1 // pred_region
      %s92 = ssub.s32 8192, 8192
      %93 = vsyncadd [#allocation12], %s92
      %s94 = sshll.u32 [#allocation11], 4
      %s95 = int_to_ptr.vmem [resolvable:$true] %s94
      %100 = dma.hbm_to_vmem [thread:$0]  %s8, 8192, %s95, [#allocation12], 64, 64, 4
    $region37: #{tpu_custom_call.1} parent=1 // pred_fallthru
      _
    // Predicated region
    $region38: #{tpu_custom_call.1} parent=1 // pred_check
      _
    $region39: #{tpu_custom_call.1} parent=1 // pred_check_branch
      %102 = sbr.rel (0) target = $region41
    $region40: #{tpu_custom_call.1} parent=1 // pred_region
      _
    $region41: #{tpu_custom_call.1} parent=1 // pred_fallthru
      _
    // Predicated region
    $region42: #{tpu_custom_call.1} parent=1 // pred_check
      _
    $region43: #{tpu_custom_call.1} parent=1 // pred_check_branch
      %104 = sbr.rel (0) target = $region45
    $region44: #{tpu_custom_call.1} parent=1 // pred_region
      %105 = dma.done [#allocation3], 256
    $region45: #{tpu_custom_call.1} parent=1 // pred_fallthru
      _
    // Predicated region
    $region46: #{tpu_custom_call.1} parent=1 // pred_check
      _
    $region47: #{tpu_custom_call.1} parent=1 // pred_check_branch
      %107 = sbr.rel (0) target = $region49
    $region48: #{tpu_custom_call.1} parent=1 // pred_region
      %108 = dma.done [#allocation6], 256
    $region49: #{tpu_custom_call.1} parent=1 // pred_fallthru
      _
    // Predicated region
    $region50: #{tpu_custom_call.1} parent=1 // pred_check
      _
    $region51: #{tpu_custom_call.1} parent=1 // pred_check_branch
      %110 = sbr.rel (0) target = $region53
    $region52: #{tpu_custom_call.1} parent=1 // pred_region
      %111 = dma.done [#allocation6], 6144
    $region53: #{tpu_custom_call.1} parent=1 // pred_fallthru
      _
    // Predicated region
    $region54: #{tpu_custom_call.1} parent=1 // pred_check
      _
    $region55: #{tpu_custom_call.1} parent=1 // pred_check_branch
      %113 = sbr.rel (0) target = $region57
    $region56: #{tpu_custom_call.1} parent=1 // pred_region
      %114 = dma.done [#allocation9], 2048
    $region57: #{tpu_custom_call.1} parent=1 // pred_fallthru
      _
    // Predicated region
    $region58: #{tpu_custom_call.1} parent=1 // pred_check
      _
    $region59: #{tpu_custom_call.1} parent=1 // pred_check_branch
      %116 = sbr.rel (0) target = $region61
    $region60: #{tpu_custom_call.1} parent=1 // pred_region
      %117 = dma.done [#allocation9], 8192
    $region61: #{tpu_custom_call.1} parent=1 // pred_fallthru
      _
    // Predicated region
    $region62: #{tpu_custom_call.1} parent=1 // pred_check
      _
    $region63: #{tpu_custom_call.1} parent=1 // pred_check_branch
      %119 = sbr.rel (0) target = $region65
    $region64: #{tpu_custom_call.1} parent=1 // pred_region
      %120 = dma.done [#allocation12], 8192
    $region65: #{tpu_custom_call.1} parent=1 // pred_fallthru
      _
    %v122 = vld [vmem:[#allocation2] sm:$0xff]
    %v123 = vld [vmem:[#allocation2 + $0x8] sm:$0xff]
    %v124 = vld [vmem:[#allocation5] sm:$0xff]
    %v125 = vld [vmem:[#allocation5 + $0x8] sm:$0xff]
    %v126 = vld [vmem:[%s2] sm:$0xff]
    %v127 = vld [vmem:[%s5] sm:$0x3]
    %v128 = vld [vmem:[%s7] sm:$0xff]
    %v129 = vld [vmem:[%s9] sm:$0x3]
    %130 = vadd.xlane.f32.xlu0 %v122
    %v131 = vpop.xlane.xlu0 %130
    %132 = vadd.xlane.f32.xlu0 %v123
    %v133 = vpop.xlane.xlu0 %132
    %v134 = vrcp.pop 128.0
    %v135 = vmul.f32 %v131, %v134
    %v136 = vmul.f32 %v133, %v134
    %v137 = vmul.f32 %v122, %v122
    %v138 = vmul.f32 %v123, %v123
    %139 = vadd.xlane.f32.xlu0 %v137
    %v140 = vpop.xlane.xlu0 %139
    %141 = vadd.xlane.f32.xlu0 %v138
    %v142 = vpop.xlane.xlu0 %141
    %v143 = vmul.f32 %v140, %v134
    %v144 = vmul.f32 %v142, %v134
    %v145 = vmul.f32 %v135, %v135
    %v146 = vmul.f32 %v136, %v136
    %v147 = vsub.f32 %v143, %v145
    %v148 = vsub.f32 %v144, %v146
    %v149 = vsub.f32 %v122, %v135
    %v150 = vsub.f32 %v123, %v136
    %v151 = vadd.f32 %v147, 1e-05
    %v152 = vadd.f32 %v148, 1e-05
    %v153 = vrsqrt.pop %v151
    %v154 = vrsqrt.pop %v152
    %v155 = vmul.f32 %v149, %v153
    %v156 = vmul.f32 %v150, %v154
    %v157 = vlaneseq
    %v158 = vshrl.u32 %v157, 7
    %v159 = vsub.s32 0, %v158
    %v160 = vrot.slane %v126, %v159
    %v161 = vmul.f32 %v155, %v160
    %v162 = vmul.f32 %v156, %v160
    %v163 = vlaneseq
    %v164 = vshrl.u32 %v163, 7
    %v165 = vsub.s32 1, %v164
    %v166 = vrot.slane %v126, %v165
    %v167 = vadd.f32 %v161, %v166
    %v168 = vadd.f32 %v162, %v166
    %169 = vadd.xlane.f32.xlu0 %v124
    %v170 = vpop.xlane.xlu0 %169
    %171 = vadd.xlane.f32.xlu0 %v125
    %v172 = vpop.xlane.xlu0 %171
    %v173 = vmul.f32 %v170, %v134
    %v174 = vmul.f32 %v172, %v134
    %v175 = vmul.f32 %v124, %v124
    %v176 = vmul.f32 %v125, %v125
    %177 = vadd.xlane.f32.xlu0 %v175
    %v178 = vpop.xlane.xlu0 %177
    %179 = vadd.xlane.f32.xlu0 %v176
    %v180 = vpop.xlane.xlu0 %179
    %v181 = vmul.f32 %v178, %v134
    %v182 = vmul.f32 %v180, %v134
    %v183 = vmul.f32 %v173, %v173
    %v184 = vmul.f32 %v174, %v174
    %v185 = vsub.f32 %v181, %v183
    %v186 = vsub.f32 %v182, %v184
    %v187 = vsub.f32 %v124, %v173
    %v188 = vsub.f32 %v125, %v174
    %v189 = vadd.f32 %v185, 1e-05
    %v190 = vadd.f32 %v186, 1e-05
    %v191 = vrsqrt.pop %v189
    %v192 = vrsqrt.pop %v190
    %v193 = vmul.f32 %v187, %v191
    %v194 = vmul.f32 %v188, %v192
    %v195 = vlaneseq
    %v196 = vshrl.u32 %v195, 7
    %v197 = vsub.s32 2, %v196
    %v198 = vrot.slane %v126, %v197
    %v199 = vmul.f32 %v193, %v198
    %v200 = vmul.f32 %v194, %v198
    %v201 = vlaneseq
    %v202 = vshrl.u32 %v201, 7
    %v203 = vsub.s32 3, %v202
    %v204 = vrot.slane %v126, %v203
    %v205 = vadd.f32 %v199, %v204
    %v206 = vadd.f32 %v200, %v204
    %v207 = vpack.c.bf16 %v168, %v167
    %v208 = vld [vmem:[#allocation7] sm:$0xff]
    %v209 = vld [vmem:[#allocation7 + $0x8] sm:$0xf]
    %v210 = vld [vmem:[#allocation7 + $0xc] sm:$0xff]
    %v211 = vld [vmem:[#allocation7 + $0x14] sm:$0xf]
    %v212 = vld [vmem:[#allocation7 + $0x18] sm:$0xff]
    %v213 = vld [vmem:[#allocation7 + $0x20] sm:$0xf]
    %v214 = vld [vmem:[#allocation7 + $0x24] sm:$0xff]
    %v215 = vld [vmem:[#allocation7 + $0x2c] sm:$0xf]
    %v216 = vld [vmem:[#allocation7 + $0x30] sm:$0xff]
    %v217 = vld [vmem:[#allocation7 + $0x38] sm:$0xf]
    %v218 = vld [vmem:[#allocation7 + $0x3c] sm:$0xff]
    %v219 = vld [vmem:[#allocation7 + $0x44] sm:$0xf]
    %v220 = vld [vmem:[#allocation7 + $0x48] sm:$0xff]
    %v221 = vld [vmem:[#allocation7 + $0x50] sm:$0xf]
    %v222 = vld [vmem:[#allocation7 + $0x54] sm:$0xff]
    %v223 = vld [vmem:[#allocation7 + $0x5c] sm:$0xf]
    %v224 = vld [vmem:[#allocation7 + $0x60] sm:$0xff]
    %v225 = vld [vmem:[#allocation7 + $0x68] sm:$0xf]
    %v226 = vld [vmem:[#allocation7 + $0x6c] sm:$0xff]
    %v227 = vld [vmem:[#allocation7 + $0x74] sm:$0xf]
    %v228 = vld [vmem:[#allocation7 + $0x78] sm:$0xff]
    %v229 = vld [vmem:[#allocation7 + $0x80] sm:$0xf]
    %v230 = vld [vmem:[#allocation7 + $0x84] sm:$0xff]
    %v231 = vld [vmem:[#allocation7 + $0x8c] sm:$0xf]
    %v232 = vld [vmem:[#allocation7 + $0x90] sm:$0xff]
    %v233 = vld [vmem:[#allocation7 + $0x98] sm:$0xf]
    %v234 = vld [vmem:[#allocation7 + $0x9c] sm:$0xff]
    %v235 = vld [vmem:[#allocation7 + $0xa4] sm:$0xf]
    %v236 = vld [vmem:[#allocation7 + $0xa8] sm:$0xff]
    %v237 = vld [vmem:[#allocation7 + $0xb0] sm:$0xf]
    %v238 = vld [vmem:[#allocation7 + $0xb4] sm:$0xff]
    %v239 = vld [vmem:[#allocation7 + $0xbc] sm:$0xf]
    %v272 = vunpack.c.l.b16 %v208
    %v273 = vunpack.c.h.b16 %v208
    %v274 = vunpack.c.l.b16 %v209
    %v275 = vunpack.c.l.b16 %v210
    %v276 = vunpack.c.h.b16 %v210
    %v277 = vunpack.c.l.b16 %v211
    %v278 = vunpack.c.l.b16 %v212
    %v279 = vunpack.c.h.b16 %v212
    %v280 = vunpack.c.l.b16 %v213
    %v281 = vunpack.c.l.b16 %v214
    %v282 = vunpack.c.h.b16 %v214
    %v283 = vunpack.c.l.b16 %v215
    %v284 = vunpack.c.l.b16 %v216
    %v285 = vunpack.c.h.b16 %v216
    %v286 = vunpack.c.l.b16 %v217
    %v287 = vunpack.c.l.b16 %v218
    %v288 = vunpack.c.h.b16 %v218
    %v289 = vunpack.c.l.b16 %v219
    %v290 = vunpack.c.l.b16 %v220
    %v291 = vunpack.c.h.b16 %v220
    %v292 = vunpack.c.l.b16 %v221
    %v293 = vunpack.c.l.b16 %v222
    %v294 = vunpack.c.h.b16 %v222
    %v295 = vunpack.c.l.b16 %v223
    %v296 = vunpack.c.l.b16 %v224
    %v297 = vunpack.c.h.b16 %v224
    %v298 = vunpack.c.l.b16 %v225
    %v299 = vunpack.c.l.b16 %v226
    %v300 = vunpack.c.h.b16 %v226
    %v301 = vunpack.c.l.b16 %v227
    %v302 = vunpack.c.l.b16 %v228
    %v303 = vunpack.c.h.b16 %v228
    %v304 = vunpack.c.l.b16 %v229
    %v305 = vunpack.c.l.b16 %v230
    %v306 = vunpack.c.h.b16 %v230
    %v307 = vunpack.c.l.b16 %v231
    %v308 = vunpack.c.l.b16 %v232
    %v309 = vunpack.c.h.b16 %v232
    %v310 = vunpack.c.l.b16 %v233
    %v311 = vunpack.c.l.b16 %v234
    %v312 = vunpack.c.h.b16 %v234
    %v313 = vunpack.c.l.b16 %v235
    %v314 = vunpack.c.l.b16 %v236
    %v315 = vunpack.c.h.b16 %v236
    %v316 = vunpack.c.l.b16 %v237
    %v317 = vunpack.c.l.b16 %v238
    %v318 = vunpack.c.h.b16 %v238
    %v319 = vunpack.c.l.b16 %v239
    %v320 = vpack.c.b16 %v275, %v272
    %v321 = vpack.c.b16 %v276, %v273
    %v322 = vpack.c.b16 %v277, %v274
    %v323 = vpack.c.b16 %v281, %v278
    %v324 = vpack.c.b16 %v282, %v279
    %v325 = vpack.c.b16 %v283, %v280
    %v326 = vpack.c.b16 %v287, %v284
    %v327 = vpack.c.b16 %v288, %v285
    %v328 = vpack.c.b16 %v289, %v286
    %v329 = vpack.c.b16 %v293, %v290
    %v330 = vpack.c.b16 %v294, %v291
    %v331 = vpack.c.b16 %v295, %v292
    %v332 = vpack.c.b16 %v299, %v296
    %v333 = vpack.c.b16 %v300, %v297
    %v334 = vpack.c.b16 %v301, %v298
    %v335 = vpack.c.b16 %v305, %v302
    %v336 = vpack.c.b16 %v306, %v303
    %v337 = vpack.c.b16 %v307, %v304
    %v338 = vpack.c.b16 %v311, %v308
    %v339 = vpack.c.b16 %v312, %v309
    %v340 = vpack.c.b16 %v313, %v310
    %v341 = vpack.c.b16 %v317, %v314
    %v342 = vpack.c.b16 %v318, %v315
    %v343 = vpack.c.b16 %v319, %v316
    %368 = vmatprep.subr.bf16.mxu0 %v321
    %369 = vmatpush1.bf16.msra.mxu0 %v320
    %370 = vmatprep.subr.bf16.mxu0 %v324
    %371 = vmatpush1.bf16.msra.mxu0 %v323
    %372 = vmatprep.subr.bf16.mxu0 %v327
    %373 = vmatpush1.bf16.msra.mxu0 %v326
    %374 = vmatprep.subr.bf16.mxu0 %v330
    %375 = vmatpush1.bf16.msra.mxu0 %v329
    %376 = vmatprep.subr.bf16.mxu0 %v333
    %377 = vmatpush1.bf16.msra.mxu0 %v332
    %378 = vmatprep.subr.bf16.mxu0 %v336
    %379 = vmatpush1.bf16.msra.mxu0 %v335
    %380 = vmatprep.subr.bf16.mxu0 %v339
    %381 = vmatpush1.bf16.msra.mxu0 %v338
    %382 = vmatprep.subr.bf16.mxu0 %v342
    %383 = vmatpush1.bf16.msra.mxu0 %v341
    %384 = vmatprep.subr.bf16.mxu0 0
    %385 = vmatpush1.bf16.msra.mxu0 0
    %386 = vmatprep.subr.bf16.mxu0 0
    %387 = vmatpush1.bf16.msra.mxu0 0
    %388 = vmatprep.subr.bf16.mxu0 0
    %389 = vmatpush1.bf16.msra.mxu0 0
    %390 = vmatprep.subr.bf16.mxu0 0
    %391 = vmatpush1.bf16.msra.mxu0 0
    %392 = vmatprep.subr.bf16.mxu0 0
    %393 = vmatpush1.bf16.msra.mxu0 0
    %394 = vmatprep.subr.bf16.mxu0 0
    %395 = vmatpush1.bf16.msra.mxu0 0
    %396 = vmatprep.subr.bf16.mxu0 0
    %397 = vmatpush1.bf16.msra.mxu0 0
    %398 = vmatprep.subr.bf16.mxu0 0
    %399 = vmatpush1.bf16.msra.mxu0 0
    %400 = vmatprep.mubr.bf16.mxu0 0
    %401 = vmatmul.mubr.bf16.gmra.mrb[0].mxu0 %v207
    %v402 = vpop.f32.mrb[0].mxu0
    %v403 = vadd.f32 0.0, %v402
    %v404 = vpop.f32.mrb[0].mxu0
    %v405 = vadd.f32 0.0, %v404
    %v406 = vpop.f32.mrb[0].mxu0
    %v407 = vadd.f32 0.0, %v406
    %v408 = vpop.f32.mrb[0].mxu0
    %v409 = vadd.f32 0.0, %v408
    %410 = vdwg.mxu0
    %411 = vmatprep.subr.bf16.mxu0 0
    %412 = vmatpush1.bf16.msra.mxu0 %v322
    %413 = vmatprep.subr.bf16.mxu0 0
    %414 = vmatpush1.bf16.msra.mxu0 %v325
    %415 = vmatprep.subr.bf16.mxu0 0
    %416 = vmatpush1.bf16.msra.mxu0 %v328
    %417 = vmatprep.subr.bf16.mxu0 0
    %418 = vmatpush1.bf16.msra.mxu0 %v331
    %419 = vmatprep.subr.bf16.mxu0 0
    %420 = vmatpush1.bf16.msra.mxu0 %v334
    %421 = vmatprep.subr.bf16.mxu0 0
    %422 = vmatpush1.bf16.msra.mxu0 %v337
    %423 = vmatprep.subr.bf16.mxu0 0
    %424 = vmatpush1.bf16.msra.mxu0 %v340
    %425 = vmatprep.subr.bf16.mxu0 0
    %426 = vmatpush1.bf16.msra.mxu0 %v343
    %427 = vmatprep.subr.bf16.mxu0 0
    %428 = vmatpush1.bf16.msra.mxu0 0
    %429 = vmatprep.subr.bf16.mxu0 0
    %430 = vmatpush1.bf16.msra.mxu0 0
    %431 = vmatprep.subr.bf16.mxu0 0
    %432 = vmatpush1.bf16.msra.mxu0 0
    %433 = vmatprep.subr.bf16.mxu0 0
    %434 = vmatpush1.bf16.msra.mxu0 0
    %435 = vmatprep.subr.bf16.mxu0 0
    %436 = vmatpush1.bf16.msra.mxu0 0
    %437 = vmatprep.subr.bf16.mxu0 0
    %438 = vmatpush1.bf16.msra.mxu0 0
    %439 = vmatprep.subr.bf16.mxu0 0
    %440 = vmatpush1.bf16.msra.mxu0 0
    %441 = vmatprep.subr.bf16.mxu0 0
    %442 = vmatpush1.bf16.msra.mxu0 0
    %443 = vmatprep.mubr.bf16.mxu0 0
    %444 = vmatmul.mubr.bf16.gmra.mrb[0].mxu0 %v207
    %v445 = vpop.f32.mrb[0].mxu0
    %v446 = vadd.f32 0.0, %v445
    %v447 = vpop.f32.mrb[0].mxu0
    %v448 = vpop.f32.mrb[0].mxu0
    %v449 = vadd.f32 0.0, %v448
    %v450 = vpop.f32.mrb[0].mxu0
    %451 = vdwg.mxu0
    %v452 = vpack.c.bf16 %v206, %v205
    %s453 = scalar_lea.vmem [#allocation7], 192
    %v454 = vld [vmem:[%s453] sm:$0xff]
    %v455 = vld [vmem:[%s453 + $0x8] sm:$0xf]
    %v456 = vld [vmem:[%s453 + $0xc] sm:$0xff]
    %v457 = vld [vmem:[%s453 + $0x14] sm:$0xf]
    %v458 = vld [vmem:[%s453 + $0x18] sm:$0xff]
    %v459 = vld [vmem:[%s453 + $0x20] sm:$0xf]
    %v460 = vld [vmem:[%s453 + $0x24] sm:$0xff]
    %v461 = vld [vmem:[%s453 + $0x2c] sm:$0xf]
    %v462 = vld [vmem:[%s453 + $0x30] sm:$0xff]
    %v463 = vld [vmem:[%s453 + $0x38] sm:$0xf]
    %v464 = vld [vmem:[%s453 + $0x3c] sm:$0xff]
    %v465 = vld [vmem:[%s453 + $0x44] sm:$0xf]
    %v466 = vld [vmem:[%s453 + $0x48] sm:$0xff]
    %v467 = vld [vmem:[%s453 + $0x50] sm:$0xf]
    %v468 = vld [vmem:[%s453 + $0x54] sm:$0xff]
    %v469 = vld [vmem:[%s453 + $0x5c] sm:$0xf]
    %v470 = vld [vmem:[%s453 + $0x60] sm:$0xff]
    %v471 = vld [vmem:[%s453 + $0x68] sm:$0xf]
    %v472 = vld [vmem:[%s453 + $0x6c] sm:$0xff]
    %v473 = vld [vmem:[%s453 + $0x74] sm:$0xf]
    %v474 = vld [vmem:[%s453 + $0x78] sm:$0xff]
    %v475 = vld [vmem:[%s453 + $0x80] sm:$0xf]
    %v476 = vld [vmem:[%s453 + $0x84] sm:$0xff]
    %v477 = vld [vmem:[%s453 + $0x8c] sm:$0xf]
    %v478 = vld [vmem:[%s453 + $0x90] sm:$0xff]
    %v479 = vld [vmem:[%s453 + $0x98] sm:$0xf]
    %v480 = vld [vmem:[%s453 + $0x9c] sm:$0xff]
    %v481 = vld [vmem:[%s453 + $0xa4] sm:$0xf]
    %v482 = vld [vmem:[%s453 + $0xa8] sm:$0xff]
    %v483 = vld [vmem:[%s453 + $0xb0] sm:$0xf]
    %v484 = vld [vmem:[%s453 + $0xb4] sm:$0xff]
    %v485 = vld [vmem:[%s453 + $0xbc] sm:$0xf]
    %v518 = vunpack.c.l.b16 %v454
    %v519 = vunpack.c.h.b16 %v454
    %v520 = vunpack.c.l.b16 %v455
    %v521 = vunpack.c.l.b16 %v456
    %v522 = vunpack.c.h.b16 %v456
    %v523 = vunpack.c.l.b16 %v457
    %v524 = vunpack.c.l.b16 %v458
    %v525 = vunpack.c.h.b16 %v458
    %v526 = vunpack.c.l.b16 %v459
    %v527 = vunpack.c.l.b16 %v460
    %v528 = vunpack.c.h.b16 %v460
    %v529 = vunpack.c.l.b16 %v461
    %v530 = vunpack.c.l.b16 %v462
    %v531 = vunpack.c.h.b16 %v462
    %v532 = vunpack.c.l.b16 %v463
    %v533 = vunpack.c.l.b16 %v464
    %v534 = vunpack.c.h.b16 %v464
    %v535 = vunpack.c.l.b16 %v465
    %v536 = vunpack.c.l.b16 %v466
    %v537 = vunpack.c.h.b16 %v466
    %v538 = vunpack.c.l.b16 %v467
    %v539 = vunpack.c.l.b16 %v468
    %v540 = vunpack.c.h.b16 %v468
    %v541 = vunpack.c.l.b16 %v469
    %v542 = vunpack.c.l.b16 %v470
    %v543 = vunpack.c.h.b16 %v470
    %v544 = vunpack.c.l.b16 %v471
    %v545 = vunpack.c.l.b16 %v472
    %v546 = vunpack.c.h.b16 %v472
    %v547 = vunpack.c.l.b16 %v473
    %v548 = vunpack.c.l.b16 %v474
    %v549 = vunpack.c.h.b16 %v474
    %v550 = vunpack.c.l.b16 %v475
    %v551 = vunpack.c.l.b16 %v476
    %v552 = vunpack.c.h.b16 %v476
    %v553 = vunpack.c.l.b16 %v477
    %v554 = vunpack.c.l.b16 %v478
    %v555 = vunpack.c.h.b16 %v478
    %v556 = vunpack.c.l.b16 %v479
    %v557 = vunpack.c.l.b16 %v480
    %v558 = vunpack.c.h.b16 %v480
    %v559 = vunpack.c.l.b16 %v481
    %v560 = vunpack.c.l.b16 %v482
    %v561 = vunpack.c.h.b16 %v482
    %v562 = vunpack.c.l.b16 %v483
    %v563 = vunpack.c.l.b16 %v484
    %v564 = vunpack.c.h.b16 %v484
    %v565 = vunpack.c.l.b16 %v485
    %v566 = vpack.c.b16 %v521, %v518
    %v567 = vpack.c.b16 %v522, %v519
    %v568 = vpack.c.b16 %v523, %v520
    %v569 = vpack.c.b16 %v527, %v524
    %v570 = vpack.c.b16 %v528, %v525
    %v571 = vpack.c.b16 %v529, %v526
    %v572 = vpack.c.b16 %v533, %v530
    %v573 = vpack.c.b16 %v534, %v531
    %v574 = vpack.c.b16 %v535, %v532
    %v575 = vpack.c.b16 %v539, %v536
    %v576 = vpack.c.b16 %v540, %v537
    %v577 = vpack.c.b16 %v541, %v538
    %v578 = vpack.c.b16 %v545, %v542
    %v579 = vpack.c.b16 %v546, %v543
    %v580 = vpack.c.b16 %v547, %v544
    %v581 = vpack.c.b16 %v551, %v548
    %v582 = vpack.c.b16 %v552, %v549
    %v583 = vpack.c.b16 %v553, %v550
    %v584 = vpack.c.b16 %v557, %v554
    %v585 = vpack.c.b16 %v558, %v555
    %v586 = vpack.c.b16 %v559, %v556
    %v587 = vpack.c.b16 %v563, %v560
    %v588 = vpack.c.b16 %v564, %v561
    %v589 = vpack.c.b16 %v565, %v562
    %614 = vmatprep.subr.bf16.mxu0 %v567
    %615 = vmatpush1.bf16.msra.mxu0 %v566
    %616 = vmatprep.subr.bf16.mxu0 %v570
    %617 = vmatpush1.bf16.msra.mxu0 %v569
    %618 = vmatprep.subr.bf16.mxu0 %v573
    %619 = vmatpush1.bf16.msra.mxu0 %v572
    %620 = vmatprep.subr.bf16.mxu0 %v576
    %621 = vmatpush1.bf16.msra.mxu0 %v575
    %622 = vmatprep.subr.bf16.mxu0 %v579
    %623 = vmatpush1.bf16.msra.mxu0 %v578
    %624 = vmatprep.subr.bf16.mxu0 %v582
    %625 = vmatpush1.bf16.msra.mxu0 %v581
    %626 = vmatprep.subr.bf16.mxu0 %v585
    %627 = vmatpush1.bf16.msra.mxu0 %v584
    %628 = vmatprep.subr.bf16.mxu0 %v588
    %629 = vmatpush1.bf16.msra.mxu0 %v587
    %630 = vmatprep.subr.bf16.mxu0 0
    %631 = vmatpush1.bf16.msra.mxu0 0
    %632 = vmatprep.subr.bf16.mxu0 0
    %633 = vmatpush1.bf16.msra.mxu0 0
    %634 = vmatprep.subr.bf16.mxu0 0
    %635 = vmatpush1.bf16.msra.mxu0 0
    %636 = vmatprep.subr.bf16.mxu0 0
    %637 = vmatpush1.bf16.msra.mxu0 0
    %638 = vmatprep.subr.bf16.mxu0 0
    %639 = vmatpush1.bf16.msra.mxu0 0
    %640 = vmatprep.subr.bf16.mxu0 0
    %641 = vmatpush1.bf16.msra.mxu0 0
    %642 = vmatprep.subr.bf16.mxu0 0
    %643 = vmatpush1.bf16.msra.mxu0 0
    %644 = vmatprep.subr.bf16.mxu0 0
    %645 = vmatpush1.bf16.msra.mxu0 0
    %646 = vmatprep.mubr.bf16.mxu0 0
    %647 = vmatmul.mubr.bf16.gmra.mrb[0].mxu0 %v452
    %v648 = vpop.f32.mrb[0].mxu0
    %v649 = vadd.f32 0.0, %v648
    %v650 = vpop.f32.mrb[0].mxu0
    %v651 = vadd.f32 0.0, %v650
    %v652 = vpop.f32.mrb[0].mxu0
    %v653 = vadd.f32 0.0, %v652
    %v654 = vpop.f32.mrb[0].mxu0
    %v655 = vadd.f32 0.0, %v654
    %656 = vdwg.mxu0
    %657 = vmatprep.subr.bf16.mxu0 0
    %658 = vmatpush1.bf16.msra.mxu0 %v568
    %659 = vmatprep.subr.bf16.mxu0 0
    %660 = vmatpush1.bf16.msra.mxu0 %v571
    %661 = vmatprep.subr.bf16.mxu0 0
    %662 = vmatpush1.bf16.msra.mxu0 %v574
    %663 = vmatprep.subr.bf16.mxu0 0
    %664 = vmatpush1.bf16.msra.mxu0 %v577
    %665 = vmatprep.subr.bf16.mxu0 0
    %666 = vmatpush1.bf16.msra.mxu0 %v580
    %667 = vmatprep.subr.bf16.mxu0 0
    %668 = vmatpush1.bf16.msra.mxu0 %v583
    %669 = vmatprep.subr.bf16.mxu0 0
    %670 = vmatpush1.bf16.msra.mxu0 %v586
    %671 = vmatprep.subr.bf16.mxu0 0
    %672 = vmatpush1.bf16.msra.mxu0 %v589
    %673 = vmatprep.subr.bf16.mxu0 0
    %674 = vmatpush1.bf16.msra.mxu0 0
    %675 = vmatprep.subr.bf16.mxu0 0
    %676 = vmatpush1.bf16.msra.mxu0 0
    %677 = vmatprep.subr.bf16.mxu0 0
    %678 = vmatpush1.bf16.msra.mxu0 0
    %679 = vmatprep.subr.bf16.mxu0 0
    %680 = vmatpush1.bf16.msra.mxu0 0
    %681 = vmatprep.subr.bf16.mxu0 0
    %682 = vmatpush1.bf16.msra.mxu0 0
    %683 = vmatprep.subr.bf16.mxu0 0
    %684 = vmatpush1.bf16.msra.mxu0 0
    %685 = vmatprep.subr.bf16.mxu0 0
    %686 = vmatpush1.bf16.msra.mxu0 0
    %687 = vmatprep.subr.bf16.mxu0 0
    %688 = vmatpush1.bf16.msra.mxu0 0
    %689 = vmatprep.mubr.bf16.mxu0 0
    %690 = vmatmul.mubr.bf16.gmra.mrb[0].mxu0 %v452
    %v691 = vpop.f32.mrb[0].mxu0
    %v692 = vadd.f32 0.0, %v691
    %v693 = vpop.f32.mrb[0].mxu0
    %v694 = vpop.f32.mrb[0].mxu0
    %v695 = vadd.f32 0.0, %v694
    %v696 = vpop.f32.mrb[0].mxu0
    %697 = vdwg.mxu0
    %v698 = vpack.c.bf16 %v403, %v403
    %v699 = vpack.c.bf16 %v651, %v651
    %v700 = vpack.c.bf16 %v692, %v692
    %vm701 = vcmask 261120
    %v703 = vsel %vm701, %v698, 0
    %v706 = vsel %vm701, %v699, 0
    %708 = vmatprep.subr.bf16.mxu0 0
    %709 = vmatpush1.bf16.xpose.msra.mxu0 %v706
    %710 = vmatprep.subr.bf16.mxu0 0
    %711 = vmatpush1.bf16.xpose.msra.mxu0 0
    %712 = vmatprep.subr.bf16.mxu0 0
    %713 = vmatpush1.bf16.xpose.msra.mxu0 0
    %714 = vmatprep.subr.bf16.mxu0 0
    %715 = vmatpush1.bf16.xpose.msra.mxu0 0
    %716 = vmatprep.subr.bf16.mxu0 0
    %717 = vmatpush1.bf16.xpose.msra.mxu0 0
    %718 = vmatprep.subr.bf16.mxu0 0
    %719 = vmatpush1.bf16.xpose.msra.mxu0 0
    %720 = vmatprep.subr.bf16.mxu0 0
    %721 = vmatpush1.bf16.xpose.msra.mxu0 0
    %722 = vmatprep.subr.bf16.mxu0 0
    %723 = vmatpush1.bf16.xpose.msra.mxu0 0
    %724 = vmatprep.subr.bf16.mxu0 0
    %725 = vmatpush1.bf16.xpose.msra.mxu0 0
    %726 = vmatprep.subr.bf16.mxu0 0
    %727 = vmatpush1.bf16.xpose.msra.mxu0 0
    %728 = vmatprep.subr.bf16.mxu0 0
    %729 = vmatpush1.bf16.xpose.msra.mxu0 0
    %730 = vmatprep.subr.bf16.mxu0 0
    %731 = vmatpush1.bf16.xpose.msra.mxu0 0
    %732 = vmatprep.subr.bf16.mxu0 0
    %733 = vmatpush1.bf16.xpose.msra.mxu0 0
    %734 = vmatprep.subr.bf16.mxu0 0
    %735 = vmatpush1.bf16.xpose.msra.mxu0 0
    %736 = vmatprep.subr.bf16.mxu0 0
    %737 = vmatpush1.bf16.xpose.msra.mxu0 0
    %738 = vmatprep.subr.bf16.mxu0 0
    %739 = vmatpush1.bf16.xpose.msra.mxu0 0
    %740 = vmatprep.mubr.bf16.mxu0 0
    %741 = vmatmul.mubr.bf16.gmra.mrb[0].mxu0 %v703
    %v742 = vpop.f32.mrb[0].mxu0
    %v743 = vadd.f32 0.0, %v742
    %v744 = vpop.f32.mrb[0].mxu0
    %v745 = vpop.f32.mrb[0].mxu0
    %v746 = vpop.f32.mrb[0].mxu0
    %747 = vdwg.mxu0
    %vm748 = vcmask 64512
    %v749 = vsel %vm748, %v743, -inf
    %750 = vmax.xlane.f32.xlu0 %v749
    %v751 = vpop.xlane.xlu0 %750
    %v752 = vsub.f32 %v743, %v751
    %v753 = vmul.f32 %v752, 1.442695
    %v754 = vpow.pop %v753
    %v755 = vsel %vm748, %v754, 0.0
    %756 = vadd.xlane.f32.xlu0 %v755
    %v757 = vpop.xlane.xlu0 %756
    %v758 = vrcp.pop %v757
    %v759 = vmul.f32 %v754, %v758
    %v760 = vpack.c.bf16 %v759, %v759
    %v762 = vsel %vm748, %v760, 0
    %vm764 = vcmask 1043456
    %v766 = vsel %vm764, %v700, 0
    %768 = vmatprep.subr.bf16.mxu0 0
    %769 = vmatpush1.bf16.msra.mxu0 %v766
    %770 = vmatprep.subr.bf16.mxu0 0
    %771 = vmatpush1.bf16.msra.mxu0 0
    %772 = vmatprep.subr.bf16.mxu0 0
    %773 = vmatpush1.bf16.msra.mxu0 0
    %774 = vmatprep.subr.bf16.mxu0 0
    %775 = vmatpush1.bf16.msra.mxu0 0
    %776 = vmatprep.subr.bf16.mxu0 0
    %777 = vmatpush1.bf16.msra.mxu0 0
    %778 = vmatprep.subr.bf16.mxu0 0
    %779 = vmatpush1.bf16.msra.mxu0 0
    %780 = vmatprep.subr.bf16.mxu0 0
    %781 = vmatpush1.bf16.msra.mxu0 0
    %782 = vmatprep.subr.bf16.mxu0 0
    %783 = vmatpush1.bf16.msra.mxu0 0
    %784 = vmatprep.subr.bf16.mxu0 0
    %785 = vmatpush1.bf16.msra.mxu0 0
    %786 = vmatprep.subr.bf16.mxu0 0
    %787 = vmatpush1.bf16.msra.mxu0 0
    %788 = vmatprep.subr.bf16.mxu0 0
    %789 = vmatpush1.bf16.msra.mxu0 0
    %790 = vmatprep.subr.bf16.mxu0 0
    %791 = vmatpush1.bf16.msra.mxu0 0
    %792 = vmatprep.subr.bf16.mxu0 0
    %793 = vmatpush1.bf16.msra.mxu0 0
    %794 = vmatprep.subr.bf16.mxu0 0
    %795 = vmatpush1.bf16.msra.mxu0 0
    %796 = vmatprep.subr.bf16.mxu0 0
    %797 = vmatpush1.bf16.msra.mxu0 0
    %798 = vmatprep.subr.bf16.mxu0 0
    %799 = vmatpush1.bf16.msra.mxu0 0
    %800 = vmatprep.mubr.bf16.mxu0 0
    %801 = vmatmul.mubr.bf16.gmra.mrb[0].mxu0 %v762
    %v802 = vpop.f32.mrb[0].mxu0
    %v803 = vadd.f32 0.0, %v802
    %v804 = vpop.f32.mrb[0].mxu0
    %v805 = vpop.f32.mrb[0].mxu0
    %v806 = vpop.f32.mrb[0].mxu0
    %807 = vdwg.mxu0
    %v808 = vpack.c.bf16 %v803, %v803
    %v809 = vld [vmem:[#allocation8] sm:$0xf]
    %v810 = vld [vmem:[#allocation8 + $0x4] sm:$0xf]
    %v811 = vld [vmem:[#allocation8 + $0x8] sm:$0xf]
    %v812 = vld [vmem:[#allocation8 + $0xc] sm:$0xf]
    %814 = vrot.lane.b32.xlu0 %v698, 96
    %v815 = vpop.permute.xlu0 %814
    %817 = vrot.lane.b32.xlu0 %v699, 96
    %v818 = vpop.permute.xlu0 %817
    %v820 = vsel %vm701, %v815, 0
    %v823 = vsel %vm701, %v818, 0
    %825 = vmatprep.subr.bf16.mxu0 0
    %826 = vmatpush1.bf16.xpose.msra.mxu0 %v823
    %827 = vmatprep.subr.bf16.mxu0 0
    %828 = vmatpush1.bf16.xpose.msra.mxu0 0
    %829 = vmatprep.subr.bf16.mxu0 0
    %830 = vmatpush1.bf16.xpose.msra.mxu0 0
    %831 = vmatprep.subr.bf16.mxu0 0
    %832 = vmatpush1.bf16.xpose.msra.mxu0 0
    %833 = vmatprep.subr.bf16.mxu0 0
    %834 = vmatpush1.bf16.xpose.msra.mxu0 0
    %835 = vmatprep.subr.bf16.mxu0 0
    %836 = vmatpush1.bf16.xpose.msra.mxu0 0
    %837 = vmatprep.subr.bf16.mxu0 0
    %838 = vmatpush1.bf16.xpose.msra.mxu0 0
    %839 = vmatprep.subr.bf16.mxu0 0
    %840 = vmatpush1.bf16.xpose.msra.mxu0 0
    %841 = vmatprep.subr.bf16.mxu0 0
    %842 = vmatpush1.bf16.xpose.msra.mxu0 0
    %843 = vmatprep.subr.bf16.mxu0 0
    %844 = vmatpush1.bf16.xpose.msra.mxu0 0
    %845 = vmatprep.subr.bf16.mxu0 0
    %846 = vmatpush1.bf16.xpose.msra.mxu0 0
    %847 = vmatprep.subr.bf16.mxu0 0
    %848 = vmatpush1.bf16.xpose.msra.mxu0 0
    %849 = vmatprep.subr.bf16.mxu0 0
    %850 = vmatpush1.bf16.xpose.msra.mxu0 0
    %851 = vmatprep.subr.bf16.mxu0 0
    %852 = vmatpush1.bf16.xpose.msra.mxu0 0
    %853 = vmatprep.subr.bf16.mxu0 0
    %854 = vmatpush1.bf16.xpose.msra.mxu0 0
    %855 = vmatprep.subr.bf16.mxu0 0
    %856 = vmatpush1.bf16.xpose.msra.mxu0 0
    %857 = vmatprep.mubr.bf16.mxu0 0
    %858 = vmatmul.mubr.bf16.gmra.mrb[0].mxu0 %v820
    %v859 = vpop.f32.mrb[0].mxu0
    %v860 = vadd.f32 0.0, %v859
    %v861 = vpop.f32.mrb[0].mxu0
    %v862 = vpop.f32.mrb[0].mxu0
    %v863 = vpop.f32.mrb[0].mxu0
    %864 = vdwg.mxu0
    %v865 = vsel %vm748, %v860, -inf
    %866 = vmax.xlane.f32.xlu0 %v865
    %v867 = vpop.xlane.xlu0 %866
    %v868 = vsub.f32 %v860, %v867
    %v869 = vmul.f32 %v868, 1.442695
    %v870 = vpow.pop %v869
    %v871 = vsel %vm748, %v870, 0.0
    %872 = vadd.xlane.f32.xlu0 %v871
    %v873 = vpop.xlane.xlu0 %872
    %v874 = vrcp.pop %v873
    %v875 = vmul.f32 %v870, %v874
    %v876 = vpack.c.bf16 %v875, %v875
    %878 = vrot.lane.b32.xlu0 %v700, 96
    %v879 = vpop.permute.xlu0 %878
    %v881 = vsel %vm748, %v876, 0
    %v884 = vsel %vm764, %v879, 0
    %886 = vmatprep.subr.bf16.mxu0 0
    %887 = vmatpush1.bf16.msra.mxu0 %v884
    %888 = vmatprep.subr.bf16.mxu0 0
    %889 = vmatpush1.bf16.msra.mxu0 0
    %890 = vmatprep.subr.bf16.mxu0 0
    %891 = vmatpush1.bf16.msra.mxu0 0
    %892 = vmatprep.subr.bf16.mxu0 0
    %893 = vmatpush1.bf16.msra.mxu0 0
    %894 = vmatprep.subr.bf16.mxu0 0
    %895 = vmatpush1.bf16.msra.mxu0 0
    %896 = vmatprep.subr.bf16.mxu0 0
    %897 = vmatpush1.bf16.msra.mxu0 0
    %898 = vmatprep.subr.bf16.mxu0 0
    %899 = vmatpush1.bf16.msra.mxu0 0
    %900 = vmatprep.subr.bf16.mxu0 0
    %901 = vmatpush1.bf16.msra.mxu0 0
    %902 = vmatprep.subr.bf16.mxu0 0
    %903 = vmatpush1.bf16.msra.mxu0 0
    %904 = vmatprep.subr.bf16.mxu0 0
    %905 = vmatpush1.bf16.msra.mxu0 0
    %906 = vmatprep.subr.bf16.mxu0 0
    %907 = vmatpush1.bf16.msra.mxu0 0
    %908 = vmatprep.subr.bf16.mxu0 0
    %909 = vmatpush1.bf16.msra.mxu0 0
    %910 = vmatprep.subr.bf16.mxu0 0
    %911 = vmatpush1.bf16.msra.mxu0 0
    %912 = vmatprep.subr.bf16.mxu0 0
    %913 = vmatpush1.bf16.msra.mxu0 0
    %914 = vmatprep.subr.bf16.mxu0 0
    %915 = vmatpush1.bf16.msra.mxu0 0
    %916 = vmatprep.subr.bf16.mxu0 0
    %917 = vmatpush1.bf16.msra.mxu0 0
    %918 = vmatprep.mubr.bf16.mxu0 0
    %919 = vmatmul.mubr.bf16.gmra.mrb[0].mxu0 %v881
    %v920 = vpop.f32.mrb[0].mxu0
    %v921 = vadd.f32 0.0, %v920
    %v922 = vpop.f32.mrb[0].mxu0
    %v923 = vpop.f32.mrb[0].mxu0
    %v924 = vpop.f32.mrb[0].mxu0
    %925 = vdwg.mxu0
    %v926 = vpack.c.bf16 %v921, %v921
    %s927 = scalar_lea.vmem [#allocation8], 16
    %v928 = vld [vmem:[%s927] sm:$0xf]
    %v929 = vld [vmem:[%s927 + $0x4] sm:$0xf]
    %v930 = vld [vmem:[%s927 + $0x8] sm:$0xf]
    %v931 = vld [vmem:[%s927 + $0xc] sm:$0xf]
    %v936 = vunpack.c.l.b16 %v928
    %v937 = vunpack.c.l.b16 %v929
    %v938 = vunpack.c.l.b16 %v930
    %v939 = vunpack.c.l.b16 %v931
    %v940 = vpack.c.b16 %v937, %v936
    %v941 = vpack.c.b16 %v939, %v938
    %v945 = vsel %vm701, %v926, 0
    %947 = vmatprep.subr.bf16.mxu0 0
    %948 = vmatpush1.bf16.msra.mxu0 %v940
    %949 = vmatprep.subr.bf16.mxu0 0
    %950 = vmatpush1.bf16.msra.mxu0 %v941
    %951 = vmatprep.subr.bf16.mxu0 0
    %952 = vmatpush1.bf16.msra.mxu0 0
    %953 = vmatprep.subr.bf16.mxu0 0
    %954 = vmatpush1.bf16.msra.mxu0 0
    %955 = vmatprep.subr.bf16.mxu0 0
    %956 = vmatpush1.bf16.msra.mxu0 0
    %957 = vmatprep.subr.bf16.mxu0 0
    %958 = vmatpush1.bf16.msra.mxu0 0
    %959 = vmatprep.subr.bf16.mxu0 0
    %960 = vmatpush1.bf16.msra.mxu0 0
    %961 = vmatprep.subr.bf16.mxu0 0
    %962 = vmatpush1.bf16.msra.mxu0 0
    %963 = vmatprep.subr.bf16.mxu0 0
    %964 = vmatpush1.bf16.msra.mxu0 0
    %965 = vmatprep.subr.bf16.mxu0 0
    %966 = vmatpush1.bf16.msra.mxu0 0
    %967 = vmatprep.subr.bf16.mxu0 0
    %968 = vmatpush1.bf16.msra.mxu0 0
    %969 = vmatprep.subr.bf16.mxu0 0
    %970 = vmatpush1.bf16.msra.mxu0 0
    %971 = vmatprep.subr.bf16.mxu0 0
    %972 = vmatpush1.bf16.msra.mxu0 0
    %973 = vmatprep.subr.bf16.mxu0 0
    %974 = vmatpush1.bf16.msra.mxu0 0
    %975 = vmatprep.subr.bf16.mxu0 0
    %976 = vmatpush1.bf16.msra.mxu0 0
    %977 = vmatprep.subr.bf16.mxu0 0
    %978 = vmatpush1.bf16.msra.mxu0 0
    %979 = vmatprep.mubr.bf16.mxu0 0
    %980 = vmatmul.mubr.bf16.gmra.mrb[0].mxu0 %v945
    %v981 = vpop.f32.mrb[0].mxu0
    %v982 = vadd.f32 0.0, %v981
    %v983 = vpop.f32.mrb[0].mxu0
    %v984 = vpop.f32.mrb[0].mxu0
    %v985 = vpop.f32.mrb[0].mxu0
    %986 = vdwg.mxu0
    %v991 = vunpack.c.l.b16 %v809
    %v992 = vunpack.c.l.b16 %v810
    %v993 = vunpack.c.l.b16 %v811
    %v994 = vunpack.c.l.b16 %v812
    %v995 = vpack.c.b16 %v992, %v991
    %v996 = vpack.c.b16 %v994, %v993
    %v1000 = vsel %vm701, %v808, 0
    %1002 = vmatprep.subr.bf16.mxu0 0
    %1003 = vmatpush1.bf16.msra.mxu0 %v995
    %1004 = vmatprep.subr.bf16.mxu0 0
    %1005 = vmatpush1.bf16.msra.mxu0 %v996
    %1006 = vmatprep.subr.bf16.mxu0 0
    %1007 = vmatpush1.bf16.msra.mxu0 0
    %1008 = vmatprep.subr.bf16.mxu0 0
    %1009 = vmatpush1.bf16.msra.mxu0 0
    %1010 = vmatprep.subr.bf16.mxu0 0
    %1011 = vmatpush1.bf16.msra.mxu0 0
    %1012 = vmatprep.subr.bf16.mxu0 0
    %1013 = vmatpush1.bf16.msra.mxu0 0
    %1014 = vmatprep.subr.bf16.mxu0 0
    %1015 = vmatpush1.bf16.msra.mxu0 0
    %1016 = vmatprep.subr.bf16.mxu0 0
    %1017 = vmatpush1.bf16.msra.mxu0 0
    %1018 = vmatprep.subr.bf16.mxu0 0
    %1019 = vmatpush1.bf16.msra.mxu0 0
    %1020 = vmatprep.subr.bf16.mxu0 0
    %1021 = vmatpush1.bf16.msra.mxu0 0
    %1022 = vmatprep.subr.bf16.mxu0 0
    %1023 = vmatpush1.bf16.msra.mxu0 0
    %1024 = vmatprep.subr.bf16.mxu0 0
    %1025 = vmatpush1.bf16.msra.mxu0 0
    %1026 = vmatprep.subr.bf16.mxu0 0
    %1027 = vmatpush1.bf16.msra.mxu0 0
    %1028 = vmatprep.subr.bf16.mxu0 0
    %1029 = vmatpush1.bf16.msra.mxu0 0
    %1030 = vmatprep.subr.bf16.mxu0 0
    %1031 = vmatpush1.bf16.msra.mxu0 0
    %1032 = vmatprep.subr.bf16.mxu0 0
    %1033 = vmatpush1.bf16.msra.mxu0 0
    %1034 = vmatprep.mubr.bf16.mxu0 0
    %1035 = vmatmul.mubr.bf16.gmra.mrb[0].mxu0 %v1000
    %v1036 = vpop.f32.mrb[0].mxu0
    %v1037 = vadd.f32 %v982, %v1036
    %v1038 = vpop.f32.mrb[0].mxu0
    %v1039 = vpop.f32.mrb[0].mxu0
    %v1040 = vpop.f32.mrb[0].mxu0
    %1041 = vdwg.mxu0
    %1042 = vrot.lane.b32.xlu0 %v698, 64
    %v1043 = vpop.permute.xlu0 %1042
    %1044 = vrot.lane.b32.xlu0 %v699, 64
    %v1045 = vpop.permute.xlu0 %1044
    %v1047 = vsel %vm701, %v1043, 0
    %v1050 = vsel %vm701, %v1045, 0
    %1052 = vmatprep.subr.bf16.mxu0 0
    %1053 = vmatpush1.bf16.xpose.msra.mxu0 %v1050
    %1054 = vmatprep.subr.bf16.mxu0 0
    %1055 = vmatpush1.bf16.xpose.msra.mxu0 0
    %1056 = vmatprep.subr.bf16.mxu0 0
    %1057 = vmatpush1.bf16.xpose.msra.mxu0 0
    %1058 = vmatprep.subr.bf16.mxu0 0
    %1059 = vmatpush1.bf16.xpose.msra.mxu0 0
    %1060 = vmatprep.subr.bf16.mxu0 0
    %1061 = vmatpush1.bf16.xpose.msra.mxu0 0
    %1062 = vmatprep.subr.bf16.mxu0 0
    %1063 = vmatpush1.bf16.xpose.msra.mxu0 0
    %1064 = vmatprep.subr.bf16.mxu0 0
    %1065 = vmatpush1.bf16.xpose.msra.mxu0 0
    %1066 = vmatprep.subr.bf16.mxu0 0
    %1067 = vmatpush1.bf16.xpose.msra.mxu0 0
    %1068 = vmatprep.subr.bf16.mxu0 0
    %1069 = vmatpush1.bf16.xpose.msra.mxu0 0
    %1070 = vmatprep.subr.bf16.mxu0 0
    %1071 = vmatpush1.bf16.xpose.msra.mxu0 0
    %1072 = vmatprep.subr.bf16.mxu0 0
    %1073 = vmatpush1.bf16.xpose.msra.mxu0 0
    %1074 = vmatprep.subr.bf16.mxu0 0
    %1075 = vmatpush1.bf16.xpose.msra.mxu0 0
    %1076 = vmatprep.subr.bf16.mxu0 0
    %1077 = vmatpush1.bf16.xpose.msra.mxu0 0
    %1078 = vmatprep.subr.bf16.mxu0 0
    %1079 = vmatpush1.bf16.xpose.msra.mxu0 0
    %1080 = vmatprep.subr.bf16.mxu0 0
    %1081 = vmatpush1.bf16.xpose.msra.mxu0 0
    %1082 = vmatprep.subr.bf16.mxu0 0
    %1083 = vmatpush1.bf16.xpose.msra.mxu0 0
    %1084 = vmatprep.mubr.bf16.mxu0 0
    %1085 = vmatmul.mubr.bf16.gmra.mrb[0].mxu0 %v1047
    %v1086 = vpop.f32.mrb[0].mxu0
    %v1087 = vadd.f32 0.0, %v1086
    %v1088 = vpop.f32.mrb[0].mxu0
    %v1089 = vpop.f32.mrb[0].mxu0
    %v1090 = vpop.f32.mrb[0].mxu0
    %1091 = vdwg.mxu0
    %v1092 = vsel %vm748, %v1087, -inf
    %1093 = vmax.xlane.f32.xlu0 %v1092
    %v1094 = vpop.xlane.xlu0 %1093
    %v1095 = vsub.f32 %v1087, %v1094
    %v1096 = vmul.f32 %v1095, 1.442695
    %v1097 = vpow.pop %v1096
    %v1098 = vsel %vm748, %v1097, 0.0
    %1099 = vadd.xlane.f32.xlu0 %v1098
    %v1100 = vpop.xlane.xlu0 %1099
    %v1101 = vrcp.pop %v1100
    %v1102 = vmul.f32 %v1097, %v1101
    %v1103 = vpack.c.bf16 %v1102, %v1102
    %1104 = vrot.lane.b32.xlu0 %v700, 64
    %v1105 = vpop.permute.xlu0 %1104
    %v1107 = vsel %vm748, %v1103, 0
    %v1110 = vsel %vm764, %v1105, 0
    %1112 = vmatprep.subr.bf16.mxu0 0
    %1113 = vmatpush1.bf16.msra.mxu0 %v1110
    %1114 = vmatprep.subr.bf16.mxu0 0
    %1115 = vmatpush1.bf16.msra.mxu0 0
    %1116 = vmatprep.subr.bf16.mxu0 0
    %1117 = vmatpush1.bf16.msra.mxu0 0
    %1118 = vmatprep.subr.bf16.mxu0 0
    %1119 = vmatpush1.bf16.msra.mxu0 0
    %1120 = vmatprep.subr.bf16.mxu0 0
    %1121 = vmatpush1.bf16.msra.mxu0 0
    %1122 = vmatprep.subr.bf16.mxu0 0
    %1123 = vmatpush1.bf16.msra.mxu0 0
    %1124 = vmatprep.subr.bf16.mxu0 0
    %1125 = vmatpush1.bf16.msra.mxu0 0
    %1126 = vmatprep.subr.bf16.mxu0 0
    %1127 = vmatpush1.bf16.msra.mxu0 0
    %1128 = vmatprep.subr.bf16.mxu0 0
    %1129 = vmatpush1.bf16.msra.mxu0 0
    %1130 = vmatprep.subr.bf16.mxu0 0
    %1131 = vmatpush1.bf16.msra.mxu0 0
    %1132 = vmatprep.subr.bf16.mxu0 0
    %1133 = vmatpush1.bf16.msra.mxu0 0
    %1134 = vmatprep.subr.bf16.mxu0 0
    %1135 = vmatpush1.bf16.msra.mxu0 0
    %1136 = vmatprep.subr.bf16.mxu0 0
    %1137 = vmatpush1.bf16.msra.mxu0 0
    %1138 = vmatprep.subr.bf16.mxu0 0
    %1139 = vmatpush1.bf16.msra.mxu0 0
    %1140 = vmatprep.subr.bf16.mxu0 0
    %1141 = vmatpush1.bf16.msra.mxu0 0
    %1142 = vmatprep.subr.bf16.mxu0 0
    %1143 = vmatpush1.bf16.msra.mxu0 0
    %1144 = vmatprep.mubr.bf16.mxu0 0
    %1145 = vmatmul.mubr.bf16.gmra.mrb[0].mxu0 %v1107
    %v1146 = vpop.f32.mrb[0].mxu0
    %v1147 = vadd.f32 0.0, %v1146
    %v1148 = vpop.f32.mrb[0].mxu0
    %v1149 = vpop.f32.mrb[0].mxu0
    %v1150 = vpop.f32.mrb[0].mxu0
    %1151 = vdwg.mxu0
    %v1152 = vpack.c.bf16 %v1147, %v1147
    %s1153 = scalar_lea.vmem [#allocation8], 32
    %v1154 = vld [vmem:[%s1153] sm:$0xf]
    %v1155 = vld [vmem:[%s1153 + $0x4] sm:$0xf]
    %v1156 = vld [vmem:[%s1153 + $0x8] sm:$0xf]
    %v1157 = vld [vmem:[%s1153 + $0xc] sm:$0xf]
    %v1162 = vunpack.c.l.b16 %v1154
    %v1163 = vunpack.c.l.b16 %v1155
    %v1164 = vunpack.c.l.b16 %v1156
    %v1165 = vunpack.c.l.b16 %v1157
    %v1166 = vpack.c.b16 %v1163, %v1162
    %v1167 = vpack.c.b16 %v1165, %v1164
    %v1171 = vsel %vm701, %v1152, 0
    %1173 = vmatprep.subr.bf16.mxu0 0
    %1174 = vmatpush1.bf16.msra.mxu0 %v1166
    %1175 = vmatprep.subr.bf16.mxu0 0
    %1176 = vmatpush1.bf16.msra.mxu0 %v1167
    %1177 = vmatprep.subr.bf16.mxu0 0
    %1178 = vmatpush1.bf16.msra.mxu0 0
    %1179 = vmatprep.subr.bf16.mxu0 0
    %1180 = vmatpush1.bf16.msra.mxu0 0
    %1181 = vmatprep.subr.bf16.mxu0 0
    %1182 = vmatpush1.bf16.msra.mxu0 0
    %1183 = vmatprep.subr.bf16.mxu0 0
    %1184 = vmatpush1.bf16.msra.mxu0 0
    %1185 = vmatprep.subr.bf16.mxu0 0
    %1186 = vmatpush1.bf16.msra.mxu0 0
    %1187 = vmatprep.subr.bf16.mxu0 0
    %1188 = vmatpush1.bf16.msra.mxu0 0
    %1189 = vmatprep.subr.bf16.mxu0 0
    %1190 = vmatpush1.bf16.msra.mxu0 0
    %1191 = vmatprep.subr.bf16.mxu0 0
    %1192 = vmatpush1.bf16.msra.mxu0 0
    %1193 = vmatprep.subr.bf16.mxu0 0
    %1194 = vmatpush1.bf16.msra.mxu0 0
    %1195 = vmatprep.subr.bf16.mxu0 0
    %1196 = vmatpush1.bf16.msra.mxu0 0
    %1197 = vmatprep.subr.bf16.mxu0 0
    %1198 = vmatpush1.bf16.msra.mxu0 0
    %1199 = vmatprep.subr.bf16.mxu0 0
    %1200 = vmatpush1.bf16.msra.mxu0 0
    %1201 = vmatprep.subr.bf16.mxu0 0
    %1202 = vmatpush1.bf16.msra.mxu0 0
    %1203 = vmatprep.subr.bf16.mxu0 0
    %1204 = vmatpush1.bf16.msra.mxu0 0
    %1205 = vmatprep.mubr.bf16.mxu0 0
    %1206 = vmatmul.mubr.bf16.gmra.mrb[0].mxu0 %v1171
    %v1207 = vpop.f32.mrb[0].mxu0
    %v1208 = vadd.f32 0.0, %v1207
    %v1209 = vpop.f32.mrb[0].mxu0
    %v1210 = vpop.f32.mrb[0].mxu0
    %v1211 = vpop.f32.mrb[0].mxu0
    %1212 = vdwg.mxu0
    %v1213 = vadd.f32 %v1037, %v1208
    %1214 = vrot.lane.b32.xlu0 %v698, 32
    %v1215 = vpop.permute.xlu0 %1214
    %1216 = vrot.lane.b32.xlu0 %v699, 32
    %v1217 = vpop.permute.xlu0 %1216
    %v1219 = vsel %vm701, %v1215, 0
    %v1222 = vsel %vm701, %v1217, 0
    %1224 = vmatprep.subr.bf16.mxu0 0
    %1225 = vmatpush1.bf16.xpose.msra.mxu0 %v1222
    %1226 = vmatprep.subr.bf16.mxu0 0
    %1227 = vmatpush1.bf16.xpose.msra.mxu0 0
    %1228 = vmatprep.subr.bf16.mxu0 0
    %1229 = vmatpush1.bf16.xpose.msra.mxu0 0
    %1230 = vmatprep.subr.bf16.mxu0 0
    %1231 = vmatpush1.bf16.xpose.msra.mxu0 0
    %1232 = vmatprep.subr.bf16.mxu0 0
    %1233 = vmatpush1.bf16.xpose.msra.mxu0 0
    %1234 = vmatprep.subr.bf16.mxu0 0
    %1235 = vmatpush1.bf16.xpose.msra.mxu0 0
    %1236 = vmatprep.subr.bf16.mxu0 0
    %1237 = vmatpush1.bf16.xpose.msra.mxu0 0
    %1238 = vmatprep.subr.bf16.mxu0 0
    %1239 = vmatpush1.bf16.xpose.msra.mxu0 0
    %1240 = vmatprep.subr.bf16.mxu0 0
    %1241 = vmatpush1.bf16.xpose.msra.mxu0 0
    %1242 = vmatprep.subr.bf16.mxu0 0
    %1243 = vmatpush1.bf16.xpose.msra.mxu0 0
    %1244 = vmatprep.subr.bf16.mxu0 0
    %1245 = vmatpush1.bf16.xpose.msra.mxu0 0
    %1246 = vmatprep.subr.bf16.mxu0 0
    %1247 = vmatpush1.bf16.xpose.msra.mxu0 0
    %1248 = vmatprep.subr.bf16.mxu0 0
    %1249 = vmatpush1.bf16.xpose.msra.mxu0 0
    %1250 = vmatprep.subr.bf16.mxu0 0
    %1251 = vmatpush1.bf16.xpose.msra.mxu0 0
    %1252 = vmatprep.subr.bf16.mxu0 0
    %1253 = vmatpush1.bf16.xpose.msra.mxu0 0
    %1254 = vmatprep.subr.bf16.mxu0 0
    %1255 = vmatpush1.bf16.xpose.msra.mxu0 0
    %1256 = vmatprep.mubr.bf16.mxu0 0
    %1257 = vmatmul.mubr.bf16.gmra.mrb[0].mxu0 %v1219
    %v1258 = vpop.f32.mrb[0].mxu0
    %v1259 = vadd.f32 0.0, %v1258
    %v1260 = vpop.f32.mrb[0].mxu0
    %v1261 = vpop.f32.mrb[0].mxu0
    %v1262 = vpop.f32.mrb[0].mxu0
    %1263 = vdwg.mxu0
    %v1264 = vsel %vm748, %v1259, -inf
    %1265 = vmax.xlane.f32.xlu0 %v1264
    %v1266 = vpop.xlane.xlu0 %1265
    %v1267 = vsub.f32 %v1259, %v1266
    %v1268 = vmul.f32 %v1267, 1.442695
    %v1269 = vpow.pop %v1268
    %v1270 = vsel %vm748, %v1269, 0.0
    %1271 = vadd.xlane.f32.xlu0 %v1270
    %v1272 = vpop.xlane.xlu0 %1271
    %v1273 = vrcp.pop %v1272
    %v1274 = vmul.f32 %v1269, %v1273
    %v1275 = vpack.c.bf16 %v1274, %v1274
    %1276 = vrot.lane.b32.xlu0 %v700, 32
    %v1277 = vpop.permute.xlu0 %1276
    %v1279 = vsel %vm748, %v1275, 0
    %v1282 = vsel %vm764, %v1277, 0
    %1284 = vmatprep.subr.bf16.mxu0 0
    %1285 = vmatpush1.bf16.msra.mxu0 %v1282
    %1286 = vmatprep.subr.bf16.mxu0 0
    %1287 = vmatpush1.bf16.msra.mxu0 0
    %1288 = vmatprep.subr.bf16.mxu0 0
    %1289 = vmatpush1.bf16.msra.mxu0 0
    %1290 = vmatprep.subr.bf16.mxu0 0
    %1291 = vmatpush1.bf16.msra.mxu0 0
    %1292 = vmatprep.subr.bf16.mxu0 0
    %1293 = vmatpush1.bf16.msra.mxu0 0
    %1294 = vmatprep.subr.bf16.mxu0 0
    %1295 = vmatpush1.bf16.msra.mxu0 0
    %1296 = vmatprep.subr.bf16.mxu0 0
    %1297 = vmatpush1.bf16.msra.mxu0 0
    %1298 = vmatprep.subr.bf16.mxu0 0
    %1299 = vmatpush1.bf16.msra.mxu0 0
    %1300 = vmatprep.subr.bf16.mxu0 0
    %1301 = vmatpush1.bf16.msra.mxu0 0
    %1302 = vmatprep.subr.bf16.mxu0 0
    %1303 = vmatpush1.bf16.msra.mxu0 0
    %1304 = vmatprep.subr.bf16.mxu0 0
    %1305 = vmatpush1.bf16.msra.mxu0 0
    %1306 = vmatprep.subr.bf16.mxu0 0
    %1307 = vmatpush1.bf16.msra.mxu0 0
    %1308 = vmatprep.subr.bf16.mxu0 0
    %1309 = vmatpush1.bf16.msra.mxu0 0
    %1310 = vmatprep.subr.bf16.mxu0 0
    %1311 = vmatpush1.bf16.msra.mxu0 0
    %1312 = vmatprep.subr.bf16.mxu0 0
    %1313 = vmatpush1.bf16.msra.mxu0 0
    %1314 = vmatprep.subr.bf16.mxu0 0
    %1315 = vmatpush1.bf16.msra.mxu0 0
    %1316 = vmatprep.mubr.bf16.mxu0 0
    %1317 = vmatmul.mubr.bf16.gmra.mrb[0].mxu0 %v1279
    %v1318 = vpop.f32.mrb[0].mxu0
    %v1319 = vadd.f32 0.0, %v1318
    %v1320 = vpop.f32.mrb[0].mxu0
    %v1321 = vpop.f32.mrb[0].mxu0
    %v1322 = vpop.f32.mrb[0].mxu0
    %1323 = vdwg.mxu0
    %v1324 = vpack.c.bf16 %v1319, %v1319
    %s1325 = scalar_lea.vmem [#allocation8], 48
    %v1326 = vld [vmem:[%s1325] sm:$0xf]
    %v1327 = vld [vmem:[%s1325 + $0x4] sm:$0xf]
    %v1328 = vld [vmem:[%s1325 + $0x8] sm:$0xf]
    %v1329 = vld [vmem:[%s1325 + $0xc] sm:$0xf]
    %v1334 = vunpack.c.l.b16 %v1326
    %v1335 = vunpack.c.l.b16 %v1327
    %v1336 = vunpack.c.l.b16 %v1328
    %v1337 = vunpack.c.l.b16 %v1329
    %v1338 = vpack.c.b16 %v1335, %v1334
    %v1339 = vpack.c.b16 %v1337, %v1336
    %v1343 = vsel %vm701, %v1324, 0
    %1345 = vmatprep.subr.bf16.mxu0 0
    %1346 = vmatpush1.bf16.msra.mxu0 %v1338
    %1347 = vmatprep.subr.bf16.mxu0 0
    %1348 = vmatpush1.bf16.msra.mxu0 %v1339
    %1349 = vmatprep.subr.bf16.mxu0 0
    %1350 = vmatpush1.bf16.msra.mxu0 0
    %1351 = vmatprep.subr.bf16.mxu0 0
    %1352 = vmatpush1.bf16.msra.mxu0 0
    %1353 = vmatprep.subr.bf16.mxu0 0
    %1354 = vmatpush1.bf16.msra.mxu0 0
    %1355 = vmatprep.subr.bf16.mxu0 0
    %1356 = vmatpush1.bf16.msra.mxu0 0
    %1357 = vmatprep.subr.bf16.mxu0 0
    %1358 = vmatpush1.bf16.msra.mxu0 0
    %1359 = vmatprep.subr.bf16.mxu0 0
    %1360 = vmatpush1.bf16.msra.mxu0 0
    %1361 = vmatprep.subr.bf16.mxu0 0
    %1362 = vmatpush1.bf16.msra.mxu0 0
    %1363 = vmatprep.subr.bf16.mxu0 0
    %1364 = vmatpush1.bf16.msra.mxu0 0
    %1365 = vmatprep.subr.bf16.mxu0 0
    %1366 = vmatpush1.bf16.msra.mxu0 0
    %1367 = vmatprep.subr.bf16.mxu0 0
    %1368 = vmatpush1.bf16.msra.mxu0 0
    %1369 = vmatprep.subr.bf16.mxu0 0
    %1370 = vmatpush1.bf16.msra.mxu0 0
    %1371 = vmatprep.subr.bf16.mxu0 0
    %1372 = vmatpush1.bf16.msra.mxu0 0
    %1373 = vmatprep.subr.bf16.mxu0 0
    %1374 = vmatpush1.bf16.msra.mxu0 0
    %1375 = vmatprep.subr.bf16.mxu0 0
    %1376 = vmatpush1.bf16.msra.mxu0 0
    %1377 = vmatprep.mubr.bf16.mxu0 0
    %1378 = vmatmul.mubr.bf16.gmra.mrb[0].mxu0 %v1343
    %v1379 = vpop.f32.mrb[0].mxu0
    %v1380 = vadd.f32 0.0, %v1379
    %v1381 = vpop.f32.mrb[0].mxu0
    %v1382 = vpop.f32.mrb[0].mxu0
    %v1383 = vpop.f32.mrb[0].mxu0
    %1384 = vdwg.mxu0
    %v1385 = vadd.f32 %v1213, %v1380
    %v1386 = vpack.c.bf16 %v407, %v407
    %v1387 = vpack.c.bf16 %v655, %v655
    %v1388 = vpack.c.bf16 %v695, %v695
    %v1390 = vsel %vm701, %v1386, 0
    %v1393 = vsel %vm701, %v1387, 0
    %1395 = vmatprep.subr.bf16.mxu0 0
    %1396 = vmatpush1.bf16.xpose.msra.mxu0 %v1393
    %1397 = vmatprep.subr.bf16.mxu0 0
    %1398 = vmatpush1.bf16.xpose.msra.mxu0 0
    %1399 = vmatprep.subr.bf16.mxu0 0
    %1400 = vmatpush1.bf16.xpose.msra.mxu0 0
    %1401 = vmatprep.subr.bf16.mxu0 0
    %1402 = vmatpush1.bf16.xpose.msra.mxu0 0
    %1403 = vmatprep.subr.bf16.mxu0 0
    %1404 = vmatpush1.bf16.xpose.msra.mxu0 0
    %1405 = vmatprep.subr.bf16.mxu0 0
    %1406 = vmatpush1.bf16.xpose.msra.mxu0 0
    %1407 = vmatprep.subr.bf16.mxu0 0
    %1408 = vmatpush1.bf16.xpose.msra.mxu0 0
    %1409 = vmatprep.subr.bf16.mxu0 0
    %1410 = vmatpush1.bf16.xpose.msra.mxu0 0
    %1411 = vmatprep.subr.bf16.mxu0 0
    %1412 = vmatpush1.bf16.xpose.msra.mxu0 0
    %1413 = vmatprep.subr.bf16.mxu0 0
    %1414 = vmatpush1.bf16.xpose.msra.mxu0 0
    %1415 = vmatprep.subr.bf16.mxu0 0
    %1416 = vmatpush1.bf16.xpose.msra.mxu0 0
    %1417 = vmatprep.subr.bf16.mxu0 0
    %1418 = vmatpush1.bf16.xpose.msra.mxu0 0
    %1419 = vmatprep.subr.bf16.mxu0 0
    %1420 = vmatpush1.bf16.xpose.msra.mxu0 0
    %1421 = vmatprep.subr.bf16.mxu0 0
    %1422 = vmatpush1.bf16.xpose.msra.mxu0 0
    %1423 = vmatprep.subr.bf16.mxu0 0
    %1424 = vmatpush1.bf16.xpose.msra.mxu0 0
    %1425 = vmatprep.subr.bf16.mxu0 0
    %1426 = vmatpush1.bf16.xpose.msra.mxu0 0
    %1427 = vmatprep.mubr.bf16.mxu0 0
    %1428 = vmatmul.mubr.bf16.gmra.mrb[0].mxu0 %v1390
    %v1429 = vpop.f32.mrb[0].mxu0
    %v1430 = vadd.f32 0.0, %v1429
    %v1431 = vpop.f32.mrb[0].mxu0
    %v1432 = vpop.f32.mrb[0].mxu0
    %v1433 = vpop.f32.mrb[0].mxu0
    %1434 = vdwg.mxu0
    %v1435 = vsel %vm748, %v1430, -inf
    %1436 = vmax.xlane.f32.xlu0 %v1435
    %v1437 = vpop.xlane.xlu0 %1436
    %v1438 = vsub.f32 %v1430, %v1437
    %v1439 = vmul.f32 %v1438, 1.442695
    %v1440 = vpow.pop %v1439
    %v1441 = vsel %vm748, %v1440, 0.0
    %1442 = vadd.xlane.f32.xlu0 %v1441
    %v1443 = vpop.xlane.xlu0 %1442
    %v1444 = vrcp.pop %v1443
    %v1445 = vmul.f32 %v1440, %v1444
    %v1446 = vpack.c.bf16 %v1445, %v1445
    %v1448 = vsel %vm748, %v1446, 0
    %v1451 = vsel %vm764, %v1388, 0
    %1453 = vmatprep.subr.bf16.mxu0 0
    %1454 = vmatpush1.bf16.msra.mxu0 %v1451
    %1455 = vmatprep.subr.bf16.mxu0 0
    %1456 = vmatpush1.bf16.msra.mxu0 0
    %1457 = vmatprep.subr.bf16.mxu0 0
    %1458 = vmatpush1.bf16.msra.mxu0 0
    %1459 = vmatprep.subr.bf16.mxu0 0
    %1460 = vmatpush1.bf16.msra.mxu0 0
    %1461 = vmatprep.subr.bf16.mxu0 0
    %1462 = vmatpush1.bf16.msra.mxu0 0
    %1463 = vmatprep.subr.bf16.mxu0 0
    %1464 = vmatpush1.bf16.msra.mxu0 0
    %1465 = vmatprep.subr.bf16.mxu0 0
    %1466 = vmatpush1.bf16.msra.mxu0 0
    %1467 = vmatprep.subr.bf16.mxu0 0
    %1468 = vmatpush1.bf16.msra.mxu0 0
    %1469 = vmatprep.subr.bf16.mxu0 0
    %1470 = vmatpush1.bf16.msra.mxu0 0
    %1471 = vmatprep.subr.bf16.mxu0 0
    %1472 = vmatpush1.bf16.msra.mxu0 0
    %1473 = vmatprep.subr.bf16.mxu0 0
    %1474 = vmatpush1.bf16.msra.mxu0 0
    %1475 = vmatprep.subr.bf16.mxu0 0
    %1476 = vmatpush1.bf16.msra.mxu0 0
    %1477 = vmatprep.subr.bf16.mxu0 0
    %1478 = vmatpush1.bf16.msra.mxu0 0
    %1479 = vmatprep.subr.bf16.mxu0 0
    %1480 = vmatpush1.bf16.msra.mxu0 0
    %1481 = vmatprep.subr.bf16.mxu0 0
    %1482 = vmatpush1.bf16.msra.mxu0 0
    %1483 = vmatprep.subr.bf16.mxu0 0
    %1484 = vmatpush1.bf16.msra.mxu0 0
    %1485 = vmatprep.mubr.bf16.mxu0 0
    %1486 = vmatmul.mubr.bf16.gmra.mrb[0].mxu0 %v1448
    %v1487 = vpop.f32.mrb[0].mxu0
    %v1488 = vadd.f32 0.0, %v1487
    %v1489 = vpop.f32.mrb[0].mxu0
    %v1490 = vpop.f32.mrb[0].mxu0
    %v1491 = vpop.f32.mrb[0].mxu0
    %1492 = vdwg.mxu0
    %v1493 = vpack.c.bf16 %v1488, %v1488
    %v1494 = vld [vmem:[#allocation8] sm:$0xf]
    %v1495 = vld [vmem:[#allocation8 + $0x4] sm:$0xf]
    %v1496 = vld [vmem:[#allocation8 + $0x8] sm:$0xf]
    %v1497 = vld [vmem:[#allocation8 + $0xc] sm:$0xf]
    %1499 = vrot.lane.b32.xlu0 %v1386, 96
    %v1500 = vpop.permute.xlu0 %1499
    %1502 = vrot.lane.b32.xlu0 %v1387, 96
    %v1503 = vpop.permute.xlu0 %1502
    %v1505 = vsel %vm701, %v1500, 0
    %v1508 = vsel %vm701, %v1503, 0
    %1510 = vmatprep.subr.bf16.mxu0 0
    %1511 = vmatpush1.bf16.xpose.msra.mxu0 %v1508
    %1512 = vmatprep.subr.bf16.mxu0 0
    %1513 = vmatpush1.bf16.xpose.msra.mxu0 0
    %1514 = vmatprep.subr.bf16.mxu0 0
    %1515 = vmatpush1.bf16.xpose.msra.mxu0 0
    %1516 = vmatprep.subr.bf16.mxu0 0
    %1517 = vmatpush1.bf16.xpose.msra.mxu0 0
    %1518 = vmatprep.subr.bf16.mxu0 0
    %1519 = vmatpush1.bf16.xpose.msra.mxu0 0
    %1520 = vmatprep.subr.bf16.mxu0 0
    %1521 = vmatpush1.bf16.xpose.msra.mxu0 0
    %1522 = vmatprep.subr.bf16.mxu0 0
    %1523 = vmatpush1.bf16.xpose.msra.mxu0 0
    %1524 = vmatprep.subr.bf16.mxu0 0
    %1525 = vmatpush1.bf16.xpose.msra.mxu0 0
    %1526 = vmatprep.subr.bf16.mxu0 0
    %1527 = vmatpush1.bf16.xpose.msra.mxu0 0
    %1528 = vmatprep.subr.bf16.mxu0 0
    %1529 = vmatpush1.bf16.xpose.msra.mxu0 0
    %1530 = vmatprep.subr.bf16.mxu0 0
    %1531 = vmatpush1.bf16.xpose.msra.mxu0 0
    %1532 = vmatprep.subr.bf16.mxu0 0
    %1533 = vmatpush1.bf16.xpose.msra.mxu0 0
    %1534 = vmatprep.subr.bf16.mxu0 0
    %1535 = vmatpush1.bf16.xpose.msra.mxu0 0
    %1536 = vmatprep.subr.bf16.mxu0 0
    %1537 = vmatpush1.bf16.xpose.msra.mxu0 0
    %1538 = vmatprep.subr.bf16.mxu0 0
    %1539 = vmatpush1.bf16.xpose.msra.mxu0 0
    %1540 = vmatprep.subr.bf16.mxu0 0
    %1541 = vmatpush1.bf16.xpose.msra.mxu0 0
    %1542 = vmatprep.mubr.bf16.mxu0 0
    %1543 = vmatmul.mubr.bf16.gmra.mrb[0].mxu0 %v1505
    %v1544 = vpop.f32.mrb[0].mxu0
    %v1545 = vadd.f32 0.0, %v1544
    %v1546 = vpop.f32.mrb[0].mxu0
    %v1547 = vpop.f32.mrb[0].mxu0
    %v1548 = vpop.f32.mrb[0].mxu0
    %1549 = vdwg.mxu0
    %v1550 = vsel %vm748, %v1545, -inf
    %1551 = vmax.xlane.f32.xlu0 %v1550
    %v1552 = vpop.xlane.xlu0 %1551
    %v1553 = vsub.f32 %v1545, %v1552
    %v1554 = vmul.f32 %v1553, 1.442695
    %v1555 = vpow.pop %v1554
    %v1556 = vsel %vm748, %v1555, 0.0
    %1557 = vadd.xlane.f32.xlu0 %v1556
    %v1558 = vpop.xlane.xlu0 %1557
    %v1559 = vrcp.pop %v1558
    %v1560 = vmul.f32 %v1555, %v1559
    %v1561 = vpack.c.bf16 %v1560, %v1560
    %1563 = vrot.lane.b32.xlu0 %v1388, 96
    %v1564 = vpop.permute.xlu0 %1563
    %v1566 = vsel %vm748, %v1561, 0
    %v1569 = vsel %vm764, %v1564, 0
    %1571 = vmatprep.subr.bf16.mxu0 0
    %1572 = vmatpush1.bf16.msra.mxu0 %v1569
    %1573 = vmatprep.subr.bf16.mxu0 0
    %1574 = vmatpush1.bf16.msra.mxu0 0
    %1575 = vmatprep.subr.bf16.mxu0 0
    %1576 = vmatpush1.bf16.msra.mxu0 0
    %1577 = vmatprep.subr.bf16.mxu0 0
    %1578 = vmatpush1.bf16.msra.mxu0 0
    %1579 = vmatprep.subr.bf16.mxu0 0
    %1580 = vmatpush1.bf16.msra.mxu0 0
    %1581 = vmatprep.subr.bf16.mxu0 0
    %1582 = vmatpush1.bf16.msra.mxu0 0
    %1583 = vmatprep.subr.bf16.mxu0 0
    %1584 = vmatpush1.bf16.msra.mxu0 0
    %1585 = vmatprep.subr.bf16.mxu0 0
    %1586 = vmatpush1.bf16.msra.mxu0 0
    %1587 = vmatprep.subr.bf16.mxu0 0
    %1588 = vmatpush1.bf16.msra.mxu0 0
    %1589 = vmatprep.subr.bf16.mxu0 0
    %1590 = vmatpush1.bf16.msra.mxu0 0
    %1591 = vmatprep.subr.bf16.mxu0 0
    %1592 = vmatpush1.bf16.msra.mxu0 0
    %1593 = vmatprep.subr.bf16.mxu0 0
    %1594 = vmatpush1.bf16.msra.mxu0 0
    %1595 = vmatprep.subr.bf16.mxu0 0
    %1596 = vmatpush1.bf16.msra.mxu0 0
    %1597 = vmatprep.subr.bf16.mxu0 0
    %1598 = vmatpush1.bf16.msra.mxu0 0
    %1599 = vmatprep.subr.bf16.mxu0 0
    %1600 = vmatpush1.bf16.msra.mxu0 0
    %1601 = vmatprep.subr.bf16.mxu0 0
    %1602 = vmatpush1.bf16.msra.mxu0 0
    %1603 = vmatprep.mubr.bf16.mxu0 0
    %1604 = vmatmul.mubr.bf16.gmra.mrb[0].mxu0 %v1566
    %v1605 = vpop.f32.mrb[0].mxu0
    %v1606 = vadd.f32 0.0, %v1605
    %v1607 = vpop.f32.mrb[0].mxu0
    %v1608 = vpop.f32.mrb[0].mxu0
    %v1609 = vpop.f32.mrb[0].mxu0
    %1610 = vdwg.mxu0
    %v1611 = vpack.c.bf16 %v1606, %v1606
    %v1612 = vld [vmem:[%s927] sm:$0xf]
    %v1613 = vld [vmem:[%s927 + $0x4] sm:$0xf]
    %v1614 = vld [vmem:[%s927 + $0x8] sm:$0xf]
    %v1615 = vld [vmem:[%s927 + $0xc] sm:$0xf]
    %v1620 = vunpack.c.l.b16 %v1612
    %v1621 = vunpack.c.l.b16 %v1613
    %v1622 = vunpack.c.l.b16 %v1614
    %v1623 = vunpack.c.l.b16 %v1615
    %v1624 = vpack.c.b16 %v1621, %v1620
    %v1625 = vpack.c.b16 %v1623, %v1622
    %v1629 = vsel %vm701, %v1611, 0
    %1631 = vmatprep.subr.bf16.mxu0 0
    %1632 = vmatpush1.bf16.msra.mxu0 %v1624
    %1633 = vmatprep.subr.bf16.mxu0 0
    %1634 = vmatpush1.bf16.msra.mxu0 %v1625
    %1635 = vmatprep.subr.bf16.mxu0 0
    %1636 = vmatpush1.bf16.msra.mxu0 0
    %1637 = vmatprep.subr.bf16.mxu0 0
    %1638 = vmatpush1.bf16.msra.mxu0 0
    %1639 = vmatprep.subr.bf16.mxu0 0
    %1640 = vmatpush1.bf16.msra.mxu0 0
    %1641 = vmatprep.subr.bf16.mxu0 0
    %1642 = vmatpush1.bf16.msra.mxu0 0
    %1643 = vmatprep.subr.bf16.mxu0 0
    %1644 = vmatpush1.bf16.msra.mxu0 0
    %1645 = vmatprep.subr.bf16.mxu0 0
    %1646 = vmatpush1.bf16.msra.mxu0 0
    %1647 = vmatprep.subr.bf16.mxu0 0
    %1648 = vmatpush1.bf16.msra.mxu0 0
    %1649 = vmatprep.subr.bf16.mxu0 0
    %1650 = vmatpush1.bf16.msra.mxu0 0
    %1651 = vmatprep.subr.bf16.mxu0 0
    %1652 = vmatpush1.bf16.msra.mxu0 0
    %1653 = vmatprep.subr.bf16.mxu0 0
    %1654 = vmatpush1.bf16.msra.mxu0 0
    %1655 = vmatprep.subr.bf16.mxu0 0
    %1656 = vmatpush1.bf16.msra.mxu0 0
    %1657 = vmatprep.subr.bf16.mxu0 0
    %1658 = vmatpush1.bf16.msra.mxu0 0
    %1659 = vmatprep.subr.bf16.mxu0 0
    %1660 = vmatpush1.bf16.msra.mxu0 0
    %1661 = vmatprep.subr.bf16.mxu0 0
    %1662 = vmatpush1.bf16.msra.mxu0 0
    %1663 = vmatprep.mubr.bf16.mxu0 0
    %1664 = vmatmul.mubr.bf16.gmra.mrb[0].mxu0 %v1629
    %v1665 = vpop.f32.mrb[0].mxu0
    %v1666 = vadd.f32 0.0, %v1665
    %v1667 = vpop.f32.mrb[0].mxu0
    %v1668 = vpop.f32.mrb[0].mxu0
    %v1669 = vpop.f32.mrb[0].mxu0
    %1670 = vdwg.mxu0
    %v1675 = vunpack.c.l.b16 %v1494
    %v1676 = vunpack.c.l.b16 %v1495
    %v1677 = vunpack.c.l.b16 %v1496
    %v1678 = vunpack.c.l.b16 %v1497
    %v1679 = vpack.c.b16 %v1676, %v1675
    %v1680 = vpack.c.b16 %v1678, %v1677
    %v1684 = vsel %vm701, %v1493, 0
    %1686 = vmatprep.subr.bf16.mxu0 0
    %1687 = vmatpush1.bf16.msra.mxu0 %v1679
    %1688 = vmatprep.subr.bf16.mxu0 0
    %1689 = vmatpush1.bf16.msra.mxu0 %v1680
    %1690 = vmatprep.subr.bf16.mxu0 0
    %1691 = vmatpush1.bf16.msra.mxu0 0
    %1692 = vmatprep.subr.bf16.mxu0 0
    %1693 = vmatpush1.bf16.msra.mxu0 0
    %1694 = vmatprep.subr.bf16.mxu0 0
    %1695 = vmatpush1.bf16.msra.mxu0 0
    %1696 = vmatprep.subr.bf16.mxu0 0
    %1697 = vmatpush1.bf16.msra.mxu0 0
    %1698 = vmatprep.subr.bf16.mxu0 0
    %1699 = vmatpush1.bf16.msra.mxu0 0
    %1700 = vmatprep.subr.bf16.mxu0 0
    %1701 = vmatpush1.bf16.msra.mxu0 0
    %1702 = vmatprep.subr.bf16.mxu0 0
    %1703 = vmatpush1.bf16.msra.mxu0 0
    %1704 = vmatprep.subr.bf16.mxu0 0
    %1705 = vmatpush1.bf16.msra.mxu0 0
    %1706 = vmatprep.subr.bf16.mxu0 0
    %1707 = vmatpush1.bf16.msra.mxu0 0
    %1708 = vmatprep.subr.bf16.mxu0 0
    %1709 = vmatpush1.bf16.msra.mxu0 0
    %1710 = vmatprep.subr.bf16.mxu0 0
    %1711 = vmatpush1.bf16.msra.mxu0 0
    %1712 = vmatprep.subr.bf16.mxu0 0
    %1713 = vmatpush1.bf16.msra.mxu0 0
    %1714 = vmatprep.subr.bf16.mxu0 0
    %1715 = vmatpush1.bf16.msra.mxu0 0
    %1716 = vmatprep.subr.bf16.mxu0 0
    %1717 = vmatpush1.bf16.msra.mxu0 0
    %1718 = vmatprep.mubr.bf16.mxu0 0
    %1719 = vmatmul.mubr.bf16.gmra.mrb[0].mxu0 %v1684
    %v1720 = vpop.f32.mrb[0].mxu0
    %v1721 = vadd.f32 %v1666, %v1720
    %v1722 = vpop.f32.mrb[0].mxu0
    %v1723 = vpop.f32.mrb[0].mxu0
    %v1724 = vpop.f32.mrb[0].mxu0
    %1725 = vdwg.mxu0
    %1726 = vrot.lane.b32.xlu0 %v1386, 64
    %v1727 = vpop.permute.xlu0 %1726
    %1728 = vrot.lane.b32.xlu0 %v1387, 64
    %v1729 = vpop.permute.xlu0 %1728
    %v1731 = vsel %vm701, %v1727, 0
    %v1734 = vsel %vm701, %v1729, 0
    %1736 = vmatprep.subr.bf16.mxu0 0
    %1737 = vmatpush1.bf16.xpose.msra.mxu0 %v1734
    %1738 = vmatprep.subr.bf16.mxu0 0
    %1739 = vmatpush1.bf16.xpose.msra.mxu0 0
    %1740 = vmatprep.subr.bf16.mxu0 0
    %1741 = vmatpush1.bf16.xpose.msra.mxu0 0
    %1742 = vmatprep.subr.bf16.mxu0 0
    %1743 = vmatpush1.bf16.xpose.msra.mxu0 0
    %1744 = vmatprep.subr.bf16.mxu0 0
    %1745 = vmatpush1.bf16.xpose.msra.mxu0 0
    %1746 = vmatprep.subr.bf16.mxu0 0
    %1747 = vmatpush1.bf16.xpose.msra.mxu0 0
    %1748 = vmatprep.subr.bf16.mxu0 0
    %1749 = vmatpush1.bf16.xpose.msra.mxu0 0
    %1750 = vmatprep.subr.bf16.mxu0 0
    %1751 = vmatpush1.bf16.xpose.msra.mxu0 0
    %1752 = vmatprep.subr.bf16.mxu0 0
    %1753 = vmatpush1.bf16.xpose.msra.mxu0 0
    %1754 = vmatprep.subr.bf16.mxu0 0
    %1755 = vmatpush1.bf16.xpose.msra.mxu0 0
    %1756 = vmatprep.subr.bf16.mxu0 0
    %1757 = vmatpush1.bf16.xpose.msra.mxu0 0
    %1758 = vmatprep.subr.bf16.mxu0 0
    %1759 = vmatpush1.bf16.xpose.msra.mxu0 0
    %1760 = vmatprep.subr.bf16.mxu0 0
    %1761 = vmatpush1.bf16.xpose.msra.mxu0 0
    %1762 = vmatprep.subr.bf16.mxu0 0
    %1763 = vmatpush1.bf16.xpose.msra.mxu0 0
    %1764 = vmatprep.subr.bf16.mxu0 0
    %1765 = vmatpush1.bf16.xpose.msra.mxu0 0
    %1766 = vmatprep.subr.bf16.mxu0 0
    %1767 = vmatpush1.bf16.xpose.msra.mxu0 0
    %1768 = vmatprep.mubr.bf16.mxu0 0
    %1769 = vmatmul.mubr.bf16.gmra.mrb[0].mxu0 %v1731
    %v1770 = vpop.f32.mrb[0].mxu0
    %v1771 = vadd.f32 0.0, %v1770
    %v1772 = vpop.f32.mrb[0].mxu0
    %v1773 = vpop.f32.mrb[0].mxu0
    %v1774 = vpop.f32.mrb[0].mxu0
    %1775 = vdwg.mxu0
    %v1776 = vsel %vm748, %v1771, -inf
    %1777 = vmax.xlane.f32.xlu0 %v1776
    %v1778 = vpop.xlane.xlu0 %1777
    %v1779 = vsub.f32 %v1771, %v1778
    %v1780 = vmul.f32 %v1779, 1.442695
    %v1781 = vpow.pop %v1780
    %v1782 = vsel %vm748, %v1781, 0.0
    %1783 = vadd.xlane.f32.xlu0 %v1782
    %v1784 = vpop.xlane.xlu0 %1783
    %v1785 = vrcp.pop %v1784
    %v1786 = vmul.f32 %v1781, %v1785
    %v1787 = vpack.c.bf16 %v1786, %v1786
    %1788 = vrot.lane.b32.xlu0 %v1388, 64
    %v1789 = vpop.permute.xlu0 %1788
    %v1791 = vsel %vm748, %v1787, 0
    %v1794 = vsel %vm764, %v1789, 0
    %1796 = vmatprep.subr.bf16.mxu0 0
    %1797 = vmatpush1.bf16.msra.mxu0 %v1794
    %1798 = vmatprep.subr.bf16.mxu0 0
    %1799 = vmatpush1.bf16.msra.mxu0 0
    %1800 = vmatprep.subr.bf16.mxu0 0
    %1801 = vmatpush1.bf16.msra.mxu0 0
    %1802 = vmatprep.subr.bf16.mxu0 0
    %1803 = vmatpush1.bf16.msra.mxu0 0
    %1804 = vmatprep.subr.bf16.mxu0 0
    %1805 = vmatpush1.bf16.msra.mxu0 0
    %1806 = vmatprep.subr.bf16.mxu0 0
    %1807 = vmatpush1.bf16.msra.mxu0 0
    %1808 = vmatprep.subr.bf16.mxu0 0
    %1809 = vmatpush1.bf16.msra.mxu0 0
    %1810 = vmatprep.subr.bf16.mxu0 0
    %1811 = vmatpush1.bf16.msra.mxu0 0
    %1812 = vmatprep.subr.bf16.mxu0 0
    %1813 = vmatpush1.bf16.msra.mxu0 0
    %1814 = vmatprep.subr.bf16.mxu0 0
    %1815 = vmatpush1.bf16.msra.mxu0 0
    %1816 = vmatprep.subr.bf16.mxu0 0
    %1817 = vmatpush1.bf16.msra.mxu0 0
    %1818 = vmatprep.subr.bf16.mxu0 0
    %1819 = vmatpush1.bf16.msra.mxu0 0
    %1820 = vmatprep.subr.bf16.mxu0 0
    %1821 = vmatpush1.bf16.msra.mxu0 0
    %1822 = vmatprep.subr.bf16.mxu0 0
    %1823 = vmatpush1.bf16.msra.mxu0 0
    %1824 = vmatprep.subr.bf16.mxu0 0
    %1825 = vmatpush1.bf16.msra.mxu0 0
    %1826 = vmatprep.subr.bf16.mxu0 0
    %1827 = vmatpush1.bf16.msra.mxu0 0
    %1828 = vmatprep.mubr.bf16.mxu0 0
    %1829 = vmatmul.mubr.bf16.gmra.mrb[0].mxu0 %v1791
    %v1830 = vpop.f32.mrb[0].mxu0
    %v1831 = vadd.f32 0.0, %v1830
    %v1832 = vpop.f32.mrb[0].mxu0
    %v1833 = vpop.f32.mrb[0].mxu0
    %v1834 = vpop.f32.mrb[0].mxu0
    %1835 = vdwg.mxu0
    %v1836 = vpack.c.bf16 %v1831, %v1831
    %v1837 = vld [vmem:[%s1153] sm:$0xf]
    %v1838 = vld [vmem:[%s1153 + $0x4] sm:$0xf]
    %v1839 = vld [vmem:[%s1153 + $0x8] sm:$0xf]
    %v1840 = vld [vmem:[%s1153 + $0xc] sm:$0xf]
    %v1845 = vunpack.c.l.b16 %v1837
    %v1846 = vunpack.c.l.b16 %v1838
    %v1847 = vunpack.c.l.b16 %v1839
    %v1848 = vunpack.c.l.b16 %v1840
    %v1849 = vpack.c.b16 %v1846, %v1845
    %v1850 = vpack.c.b16 %v1848, %v1847
    %v1854 = vsel %vm701, %v1836, 0
    %1856 = vmatprep.subr.bf16.mxu0 0
    %1857 = vmatpush1.bf16.msra.mxu0 %v1849
    %1858 = vmatprep.subr.bf16.mxu0 0
    %1859 = vmatpush1.bf16.msra.mxu0 %v1850
    %1860 = vmatprep.subr.bf16.mxu0 0
    %1861 = vmatpush1.bf16.msra.mxu0 0
    %1862 = vmatprep.subr.bf16.mxu0 0
    %1863 = vmatpush1.bf16.msra.mxu0 0
    %1864 = vmatprep.subr.bf16.mxu0 0
    %1865 = vmatpush1.bf16.msra.mxu0 0
    %1866 = vmatprep.subr.bf16.mxu0 0
    %1867 = vmatpush1.bf16.msra.mxu0 0
    %1868 = vmatprep.subr.bf16.mxu0 0
    %1869 = vmatpush1.bf16.msra.mxu0 0
    %1870 = vmatprep.subr.bf16.mxu0 0
    %1871 = vmatpush1.bf16.msra.mxu0 0
    %1872 = vmatprep.subr.bf16.mxu0 0
    %1873 = vmatpush1.bf16.msra.mxu0 0
    %1874 = vmatprep.subr.bf16.mxu0 0
    %1875 = vmatpush1.bf16.msra.mxu0 0
    %1876 = vmatprep.subr.bf16.mxu0 0
    %1877 = vmatpush1.bf16.msra.mxu0 0
    %1878 = vmatprep.subr.bf16.mxu0 0
    %1879 = vmatpush1.bf16.msra.mxu0 0
    %1880 = vmatprep.subr.bf16.mxu0 0
    %1881 = vmatpush1.bf16.msra.mxu0 0
    %1882 = vmatprep.subr.bf16.mxu0 0
    %1883 = vmatpush1.bf16.msra.mxu0 0
    %1884 = vmatprep.subr.bf16.mxu0 0
    %1885 = vmatpush1.bf16.msra.mxu0 0
    %1886 = vmatprep.subr.bf16.mxu0 0
    %1887 = vmatpush1.bf16.msra.mxu0 0
    %1888 = vmatprep.mubr.bf16.mxu0 0
    %1889 = vmatmul.mubr.bf16.gmra.mrb[0].mxu0 %v1854
    %v1890 = vpop.f32.mrb[0].mxu0
    %v1891 = vadd.f32 0.0, %v1890
    %v1892 = vpop.f32.mrb[0].mxu0
    %v1893 = vpop.f32.mrb[0].mxu0
    %v1894 = vpop.f32.mrb[0].mxu0
    %1895 = vdwg.mxu0
    %v1896 = vadd.f32 %v1721, %v1891
    %1897 = vrot.lane.b32.xlu0 %v1386, 32
    %v1898 = vpop.permute.xlu0 %1897
    %1899 = vrot.lane.b32.xlu0 %v1387, 32
    %v1900 = vpop.permute.xlu0 %1899
    %v1902 = vsel %vm701, %v1898, 0
    %v1905 = vsel %vm701, %v1900, 0
    %1907 = vmatprep.subr.bf16.mxu0 0
    %1908 = vmatpush1.bf16.xpose.msra.mxu0 %v1905
    %1909 = vmatprep.subr.bf16.mxu0 0
    %1910 = vmatpush1.bf16.xpose.msra.mxu0 0
    %1911 = vmatprep.subr.bf16.mxu0 0
    %1912 = vmatpush1.bf16.xpose.msra.mxu0 0
    %1913 = vmatprep.subr.bf16.mxu0 0
    %1914 = vmatpush1.bf16.xpose.msra.mxu0 0
    %1915 = vmatprep.subr.bf16.mxu0 0
    %1916 = vmatpush1.bf16.xpose.msra.mxu0 0
    %1917 = vmatprep.subr.bf16.mxu0 0
    %1918 = vmatpush1.bf16.xpose.msra.mxu0 0
    %1919 = vmatprep.subr.bf16.mxu0 0
    %1920 = vmatpush1.bf16.xpose.msra.mxu0 0
    %1921 = vmatprep.subr.bf16.mxu0 0
    %1922 = vmatpush1.bf16.xpose.msra.mxu0 0
    %1923 = vmatprep.subr.bf16.mxu0 0
    %1924 = vmatpush1.bf16.xpose.msra.mxu0 0
    %1925 = vmatprep.subr.bf16.mxu0 0
    %1926 = vmatpush1.bf16.xpose.msra.mxu0 0
    %1927 = vmatprep.subr.bf16.mxu0 0
    %1928 = vmatpush1.bf16.xpose.msra.mxu0 0
    %1929 = vmatprep.subr.bf16.mxu0 0
    %1930 = vmatpush1.bf16.xpose.msra.mxu0 0
    %1931 = vmatprep.subr.bf16.mxu0 0
    %1932 = vmatpush1.bf16.xpose.msra.mxu0 0
    %1933 = vmatprep.subr.bf16.mxu0 0
    %1934 = vmatpush1.bf16.xpose.msra.mxu0 0
    %1935 = vmatprep.subr.bf16.mxu0 0
    %1936 = vmatpush1.bf16.xpose.msra.mxu0 0
    %1937 = vmatprep.subr.bf16.mxu0 0
    %1938 = vmatpush1.bf16.xpose.msra.mxu0 0
    %1939 = vmatprep.mubr.bf16.mxu0 0
    %1940 = vmatmul.mubr.bf16.gmra.mrb[0].mxu0 %v1902
    %v1941 = vpop.f32.mrb[0].mxu0
    %v1942 = vadd.f32 0.0, %v1941
    %v1943 = vpop.f32.mrb[0].mxu0
    %v1944 = vpop.f32.mrb[0].mxu0
    %v1945 = vpop.f32.mrb[0].mxu0
    %1946 = vdwg.mxu0
    %v1947 = vsel %vm748, %v1942, -inf
    %1948 = vmax.xlane.f32.xlu0 %v1947
    %v1949 = vpop.xlane.xlu0 %1948
    %v1950 = vsub.f32 %v1942, %v1949
    %v1951 = vmul.f32 %v1950, 1.442695
    %v1952 = vpow.pop %v1951
    %v1953 = vsel %vm748, %v1952, 0.0
    %1954 = vadd.xlane.f32.xlu0 %v1953
    %v1955 = vpop.xlane.xlu0 %1954
    %v1956 = vrcp.pop %v1955
    %v1957 = vmul.f32 %v1952, %v1956
    %v1958 = vpack.c.bf16 %v1957, %v1957
    %1959 = vrot.lane.b32.xlu0 %v1388, 32
    %v1960 = vpop.permute.xlu0 %1959
    %v1962 = vsel %vm748, %v1958, 0
    %v1965 = vsel %vm764, %v1960, 0
    %1967 = vmatprep.subr.bf16.mxu0 0
    %1968 = vmatpush1.bf16.msra.mxu0 %v1965
    %1969 = vmatprep.subr.bf16.mxu0 0
    %1970 = vmatpush1.bf16.msra.mxu0 0
    %1971 = vmatprep.subr.bf16.mxu0 0
    %1972 = vmatpush1.bf16.msra.mxu0 0
    %1973 = vmatprep.subr.bf16.mxu0 0
    %1974 = vmatpush1.bf16.msra.mxu0 0
    %1975 = vmatprep.subr.bf16.mxu0 0
    %1976 = vmatpush1.bf16.msra.mxu0 0
    %1977 = vmatprep.subr.bf16.mxu0 0
    %1978 = vmatpush1.bf16.msra.mxu0 0
    %1979 = vmatprep.subr.bf16.mxu0 0
    %1980 = vmatpush1.bf16.msra.mxu0 0
    %1981 = vmatprep.subr.bf16.mxu0 0
    %1982 = vmatpush1.bf16.msra.mxu0 0
    %1983 = vmatprep.subr.bf16.mxu0 0
    %1984 = vmatpush1.bf16.msra.mxu0 0
    %1985 = vmatprep.subr.bf16.mxu0 0
    %1986 = vmatpush1.bf16.msra.mxu0 0
    %1987 = vmatprep.subr.bf16.mxu0 0
    %1988 = vmatpush1.bf16.msra.mxu0 0
    %1989 = vmatprep.subr.bf16.mxu0 0
    %1990 = vmatpush1.bf16.msra.mxu0 0
    %1991 = vmatprep.subr.bf16.mxu0 0
    %1992 = vmatpush1.bf16.msra.mxu0 0
    %1993 = vmatprep.subr.bf16.mxu0 0
    %1994 = vmatpush1.bf16.msra.mxu0 0
    %1995 = vmatprep.subr.bf16.mxu0 0
    %1996 = vmatpush1.bf16.msra.mxu0 0
    %1997 = vmatprep.subr.bf16.mxu0 0
    %1998 = vmatpush1.bf16.msra.mxu0 0
    %1999 = vmatprep.mubr.bf16.mxu0 0
    %2000 = vmatmul.mubr.bf16.gmra.mrb[0].mxu0 %v1962
    %v2001 = vpop.f32.mrb[0].mxu0
    %v2002 = vadd.f32 0.0, %v2001
    %v2003 = vpop.f32.mrb[0].mxu0
    %v2004 = vpop.f32.mrb[0].mxu0
    %v2005 = vpop.f32.mrb[0].mxu0
    %2006 = vdwg.mxu0
    %v2007 = vpack.c.bf16 %v2002, %v2002
    %v2008 = vld [vmem:[%s1325] sm:$0xf]
    %v2009 = vld [vmem:[%s1325 + $0x4] sm:$0xf]
    %v2010 = vld [vmem:[%s1325 + $0x8] sm:$0xf]
    %v2011 = vld [vmem:[%s1325 + $0xc] sm:$0xf]
    %v2016 = vunpack.c.l.b16 %v2008
    %v2017 = vunpack.c.l.b16 %v2009
    %v2018 = vunpack.c.l.b16 %v2010
    %v2019 = vunpack.c.l.b16 %v2011
    %v2020 = vpack.c.b16 %v2017, %v2016
    %v2021 = vpack.c.b16 %v2019, %v2018
    %v2025 = vsel %vm701, %v2007, 0
    %2027 = vmatprep.subr.bf16.mxu0 0
    %2028 = vmatpush1.bf16.msra.mxu0 %v2020
    %2029 = vmatprep.subr.bf16.mxu0 0
    %2030 = vmatpush1.bf16.msra.mxu0 %v2021
    %2031 = vmatprep.subr.bf16.mxu0 0
    %2032 = vmatpush1.bf16.msra.mxu0 0
    %2033 = vmatprep.subr.bf16.mxu0 0
    %2034 = vmatpush1.bf16.msra.mxu0 0
    %2035 = vmatprep.subr.bf16.mxu0 0
    %2036 = vmatpush1.bf16.msra.mxu0 0
    %2037 = vmatprep.subr.bf16.mxu0 0
    %2038 = vmatpush1.bf16.msra.mxu0 0
    %2039 = vmatprep.subr.bf16.mxu0 0
    %2040 = vmatpush1.bf16.msra.mxu0 0
    %2041 = vmatprep.subr.bf16.mxu0 0
    %2042 = vmatpush1.bf16.msra.mxu0 0
    %2043 = vmatprep.subr.bf16.mxu0 0
    %2044 = vmatpush1.bf16.msra.mxu0 0
    %2045 = vmatprep.subr.bf16.mxu0 0
    %2046 = vmatpush1.bf16.msra.mxu0 0
    %2047 = vmatprep.subr.bf16.mxu0 0
    %2048 = vmatpush1.bf16.msra.mxu0 0
    %2049 = vmatprep.subr.bf16.mxu0 0
    %2050 = vmatpush1.bf16.msra.mxu0 0
    %2051 = vmatprep.subr.bf16.mxu0 0
    %2052 = vmatpush1.bf16.msra.mxu0 0
    %2053 = vmatprep.subr.bf16.mxu0 0
    %2054 = vmatpush1.bf16.msra.mxu0 0
    %2055 = vmatprep.subr.bf16.mxu0 0
    %2056 = vmatpush1.bf16.msra.mxu0 0
    %2057 = vmatprep.subr.bf16.mxu0 0
    %2058 = vmatpush1.bf16.msra.mxu0 0
    %2059 = vmatprep.mubr.bf16.mxu0 0
    %2060 = vmatmul.mubr.bf16.gmra.mrb[0].mxu0 %v2025
    %v2061 = vpop.f32.mrb[0].mxu0
    %v2062 = vadd.f32 0.0, %v2061
    %v2063 = vpop.f32.mrb[0].mxu0
    %v2064 = vpop.f32.mrb[0].mxu0
    %v2065 = vpop.f32.mrb[0].mxu0
    %2066 = vdwg.mxu0
    %v2067 = vadd.f32 %v1896, %v2062
    %v2068 = vlaneseq
    %v2069 = vshrl.u32 %v2068, 7
    %v2070 = vsub.s32 0, %v2069
    %v2071 = vrot.slane %v127, %v2070
    %v2072 = vadd.f32 %v1385, %v2071
    %v2073 = vadd.f32 %v2067, %v2071
    %v2074 = vpack.c.bf16 %v649, %v649
    %v2075 = vpack.c.bf16 %v405, %v405
    %v2076 = vpack.c.bf16 %v446, %v446
    %v2078 = vsel %vm701, %v2074, 0
    %v2081 = vsel %vm701, %v2075, 0
    %2083 = vmatprep.subr.bf16.mxu0 0
    %2084 = vmatpush1.bf16.xpose.msra.mxu0 %v2081
    %2085 = vmatprep.subr.bf16.mxu0 0
    %2086 = vmatpush1.bf16.xpose.msra.mxu0 0
    %2087 = vmatprep.subr.bf16.mxu0 0
    %2088 = vmatpush1.bf16.xpose.msra.mxu0 0
    %2089 = vmatprep.subr.bf16.mxu0 0
    %2090 = vmatpush1.bf16.xpose.msra.mxu0 0
    %2091 = vmatprep.subr.bf16.mxu0 0
    %2092 = vmatpush1.bf16.xpose.msra.mxu0 0
    %2093 = vmatprep.subr.bf16.mxu0 0
    %2094 = vmatpush1.bf16.xpose.msra.mxu0 0
    %2095 = vmatprep.subr.bf16.mxu0 0
    %2096 = vmatpush1.bf16.xpose.msra.mxu0 0
    %2097 = vmatprep.subr.bf16.mxu0 0
    %2098 = vmatpush1.bf16.xpose.msra.mxu0 0
    %2099 = vmatprep.subr.bf16.mxu0 0
    %2100 = vmatpush1.bf16.xpose.msra.mxu0 0
    %2101 = vmatprep.subr.bf16.mxu0 0
    %2102 = vmatpush1.bf16.xpose.msra.mxu0 0
    %2103 = vmatprep.subr.bf16.mxu0 0
    %2104 = vmatpush1.bf16.xpose.msra.mxu0 0
    %2105 = vmatprep.subr.bf16.mxu0 0
    %2106 = vmatpush1.bf16.xpose.msra.mxu0 0
    %2107 = vmatprep.subr.bf16.mxu0 0
    %2108 = vmatpush1.bf16.xpose.msra.mxu0 0
    %2109 = vmatprep.subr.bf16.mxu0 0
    %2110 = vmatpush1.bf16.xpose.msra.mxu0 0
    %2111 = vmatprep.subr.bf16.mxu0 0
    %2112 = vmatpush1.bf16.xpose.msra.mxu0 0
    %2113 = vmatprep.subr.bf16.mxu0 0
    %2114 = vmatpush1.bf16.xpose.msra.mxu0 0
    %2115 = vmatprep.mubr.bf16.mxu0 0
    %2116 = vmatmul.mubr.bf16.gmra.mrb[0].mxu0 %v2078
    %v2117 = vpop.f32.mrb[0].mxu0
    %v2118 = vadd.f32 0.0, %v2117
    %v2119 = vpop.f32.mrb[0].mxu0
    %v2120 = vpop.f32.mrb[0].mxu0
    %v2121 = vpop.f32.mrb[0].mxu0
    %2122 = vdwg.mxu0
    %v2123 = vsel %vm748, %v2118, -inf
    %2124 = vmax.xlane.f32.xlu0 %v2123
    %v2125 = vpop.xlane.xlu0 %2124
    %v2126 = vsub.f32 %v2118, %v2125
    %v2127 = vmul.f32 %v2126, 1.442695
    %v2128 = vpow.pop %v2127
    %v2129 = vsel %vm748, %v2128, 0.0
    %2130 = vadd.xlane.f32.xlu0 %v2129
    %v2131 = vpop.xlane.xlu0 %2130
    %v2132 = vrcp.pop %v2131
    %v2133 = vmul.f32 %v2128, %v2132
    %v2134 = vpack.c.bf16 %v2133, %v2133
    %v2136 = vsel %vm748, %v2134, 0
    %v2139 = vsel %vm764, %v2076, 0
    %2141 = vmatprep.subr.bf16.mxu0 0
    %2142 = vmatpush1.bf16.msra.mxu0 %v2139
    %2143 = vmatprep.subr.bf16.mxu0 0
    %2144 = vmatpush1.bf16.msra.mxu0 0
    %2145 = vmatprep.subr.bf16.mxu0 0
    %2146 = vmatpush1.bf16.msra.mxu0 0
    %2147 = vmatprep.subr.bf16.mxu0 0
    %2148 = vmatpush1.bf16.msra.mxu0 0
    %2149 = vmatprep.subr.bf16.mxu0 0
    %2150 = vmatpush1.bf16.msra.mxu0 0
    %2151 = vmatprep.subr.bf16.mxu0 0
    %2152 = vmatpush1.bf16.msra.mxu0 0
    %2153 = vmatprep.subr.bf16.mxu0 0
    %2154 = vmatpush1.bf16.msra.mxu0 0
    %2155 = vmatprep.subr.bf16.mxu0 0
    %2156 = vmatpush1.bf16.msra.mxu0 0
    %2157 = vmatprep.subr.bf16.mxu0 0
    %2158 = vmatpush1.bf16.msra.mxu0 0
    %2159 = vmatprep.subr.bf16.mxu0 0
    %2160 = vmatpush1.bf16.msra.mxu0 0
    %2161 = vmatprep.subr.bf16.mxu0 0
    %2162 = vmatpush1.bf16.msra.mxu0 0
    %2163 = vmatprep.subr.bf16.mxu0 0
    %2164 = vmatpush1.bf16.msra.mxu0 0
    %2165 = vmatprep.subr.bf16.mxu0 0
    %2166 = vmatpush1.bf16.msra.mxu0 0
    %2167 = vmatprep.subr.bf16.mxu0 0
    %2168 = vmatpush1.bf16.msra.mxu0 0
    %2169 = vmatprep.subr.bf16.mxu0 0
    %2170 = vmatpush1.bf16.msra.mxu0 0
    %2171 = vmatprep.subr.bf16.mxu0 0
    %2172 = vmatpush1.bf16.msra.mxu0 0
    %2173 = vmatprep.mubr.bf16.mxu0 0
    %2174 = vmatmul.mubr.bf16.gmra.mrb[0].mxu0 %v2136
    %v2175 = vpop.f32.mrb[0].mxu0
    %v2176 = vadd.f32 0.0, %v2175
    %v2177 = vpop.f32.mrb[0].mxu0
    %v2178 = vpop.f32.mrb[0].mxu0
    %v2179 = vpop.f32.mrb[0].mxu0
    %2180 = vdwg.mxu0
    %v2181 = vpack.c.bf16 %v2176, %v2176
    %s2182 = scalar_lea.vmem [#allocation8], 64
    %v2183 = vld [vmem:[%s2182] sm:$0xf]
    %v2184 = vld [vmem:[%s2182 + $0x4] sm:$0xf]
    %v2185 = vld [vmem:[%s2182 + $0x8] sm:$0xf]
    %v2186 = vld [vmem:[%s2182 + $0xc] sm:$0xf]
    %2188 = vrot.lane.b32.xlu0 %v2074, 96
    %v2189 = vpop.permute.xlu0 %2188
    %2191 = vrot.lane.b32.xlu0 %v2075, 96
    %v2192 = vpop.permute.xlu0 %2191
    %v2194 = vsel %vm701, %v2189, 0
    %v2197 = vsel %vm701, %v2192, 0
    %2199 = vmatprep.subr.bf16.mxu0 0
    %2200 = vmatpush1.bf16.xpose.msra.mxu0 %v2197
    %2201 = vmatprep.subr.bf16.mxu0 0
    %2202 = vmatpush1.bf16.xpose.msra.mxu0 0
    %2203 = vmatprep.subr.bf16.mxu0 0
    %2204 = vmatpush1.bf16.xpose.msra.mxu0 0
    %2205 = vmatprep.subr.bf16.mxu0 0
    %2206 = vmatpush1.bf16.xpose.msra.mxu0 0
    %2207 = vmatprep.subr.bf16.mxu0 0
    %2208 = vmatpush1.bf16.xpose.msra.mxu0 0
    %2209 = vmatprep.subr.bf16.mxu0 0
    %2210 = vmatpush1.bf16.xpose.msra.mxu0 0
    %2211 = vmatprep.subr.bf16.mxu0 0
    %2212 = vmatpush1.bf16.xpose.msra.mxu0 0
    %2213 = vmatprep.subr.bf16.mxu0 0
    %2214 = vmatpush1.bf16.xpose.msra.mxu0 0
    %2215 = vmatprep.subr.bf16.mxu0 0
    %2216 = vmatpush1.bf16.xpose.msra.mxu0 0
    %2217 = vmatprep.subr.bf16.mxu0 0
    %2218 = vmatpush1.bf16.xpose.msra.mxu0 0
    %2219 = vmatprep.subr.bf16.mxu0 0
    %2220 = vmatpush1.bf16.xpose.msra.mxu0 0
    %2221 = vmatprep.subr.bf16.mxu0 0
    %2222 = vmatpush1.bf16.xpose.msra.mxu0 0
    %2223 = vmatprep.subr.bf16.mxu0 0
    %2224 = vmatpush1.bf16.xpose.msra.mxu0 0
    %2225 = vmatprep.subr.bf16.mxu0 0
    %2226 = vmatpush1.bf16.xpose.msra.mxu0 0
    %2227 = vmatprep.subr.bf16.mxu0 0
    %2228 = vmatpush1.bf16.xpose.msra.mxu0 0
    %2229 = vmatprep.subr.bf16.mxu0 0
    %2230 = vmatpush1.bf16.xpose.msra.mxu0 0
    %2231 = vmatprep.mubr.bf16.mxu0 0
    %2232 = vmatmul.mubr.bf16.gmra.mrb[0].mxu0 %v2194
    %v2233 = vpop.f32.mrb[0].mxu0
    %v2234 = vadd.f32 0.0, %v2233
    %v2235 = vpop.f32.mrb[0].mxu0
    %v2236 = vpop.f32.mrb[0].mxu0
    %v2237 = vpop.f32.mrb[0].mxu0
    %2238 = vdwg.mxu0
    %v2239 = vsel %vm748, %v2234, -inf
    %2240 = vmax.xlane.f32.xlu0 %v2239
    %v2241 = vpop.xlane.xlu0 %2240
    %v2242 = vsub.f32 %v2234, %v2241
    %v2243 = vmul.f32 %v2242, 1.442695
    %v2244 = vpow.pop %v2243
    %v2245 = vsel %vm748, %v2244, 0.0
    %2246 = vadd.xlane.f32.xlu0 %v2245
    %v2247 = vpop.xlane.xlu0 %2246
    %v2248 = vrcp.pop %v2247
    %v2249 = vmul.f32 %v2244, %v2248
    %v2250 = vpack.c.bf16 %v2249, %v2249
    %2252 = vrot.lane.b32.xlu0 %v2076, 96
    %v2253 = vpop.permute.xlu0 %2252
    %v2255 = vsel %vm748, %v2250, 0
    %v2258 = vsel %vm764, %v2253, 0
    %2260 = vmatprep.subr.bf16.mxu0 0
    %2261 = vmatpush1.bf16.msra.mxu0 %v2258
    %2262 = vmatprep.subr.bf16.mxu0 0
    %2263 = vmatpush1.bf16.msra.mxu0 0
    %2264 = vmatprep.subr.bf16.mxu0 0
    %2265 = vmatpush1.bf16.msra.mxu0 0
    %2266 = vmatprep.subr.bf16.mxu0 0
    %2267 = vmatpush1.bf16.msra.mxu0 0
    %2268 = vmatprep.subr.bf16.mxu0 0
    %2269 = vmatpush1.bf16.msra.mxu0 0
    %2270 = vmatprep.subr.bf16.mxu0 0
    %2271 = vmatpush1.bf16.msra.mxu0 0
    %2272 = vmatprep.subr.bf16.mxu0 0
    %2273 = vmatpush1.bf16.msra.mxu0 0
    %2274 = vmatprep.subr.bf16.mxu0 0
    %2275 = vmatpush1.bf16.msra.mxu0 0
    %2276 = vmatprep.subr.bf16.mxu0 0
    %2277 = vmatpush1.bf16.msra.mxu0 0
    %2278 = vmatprep.subr.bf16.mxu0 0
    %2279 = vmatpush1.bf16.msra.mxu0 0
    %2280 = vmatprep.subr.bf16.mxu0 0
    %2281 = vmatpush1.bf16.msra.mxu0 0
    %2282 = vmatprep.subr.bf16.mxu0 0
    %2283 = vmatpush1.bf16.msra.mxu0 0
    %2284 = vmatprep.subr.bf16.mxu0 0
    %2285 = vmatpush1.bf16.msra.mxu0 0
    %2286 = vmatprep.subr.bf16.mxu0 0
    %2287 = vmatpush1.bf16.msra.mxu0 0
    %2288 = vmatprep.subr.bf16.mxu0 0
    %2289 = vmatpush1.bf16.msra.mxu0 0
    %2290 = vmatprep.subr.bf16.mxu0 0
    %2291 = vmatpush1.bf16.msra.mxu0 0
    %2292 = vmatprep.mubr.bf16.mxu0 0
    %2293 = vmatmul.mubr.bf16.gmra.mrb[0].mxu0 %v2255
    %v2294 = vpop.f32.mrb[0].mxu0
    %v2295 = vadd.f32 0.0, %v2294
    %v2296 = vpop.f32.mrb[0].mxu0
    %v2297 = vpop.f32.mrb[0].mxu0
    %v2298 = vpop.f32.mrb[0].mxu0
    %2299 = vdwg.mxu0
    %v2300 = vpack.c.bf16 %v2295, %v2295
    %s2301 = scalar_lea.vmem [#allocation8], 80
    %v2302 = vld [vmem:[%s2301] sm:$0xf]
    %v2303 = vld [vmem:[%s2301 + $0x4] sm:$0xf]
    %v2304 = vld [vmem:[%s2301 + $0x8] sm:$0xf]
    %v2305 = vld [vmem:[%s2301 + $0xc] sm:$0xf]
    %v2310 = vunpack.c.l.b16 %v2302
    %v2311 = vunpack.c.l.b16 %v2303
    %v2312 = vunpack.c.l.b16 %v2304
    %v2313 = vunpack.c.l.b16 %v2305
    %v2314 = vpack.c.b16 %v2311, %v2310
    %v2315 = vpack.c.b16 %v2313, %v2312
    %v2319 = vsel %vm701, %v2300, 0
    %2321 = vmatprep.subr.bf16.mxu0 0
    %2322 = vmatpush1.bf16.msra.mxu0 %v2314
    %2323 = vmatprep.subr.bf16.mxu0 0
    %2324 = vmatpush1.bf16.msra.mxu0 %v2315
    %2325 = vmatprep.subr.bf16.mxu0 0
    %2326 = vmatpush1.bf16.msra.mxu0 0
    %2327 = vmatprep.subr.bf16.mxu0 0
    %2328 = vmatpush1.bf16.msra.mxu0 0
    %2329 = vmatprep.subr.bf16.mxu0 0
    %2330 = vmatpush1.bf16.msra.mxu0 0
    %2331 = vmatprep.subr.bf16.mxu0 0
    %2332 = vmatpush1.bf16.msra.mxu0 0
    %2333 = vmatprep.subr.bf16.mxu0 0
    %2334 = vmatpush1.bf16.msra.mxu0 0
    %2335 = vmatprep.subr.bf16.mxu0 0
    %2336 = vmatpush1.bf16.msra.mxu0 0
    %2337 = vmatprep.subr.bf16.mxu0 0
    %2338 = vmatpush1.bf16.msra.mxu0 0
    %2339 = vmatprep.subr.bf16.mxu0 0
    %2340 = vmatpush1.bf16.msra.mxu0 0
    %2341 = vmatprep.subr.bf16.mxu0 0
    %2342 = vmatpush1.bf16.msra.mxu0 0
    %2343 = vmatprep.subr.bf16.mxu0 0
    %2344 = vmatpush1.bf16.msra.mxu0 0
    %2345 = vmatprep.subr.bf16.mxu0 0
    %2346 = vmatpush1.bf16.msra.mxu0 0
    %2347 = vmatprep.subr.bf16.mxu0 0
    %2348 = vmatpush1.bf16.msra.mxu0 0
    %2349 = vmatprep.subr.bf16.mxu0 0
    %2350 = vmatpush1.bf16.msra.mxu0 0
    %2351 = vmatprep.subr.bf16.mxu0 0
    %2352 = vmatpush1.bf16.msra.mxu0 0
    %2353 = vmatprep.mubr.bf16.mxu0 0
    %2354 = vmatmul.mubr.bf16.gmra.mrb[0].mxu0 %v2319
    %v2355 = vpop.f32.mrb[0].mxu0
    %v2356 = vadd.f32 0.0, %v2355
    %v2357 = vpop.f32.mrb[0].mxu0
    %v2358 = vpop.f32.mrb[0].mxu0
    %v2359 = vpop.f32.mrb[0].mxu0
    %2360 = vdwg.mxu0
    %v2365 = vunpack.c.l.b16 %v2183
    %v2366 = vunpack.c.l.b16 %v2184
    %v2367 = vunpack.c.l.b16 %v2185
    %v2368 = vunpack.c.l.b16 %v2186
    %v2369 = vpack.c.b16 %v2366, %v2365
    %v2370 = vpack.c.b16 %v2368, %v2367
    %v2374 = vsel %vm701, %v2181, 0
    %2376 = vmatprep.subr.bf16.mxu0 0
    %2377 = vmatpush1.bf16.msra.mxu0 %v2369
    %2378 = vmatprep.subr.bf16.mxu0 0
    %2379 = vmatpush1.bf16.msra.mxu0 %v2370
    %2380 = vmatprep.subr.bf16.mxu0 0
    %2381 = vmatpush1.bf16.msra.mxu0 0
    %2382 = vmatprep.subr.bf16.mxu0 0
    %2383 = vmatpush1.bf16.msra.mxu0 0
    %2384 = vmatprep.subr.bf16.mxu0 0
    %2385 = vmatpush1.bf16.msra.mxu0 0
    %2386 = vmatprep.subr.bf16.mxu0 0
    %2387 = vmatpush1.bf16.msra.mxu0 0
    %2388 = vmatprep.subr.bf16.mxu0 0
    %2389 = vmatpush1.bf16.msra.mxu0 0
    %2390 = vmatprep.subr.bf16.mxu0 0
    %2391 = vmatpush1.bf16.msra.mxu0 0
    %2392 = vmatprep.subr.bf16.mxu0 0
    %2393 = vmatpush1.bf16.msra.mxu0 0
    %2394 = vmatprep.subr.bf16.mxu0 0
    %2395 = vmatpush1.bf16.msra.mxu0 0
    %2396 = vmatprep.subr.bf16.mxu0 0
    %2397 = vmatpush1.bf16.msra.mxu0 0
    %2398 = vmatprep.subr.bf16.mxu0 0
    %2399 = vmatpush1.bf16.msra.mxu0 0
    %2400 = vmatprep.subr.bf16.mxu0 0
    %2401 = vmatpush1.bf16.msra.mxu0 0
    %2402 = vmatprep.subr.bf16.mxu0 0
    %2403 = vmatpush1.bf16.msra.mxu0 0
    %2404 = vmatprep.subr.bf16.mxu0 0
    %2405 = vmatpush1.bf16.msra.mxu0 0
    %2406 = vmatprep.subr.bf16.mxu0 0
    %2407 = vmatpush1.bf16.msra.mxu0 0
    %2408 = vmatprep.mubr.bf16.mxu0 0
    %2409 = vmatmul.mubr.bf16.gmra.mrb[0].mxu0 %v2374
    %v2410 = vpop.f32.mrb[0].mxu0
    %v2411 = vadd.f32 %v2356, %v2410
    %v2412 = vpop.f32.mrb[0].mxu0
    %v2413 = vpop.f32.mrb[0].mxu0
    %v2414 = vpop.f32.mrb[0].mxu0
    %2415 = vdwg.mxu0
    %2416 = vrot.lane.b32.xlu0 %v2074, 64
    %v2417 = vpop.permute.xlu0 %2416
    %2418 = vrot.lane.b32.xlu0 %v2075, 64
    %v2419 = vpop.permute.xlu0 %2418
    %v2421 = vsel %vm701, %v2417, 0
    %v2424 = vsel %vm701, %v2419, 0
    %2426 = vmatprep.subr.bf16.mxu0 0
    %2427 = vmatpush1.bf16.xpose.msra.mxu0 %v2424
    %2428 = vmatprep.subr.bf16.mxu0 0
    %2429 = vmatpush1.bf16.xpose.msra.mxu0 0
    %2430 = vmatprep.subr.bf16.mxu0 0
    %2431 = vmatpush1.bf16.xpose.msra.mxu0 0
    %2432 = vmatprep.subr.bf16.mxu0 0
    %2433 = vmatpush1.bf16.xpose.msra.mxu0 0
    %2434 = vmatprep.subr.bf16.mxu0 0
    %2435 = vmatpush1.bf16.xpose.msra.mxu0 0
    %2436 = vmatprep.subr.bf16.mxu0 0
    %2437 = vmatpush1.bf16.xpose.msra.mxu0 0
    %2438 = vmatprep.subr.bf16.mxu0 0
    %2439 = vmatpush1.bf16.xpose.msra.mxu0 0
    %2440 = vmatprep.subr.bf16.mxu0 0
    %2441 = vmatpush1.bf16.xpose.msra.mxu0 0
    %2442 = vmatprep.subr.bf16.mxu0 0
    %2443 = vmatpush1.bf16.xpose.msra.mxu0 0
    %2444 = vmatprep.subr.bf16.mxu0 0
    %2445 = vmatpush1.bf16.xpose.msra.mxu0 0
    %2446 = vmatprep.subr.bf16.mxu0 0
    %2447 = vmatpush1.bf16.xpose.msra.mxu0 0
    %2448 = vmatprep.subr.bf16.mxu0 0
    %2449 = vmatpush1.bf16.xpose.msra.mxu0 0
    %2450 = vmatprep.subr.bf16.mxu0 0
    %2451 = vmatpush1.bf16.xpose.msra.mxu0 0
    %2452 = vmatprep.subr.bf16.mxu0 0
    %2453 = vmatpush1.bf16.xpose.msra.mxu0 0
    %2454 = vmatprep.subr.bf16.mxu0 0
    %2455 = vmatpush1.bf16.xpose.msra.mxu0 0
    %2456 = vmatprep.subr.bf16.mxu0 0
    %2457 = vmatpush1.bf16.xpose.msra.mxu0 0
    %2458 = vmatprep.mubr.bf16.mxu0 0
    %2459 = vmatmul.mubr.bf16.gmra.mrb[0].mxu0 %v2421
    %v2460 = vpop.f32.mrb[0].mxu0
    %v2461 = vadd.f32 0.0, %v2460
    %v2462 = vpop.f32.mrb[0].mxu0
    %v2463 = vpop.f32.mrb[0].mxu0
    %v2464 = vpop.f32.mrb[0].mxu0
    %2465 = vdwg.mxu0
    %v2466 = vsel %vm748, %v2461, -inf
    %2467 = vmax.xlane.f32.xlu0 %v2466
    %v2468 = vpop.xlane.xlu0 %2467
    %v2469 = vsub.f32 %v2461, %v2468
    %v2470 = vmul.f32 %v2469, 1.442695
    %v2471 = vpow.pop %v2470
    %v2472 = vsel %vm748, %v2471, 0.0
    %2473 = vadd.xlane.f32.xlu0 %v2472
    %v2474 = vpop.xlane.xlu0 %2473
    %v2475 = vrcp.pop %v2474
    %v2476 = vmul.f32 %v2471, %v2475
    %v2477 = vpack.c.bf16 %v2476, %v2476
    %2478 = vrot.lane.b32.xlu0 %v2076, 64
    %v2479 = vpop.permute.xlu0 %2478
    %v2481 = vsel %vm748, %v2477, 0
    %v2484 = vsel %vm764, %v2479, 0
    %2486 = vmatprep.subr.bf16.mxu0 0
    %2487 = vmatpush1.bf16.msra.mxu0 %v2484
    %2488 = vmatprep.subr.bf16.mxu0 0
    %2489 = vmatpush1.bf16.msra.mxu0 0
    %2490 = vmatprep.subr.bf16.mxu0 0
    %2491 = vmatpush1.bf16.msra.mxu0 0
    %2492 = vmatprep.subr.bf16.mxu0 0
    %2493 = vmatpush1.bf16.msra.mxu0 0
    %2494 = vmatprep.subr.bf16.mxu0 0
    %2495 = vmatpush1.bf16.msra.mxu0 0
    %2496 = vmatprep.subr.bf16.mxu0 0
    %2497 = vmatpush1.bf16.msra.mxu0 0
    %2498 = vmatprep.subr.bf16.mxu0 0
    %2499 = vmatpush1.bf16.msra.mxu0 0
    %2500 = vmatprep.subr.bf16.mxu0 0
    %2501 = vmatpush1.bf16.msra.mxu0 0
    %2502 = vmatprep.subr.bf16.mxu0 0
    %2503 = vmatpush1.bf16.msra.mxu0 0
    %2504 = vmatprep.subr.bf16.mxu0 0
    %2505 = vmatpush1.bf16.msra.mxu0 0
    %2506 = vmatprep.subr.bf16.mxu0 0
    %2507 = vmatpush1.bf16.msra.mxu0 0
    %2508 = vmatprep.subr.bf16.mxu0 0
    %2509 = vmatpush1.bf16.msra.mxu0 0
    %2510 = vmatprep.subr.bf16.mxu0 0
    %2511 = vmatpush1.bf16.msra.mxu0 0
    %2512 = vmatprep.subr.bf16.mxu0 0
    %2513 = vmatpush1.bf16.msra.mxu0 0
    %2514 = vmatprep.subr.bf16.mxu0 0
    %2515 = vmatpush1.bf16.msra.mxu0 0
    %2516 = vmatprep.subr.bf16.mxu0 0
    %2517 = vmatpush1.bf16.msra.mxu0 0
    %2518 = vmatprep.mubr.bf16.mxu0 0
    %2519 = vmatmul.mubr.bf16.gmra.mrb[0].mxu0 %v2481
    %v2520 = vpop.f32.mrb[0].mxu0
    %v2521 = vadd.f32 0.0, %v2520
    %v2522 = vpop.f32.mrb[0].mxu0
    %v2523 = vpop.f32.mrb[0].mxu0
    %v2524 = vpop.f32.mrb[0].mxu0
    %2525 = vdwg.mxu0
    %v2526 = vpack.c.bf16 %v2521, %v2521
    %s2527 = scalar_lea.vmem [#allocation8], 96
    %v2528 = vld [vmem:[%s2527] sm:$0xf]
    %v2529 = vld [vmem:[%s2527 + $0x4] sm:$0xf]
    %v2530 = vld [vmem:[%s2527 + $0x8] sm:$0xf]
    %v2531 = vld [vmem:[%s2527 + $0xc] sm:$0xf]
    %v2536 = vunpack.c.l.b16 %v2528
    %v2537 = vunpack.c.l.b16 %v2529
    %v2538 = vunpack.c.l.b16 %v2530
    %v2539 = vunpack.c.l.b16 %v2531
    %v2540 = vpack.c.b16 %v2537, %v2536
    %v2541 = vpack.c.b16 %v2539, %v2538
    %v2545 = vsel %vm701, %v2526, 0
    %2547 = vmatprep.subr.bf16.mxu0 0
    %2548 = vmatpush1.bf16.msra.mxu0 %v2540
    %2549 = vmatprep.subr.bf16.mxu0 0
    %2550 = vmatpush1.bf16.msra.mxu0 %v2541
    %2551 = vmatprep.subr.bf16.mxu0 0
    %2552 = vmatpush1.bf16.msra.mxu0 0
    %2553 = vmatprep.subr.bf16.mxu0 0
    %2554 = vmatpush1.bf16.msra.mxu0 0
    %2555 = vmatprep.subr.bf16.mxu0 0
    %2556 = vmatpush1.bf16.msra.mxu0 0
    %2557 = vmatprep.subr.bf16.mxu0 0
    %2558 = vmatpush1.bf16.msra.mxu0 0
    %2559 = vmatprep.subr.bf16.mxu0 0
    %2560 = vmatpush1.bf16.msra.mxu0 0
    %2561 = vmatprep.subr.bf16.mxu0 0
    %2562 = vmatpush1.bf16.msra.mxu0 0
    %2563 = vmatprep.subr.bf16.mxu0 0
    %2564 = vmatpush1.bf16.msra.mxu0 0
    %2565 = vmatprep.subr.bf16.mxu0 0
    %2566 = vmatpush1.bf16.msra.mxu0 0
    %2567 = vmatprep.subr.bf16.mxu0 0
    %2568 = vmatpush1.bf16.msra.mxu0 0
    %2569 = vmatprep.subr.bf16.mxu0 0
    %2570 = vmatpush1.bf16.msra.mxu0 0
    %2571 = vmatprep.subr.bf16.mxu0 0
    %2572 = vmatpush1.bf16.msra.mxu0 0
    %2573 = vmatprep.subr.bf16.mxu0 0
    %2574 = vmatpush1.bf16.msra.mxu0 0
    %2575 = vmatprep.subr.bf16.mxu0 0
    %2576 = vmatpush1.bf16.msra.mxu0 0
    %2577 = vmatprep.subr.bf16.mxu0 0
    %2578 = vmatpush1.bf16.msra.mxu0 0
    %2579 = vmatprep.mubr.bf16.mxu0 0
    %2580 = vmatmul.mubr.bf16.gmra.mrb[0].mxu0 %v2545
    %v2581 = vpop.f32.mrb[0].mxu0
    %v2582 = vadd.f32 0.0, %v2581
    %v2583 = vpop.f32.mrb[0].mxu0
    %v2584 = vpop.f32.mrb[0].mxu0
    %v2585 = vpop.f32.mrb[0].mxu0
    %2586 = vdwg.mxu0
    %v2587 = vadd.f32 %v2411, %v2582
    %2588 = vrot.lane.b32.xlu0 %v2074, 32
    %v2589 = vpop.permute.xlu0 %2588
    %2590 = vrot.lane.b32.xlu0 %v2075, 32
    %v2591 = vpop.permute.xlu0 %2590
    %v2593 = vsel %vm701, %v2589, 0
    %v2596 = vsel %vm701, %v2591, 0
    %2598 = vmatprep.subr.bf16.mxu0 0
    %2599 = vmatpush1.bf16.xpose.msra.mxu0 %v2596
    %2600 = vmatprep.subr.bf16.mxu0 0
    %2601 = vmatpush1.bf16.xpose.msra.mxu0 0
    %2602 = vmatprep.subr.bf16.mxu0 0
    %2603 = vmatpush1.bf16.xpose.msra.mxu0 0
    %2604 = vmatprep.subr.bf16.mxu0 0
    %2605 = vmatpush1.bf16.xpose.msra.mxu0 0
    %2606 = vmatprep.subr.bf16.mxu0 0
    %2607 = vmatpush1.bf16.xpose.msra.mxu0 0
    %2608 = vmatprep.subr.bf16.mxu0 0
    %2609 = vmatpush1.bf16.xpose.msra.mxu0 0
    %2610 = vmatprep.subr.bf16.mxu0 0
    %2611 = vmatpush1.bf16.xpose.msra.mxu0 0
    %2612 = vmatprep.subr.bf16.mxu0 0
    %2613 = vmatpush1.bf16.xpose.msra.mxu0 0
    %2614 = vmatprep.subr.bf16.mxu0 0
    %2615 = vmatpush1.bf16.xpose.msra.mxu0 0
    %2616 = vmatprep.subr.bf16.mxu0 0
    %2617 = vmatpush1.bf16.xpose.msra.mxu0 0
    %2618 = vmatprep.subr.bf16.mxu0 0
    %2619 = vmatpush1.bf16.xpose.msra.mxu0 0
    %2620 = vmatprep.subr.bf16.mxu0 0
    %2621 = vmatpush1.bf16.xpose.msra.mxu0 0
    %2622 = vmatprep.subr.bf16.mxu0 0
    %2623 = vmatpush1.bf16.xpose.msra.mxu0 0
    %2624 = vmatprep.subr.bf16.mxu0 0
    %2625 = vmatpush1.bf16.xpose.msra.mxu0 0
    %2626 = vmatprep.subr.bf16.mxu0 0
    %2627 = vmatpush1.bf16.xpose.msra.mxu0 0
    %2628 = vmatprep.subr.bf16.mxu0 0
    %2629 = vmatpush1.bf16.xpose.msra.mxu0 0
    %2630 = vmatprep.mubr.bf16.mxu0 0
    %2631 = vmatmul.mubr.bf16.gmra.mrb[0].mxu0 %v2593
    %v2632 = vpop.f32.mrb[0].mxu0
    %v2633 = vadd.f32 0.0, %v2632
    %v2634 = vpop.f32.mrb[0].mxu0
    %v2635 = vpop.f32.mrb[0].mxu0
    %v2636 = vpop.f32.mrb[0].mxu0
    %2637 = vdwg.mxu0
    %v2638 = vsel %vm748, %v2633, -inf
    %2639 = vmax.xlane.f32.xlu0 %v2638
    %v2640 = vpop.xlane.xlu0 %2639
    %v2641 = vsub.f32 %v2633, %v2640
    %v2642 = vmul.f32 %v2641, 1.442695
    %v2643 = vpow.pop %v2642
    %v2644 = vsel %vm748, %v2643, 0.0
    %2645 = vadd.xlane.f32.xlu0 %v2644
    %v2646 = vpop.xlane.xlu0 %2645
    %v2647 = vrcp.pop %v2646
    %v2648 = vmul.f32 %v2643, %v2647
    %v2649 = vpack.c.bf16 %v2648, %v2648
    %2650 = vrot.lane.b32.xlu0 %v2076, 32
    %v2651 = vpop.permute.xlu0 %2650
    %v2653 = vsel %vm748, %v2649, 0
    %v2656 = vsel %vm764, %v2651, 0
    %2658 = vmatprep.subr.bf16.mxu0 0
    %2659 = vmatpush1.bf16.msra.mxu0 %v2656
    %2660 = vmatprep.subr.bf16.mxu0 0
    %2661 = vmatpush1.bf16.msra.mxu0 0
    %2662 = vmatprep.subr.bf16.mxu0 0
    %2663 = vmatpush1.bf16.msra.mxu0 0
    %2664 = vmatprep.subr.bf16.mxu0 0
    %2665 = vmatpush1.bf16.msra.mxu0 0
    %2666 = vmatprep.subr.bf16.mxu0 0
    %2667 = vmatpush1.bf16.msra.mxu0 0
    %2668 = vmatprep.subr.bf16.mxu0 0
    %2669 = vmatpush1.bf16.msra.mxu0 0
    %2670 = vmatprep.subr.bf16.mxu0 0
    %2671 = vmatpush1.bf16.msra.mxu0 0
    %2672 = vmatprep.subr.bf16.mxu0 0
    %2673 = vmatpush1.bf16.msra.mxu0 0
    %2674 = vmatprep.subr.bf16.mxu0 0
    %2675 = vmatpush1.bf16.msra.mxu0 0
    %2676 = vmatprep.subr.bf16.mxu0 0
    %2677 = vmatpush1.bf16.msra.mxu0 0
    %2678 = vmatprep.subr.bf16.mxu0 0
    %2679 = vmatpush1.bf16.msra.mxu0 0
    %2680 = vmatprep.subr.bf16.mxu0 0
    %2681 = vmatpush1.bf16.msra.mxu0 0
    %2682 = vmatprep.subr.bf16.mxu0 0
    %2683 = vmatpush1.bf16.msra.mxu0 0
    %2684 = vmatprep.subr.bf16.mxu0 0
    %2685 = vmatpush1.bf16.msra.mxu0 0
    %2686 = vmatprep.subr.bf16.mxu0 0
    %2687 = vmatpush1.bf16.msra.mxu0 0
    %2688 = vmatprep.subr.bf16.mxu0 0
    %2689 = vmatpush1.bf16.msra.mxu0 0
    %2690 = vmatprep.mubr.bf16.mxu0 0
    %2691 = vmatmul.mubr.bf16.gmra.mrb[0].mxu0 %v2653
    %v2692 = vpop.f32.mrb[0].mxu0
    %v2693 = vadd.f32 0.0, %v2692
    %v2694 = vpop.f32.mrb[0].mxu0
    %v2695 = vpop.f32.mrb[0].mxu0
    %v2696 = vpop.f32.mrb[0].mxu0
    %2697 = vdwg.mxu0
    %v2698 = vpack.c.bf16 %v2693, %v2693
    %s2699 = scalar_lea.vmem [#allocation8], 112
    %v2700 = vld [vmem:[%s2699] sm:$0xf]
    %v2701 = vld [vmem:[%s2699 + $0x4] sm:$0xf]
    %v2702 = vld [vmem:[%s2699 + $0x8] sm:$0xf]
    %v2703 = vld [vmem:[%s2699 + $0xc] sm:$0xf]
    %v2708 = vunpack.c.l.b16 %v2700
    %v2709 = vunpack.c.l.b16 %v2701
    %v2710 = vunpack.c.l.b16 %v2702
    %v2711 = vunpack.c.l.b16 %v2703
    %v2712 = vpack.c.b16 %v2709, %v2708
    %v2713 = vpack.c.b16 %v2711, %v2710
    %v2717 = vsel %vm701, %v2698, 0
    %2719 = vmatprep.subr.bf16.mxu0 0
    %2720 = vmatpush1.bf16.msra.mxu0 %v2712
    %2721 = vmatprep.subr.bf16.mxu0 0
    %2722 = vmatpush1.bf16.msra.mxu0 %v2713
    %2723 = vmatprep.subr.bf16.mxu0 0
    %2724 = vmatpush1.bf16.msra.mxu0 0
    %2725 = vmatprep.subr.bf16.mxu0 0
    %2726 = vmatpush1.bf16.msra.mxu0 0
    %2727 = vmatprep.subr.bf16.mxu0 0
    %2728 = vmatpush1.bf16.msra.mxu0 0
    %2729 = vmatprep.subr.bf16.mxu0 0
    %2730 = vmatpush1.bf16.msra.mxu0 0
    %2731 = vmatprep.subr.bf16.mxu0 0
    %2732 = vmatpush1.bf16.msra.mxu0 0
    %2733 = vmatprep.subr.bf16.mxu0 0
    %2734 = vmatpush1.bf16.msra.mxu0 0
    %2735 = vmatprep.subr.bf16.mxu0 0
    %2736 = vmatpush1.bf16.msra.mxu0 0
    %2737 = vmatprep.subr.bf16.mxu0 0
    %2738 = vmatpush1.bf16.msra.mxu0 0
    %2739 = vmatprep.subr.bf16.mxu0 0
    %2740 = vmatpush1.bf16.msra.mxu0 0
    %2741 = vmatprep.subr.bf16.mxu0 0
    %2742 = vmatpush1.bf16.msra.mxu0 0
    %2743 = vmatprep.subr.bf16.mxu0 0
    %2744 = vmatpush1.bf16.msra.mxu0 0
    %2745 = vmatprep.subr.bf16.mxu0 0
    %2746 = vmatpush1.bf16.msra.mxu0 0
    %2747 = vmatprep.subr.bf16.mxu0 0
    %2748 = vmatpush1.bf16.msra.mxu0 0
    %2749 = vmatprep.subr.bf16.mxu0 0
    %2750 = vmatpush1.bf16.msra.mxu0 0
    %2751 = vmatprep.mubr.bf16.mxu0 0
    %2752 = vmatmul.mubr.bf16.gmra.mrb[0].mxu0 %v2717
    %v2753 = vpop.f32.mrb[0].mxu0
    %v2754 = vadd.f32 0.0, %v2753
    %v2755 = vpop.f32.mrb[0].mxu0
    %v2756 = vpop.f32.mrb[0].mxu0
    %v2757 = vpop.f32.mrb[0].mxu0
    %2758 = vdwg.mxu0
    %v2759 = vadd.f32 %v2587, %v2754
    %v2760 = vpack.c.bf16 %v653, %v653
    %v2761 = vpack.c.bf16 %v409, %v409
    %v2762 = vpack.c.bf16 %v449, %v449
    %v2764 = vsel %vm701, %v2760, 0
    %v2767 = vsel %vm701, %v2761, 0
    %2769 = vmatprep.subr.bf16.mxu0 0
    %2770 = vmatpush1.bf16.xpose.msra.mxu0 %v2767
    %2771 = vmatprep.subr.bf16.mxu0 0
    %2772 = vmatpush1.bf16.xpose.msra.mxu0 0
    %2773 = vmatprep.subr.bf16.mxu0 0
    %2774 = vmatpush1.bf16.xpose.msra.mxu0 0
    %2775 = vmatprep.subr.bf16.mxu0 0
    %2776 = vmatpush1.bf16.xpose.msra.mxu0 0
    %2777 = vmatprep.subr.bf16.mxu0 0
    %2778 = vmatpush1.bf16.xpose.msra.mxu0 0
    %2779 = vmatprep.subr.bf16.mxu0 0
    %2780 = vmatpush1.bf16.xpose.msra.mxu0 0
    %2781 = vmatprep.subr.bf16.mxu0 0
    %2782 = vmatpush1.bf16.xpose.msra.mxu0 0
    %2783 = vmatprep.subr.bf16.mxu0 0
    %2784 = vmatpush1.bf16.xpose.msra.mxu0 0
    %2785 = vmatprep.subr.bf16.mxu0 0
    %2786 = vmatpush1.bf16.xpose.msra.mxu0 0
    %2787 = vmatprep.subr.bf16.mxu0 0
    %2788 = vmatpush1.bf16.xpose.msra.mxu0 0
    %2789 = vmatprep.subr.bf16.mxu0 0
    %2790 = vmatpush1.bf16.xpose.msra.mxu0 0
    %2791 = vmatprep.subr.bf16.mxu0 0
    %2792 = vmatpush1.bf16.xpose.msra.mxu0 0
    %2793 = vmatprep.subr.bf16.mxu0 0
    %2794 = vmatpush1.bf16.xpose.msra.mxu0 0
    %2795 = vmatprep.subr.bf16.mxu0 0
    %2796 = vmatpush1.bf16.xpose.msra.mxu0 0
    %2797 = vmatprep.subr.bf16.mxu0 0
    %2798 = vmatpush1.bf16.xpose.msra.mxu0 0
    %2799 = vmatprep.subr.bf16.mxu0 0
    %2800 = vmatpush1.bf16.xpose.msra.mxu0 0
    %2801 = vmatprep.mubr.bf16.mxu0 0
    %2802 = vmatmul.mubr.bf16.gmra.mrb[0].mxu0 %v2764
    %v2803 = vpop.f32.mrb[0].mxu0
    %v2804 = vadd.f32 0.0, %v2803
    %v2805 = vpop.f32.mrb[0].mxu0
    %v2806 = vpop.f32.mrb[0].mxu0
    %v2807 = vpop.f32.mrb[0].mxu0
    %2808 = vdwg.mxu0
    %v2809 = vsel %vm748, %v2804, -inf
    %2810 = vmax.xlane.f32.xlu0 %v2809
    %v2811 = vpop.xlane.xlu0 %2810
    %v2812 = vsub.f32 %v2804, %v2811
    %v2813 = vmul.f32 %v2812, 1.442695
    %v2814 = vpow.pop %v2813
    %v2815 = vsel %vm748, %v2814, 0.0
    %2816 = vadd.xlane.f32.xlu0 %v2815
    %v2817 = vpop.xlane.xlu0 %2816
    %v2818 = vrcp.pop %v2817
    %v2819 = vmul.f32 %v2814, %v2818
    %v2820 = vpack.c.bf16 %v2819, %v2819
    %v2822 = vsel %vm748, %v2820, 0
    %v2825 = vsel %vm764, %v2762, 0
    %2827 = vmatprep.subr.bf16.mxu0 0
    %2828 = vmatpush1.bf16.msra.mxu0 %v2825
    %2829 = vmatprep.subr.bf16.mxu0 0
    %2830 = vmatpush1.bf16.msra.mxu0 0
    %2831 = vmatprep.subr.bf16.mxu0 0
    %2832 = vmatpush1.bf16.msra.mxu0 0
    %2833 = vmatprep.subr.bf16.mxu0 0
    %2834 = vmatpush1.bf16.msra.mxu0 0
    %2835 = vmatprep.subr.bf16.mxu0 0
    %2836 = vmatpush1.bf16.msra.mxu0 0
    %2837 = vmatprep.subr.bf16.mxu0 0
    %2838 = vmatpush1.bf16.msra.mxu0 0
    %2839 = vmatprep.subr.bf16.mxu0 0
    %2840 = vmatpush1.bf16.msra.mxu0 0
    %2841 = vmatprep.subr.bf16.mxu0 0
    %2842 = vmatpush1.bf16.msra.mxu0 0
    %2843 = vmatprep.subr.bf16.mxu0 0
    %2844 = vmatpush1.bf16.msra.mxu0 0
    %2845 = vmatprep.subr.bf16.mxu0 0
    %2846 = vmatpush1.bf16.msra.mxu0 0
    %2847 = vmatprep.subr.bf16.mxu0 0
    %2848 = vmatpush1.bf16.msra.mxu0 0
    %2849 = vmatprep.subr.bf16.mxu0 0
    %2850 = vmatpush1.bf16.msra.mxu0 0
    %2851 = vmatprep.subr.bf16.mxu0 0
    %2852 = vmatpush1.bf16.msra.mxu0 0
    %2853 = vmatprep.subr.bf16.mxu0 0
    %2854 = vmatpush1.bf16.msra.mxu0 0
    %2855 = vmatprep.subr.bf16.mxu0 0
    %2856 = vmatpush1.bf16.msra.mxu0 0
    %2857 = vmatprep.subr.bf16.mxu0 0
    %2858 = vmatpush1.bf16.msra.mxu0 0
    %2859 = vmatprep.mubr.bf16.mxu0 0
    %2860 = vmatmul.mubr.bf16.gmra.mrb[0].mxu0 %v2822
    %v2861 = vpop.f32.mrb[0].mxu0
    %v2862 = vadd.f32 0.0, %v2861
    %v2863 = vpop.f32.mrb[0].mxu0
    %v2864 = vpop.f32.mrb[0].mxu0
    %v2865 = vpop.f32.mrb[0].mxu0
    %2866 = vdwg.mxu0
    %v2867 = vpack.c.bf16 %v2862, %v2862
    %v2868 = vld [vmem:[%s2182] sm:$0xf]
    %v2869 = vld [vmem:[%s2182 + $0x4] sm:$0xf]
    %v2870 = vld [vmem:[%s2182 + $0x8] sm:$0xf]
    %v2871 = vld [vmem:[%s2182 + $0xc] sm:$0xf]
    %2873 = vrot.lane.b32.xlu0 %v2760, 96
    %v2874 = vpop.permute.xlu0 %2873
    %2876 = vrot.lane.b32.xlu0 %v2761, 96
    %v2877 = vpop.permute.xlu0 %2876
    %v2879 = vsel %vm701, %v2874, 0
    %v2882 = vsel %vm701, %v2877, 0
    %2884 = vmatprep.subr.bf16.mxu0 0
    %2885 = vmatpush1.bf16.xpose.msra.mxu0 %v2882
    %2886 = vmatprep.subr.bf16.mxu0 0
    %2887 = vmatpush1.bf16.xpose.msra.mxu0 0
    %2888 = vmatprep.subr.bf16.mxu0 0
    %2889 = vmatpush1.bf16.xpose.msra.mxu0 0
    %2890 = vmatprep.subr.bf16.mxu0 0
    %2891 = vmatpush1.bf16.xpose.msra.mxu0 0
    %2892 = vmatprep.subr.bf16.mxu0 0
    %2893 = vmatpush1.bf16.xpose.msra.mxu0 0
    %2894 = vmatprep.subr.bf16.mxu0 0
    %2895 = vmatpush1.bf16.xpose.msra.mxu0 0
    %2896 = vmatprep.subr.bf16.mxu0 0
    %2897 = vmatpush1.bf16.xpose.msra.mxu0 0
    %2898 = vmatprep.subr.bf16.mxu0 0
    %2899 = vmatpush1.bf16.xpose.msra.mxu0 0
    %2900 = vmatprep.subr.bf16.mxu0 0
    %2901 = vmatpush1.bf16.xpose.msra.mxu0 0
    %2902 = vmatprep.subr.bf16.mxu0 0
    %2903 = vmatpush1.bf16.xpose.msra.mxu0 0
    %2904 = vmatprep.subr.bf16.mxu0 0
    %2905 = vmatpush1.bf16.xpose.msra.mxu0 0
    %2906 = vmatprep.subr.bf16.mxu0 0
    %2907 = vmatpush1.bf16.xpose.msra.mxu0 0
    %2908 = vmatprep.subr.bf16.mxu0 0
    %2909 = vmatpush1.bf16.xpose.msra.mxu0 0
    %2910 = vmatprep.subr.bf16.mxu0 0
    %2911 = vmatpush1.bf16.xpose.msra.mxu0 0
    %2912 = vmatprep.subr.bf16.mxu0 0
    %2913 = vmatpush1.bf16.xpose.msra.mxu0 0
    %2914 = vmatprep.subr.bf16.mxu0 0
    %2915 = vmatpush1.bf16.xpose.msra.mxu0 0
    %2916 = vmatprep.mubr.bf16.mxu0 0
    %2917 = vmatmul.mubr.bf16.gmra.mrb[0].mxu0 %v2879
    %v2918 = vpop.f32.mrb[0].mxu0
    %v2919 = vadd.f32 0.0, %v2918
    %v2920 = vpop.f32.mrb[0].mxu0
    %v2921 = vpop.f32.mrb[0].mxu0
    %v2922 = vpop.f32.mrb[0].mxu0
    %2923 = vdwg.mxu0
    %v2924 = vsel %vm748, %v2919, -inf
    %2925 = vmax.xlane.f32.xlu0 %v2924
    %v2926 = vpop.xlane.xlu0 %2925
    %v2927 = vsub.f32 %v2919, %v2926
    %v2928 = vmul.f32 %v2927, 1.442695
    %v2929 = vpow.pop %v2928
    %v2930 = vsel %vm748, %v2929, 0.0
    %2931 = vadd.xlane.f32.xlu0 %v2930
    %v2932 = vpop.xlane.xlu0 %2931
    %v2933 = vrcp.pop %v2932
    %v2934 = vmul.f32 %v2929, %v2933
    %v2935 = vpack.c.bf16 %v2934, %v2934
    %2937 = vrot.lane.b32.xlu0 %v2762, 96
    %v2938 = vpop.permute.xlu0 %2937
    %v2940 = vsel %vm748, %v2935, 0
    %v2943 = vsel %vm764, %v2938, 0
    %2945 = vmatprep.subr.bf16.mxu0 0
    %2946 = vmatpush1.bf16.msra.mxu0 %v2943
    %2947 = vmatprep.subr.bf16.mxu0 0
    %2948 = vmatpush1.bf16.msra.mxu0 0
    %2949 = vmatprep.subr.bf16.mxu0 0
    %2950 = vmatpush1.bf16.msra.mxu0 0
    %2951 = vmatprep.subr.bf16.mxu0 0
    %2952 = vmatpush1.bf16.msra.mxu0 0
    %2953 = vmatprep.subr.bf16.mxu0 0
    %2954 = vmatpush1.bf16.msra.mxu0 0
    %2955 = vmatprep.subr.bf16.mxu0 0
    %2956 = vmatpush1.bf16.msra.mxu0 0
    %2957 = vmatprep.subr.bf16.mxu0 0
    %2958 = vmatpush1.bf16.msra.mxu0 0
    %2959 = vmatprep.subr.bf16.mxu0 0
    %2960 = vmatpush1.bf16.msra.mxu0 0
    %2961 = vmatprep.subr.bf16.mxu0 0
    %2962 = vmatpush1.bf16.msra.mxu0 0
    %2963 = vmatprep.subr.bf16.mxu0 0
    %2964 = vmatpush1.bf16.msra.mxu0 0
    %2965 = vmatprep.subr.bf16.mxu0 0
    %2966 = vmatpush1.bf16.msra.mxu0 0
    %2967 = vmatprep.subr.bf16.mxu0 0
    %2968 = vmatpush1.bf16.msra.mxu0 0
    %2969 = vmatprep.subr.bf16.mxu0 0
    %2970 = vmatpush1.bf16.msra.mxu0 0
    %2971 = vmatprep.subr.bf16.mxu0 0
    %2972 = vmatpush1.bf16.msra.mxu0 0
    %2973 = vmatprep.subr.bf16.mxu0 0
    %2974 = vmatpush1.bf16.msra.mxu0 0
    %2975 = vmatprep.subr.bf16.mxu0 0
    %2976 = vmatpush1.bf16.msra.mxu0 0
    %2977 = vmatprep.mubr.bf16.mxu0 0
    %2978 = vmatmul.mubr.bf16.gmra.mrb[0].mxu0 %v2940
    %v2979 = vpop.f32.mrb[0].mxu0
    %v2980 = vadd.f32 0.0, %v2979
    %v2981 = vpop.f32.mrb[0].mxu0
    %v2982 = vpop.f32.mrb[0].mxu0
    %v2983 = vpop.f32.mrb[0].mxu0
    %2984 = vdwg.mxu0
    %v2985 = vpack.c.bf16 %v2980, %v2980
    %v2986 = vld [vmem:[%s2301] sm:$0xf]
    %v2987 = vld [vmem:[%s2301 + $0x4] sm:$0xf]
    %v2988 = vld [vmem:[%s2301 + $0x8] sm:$0xf]
    %v2989 = vld [vmem:[%s2301 + $0xc] sm:$0xf]
    %v2994 = vunpack.c.l.b16 %v2986
    %v2995 = vunpack.c.l.b16 %v2987
    %v2996 = vunpack.c.l.b16 %v2988
    %v2997 = vunpack.c.l.b16 %v2989
    %v2998 = vpack.c.b16 %v2995, %v2994
    %v2999 = vpack.c.b16 %v2997, %v2996
    %v3003 = vsel %vm701, %v2985, 0
    %3005 = vmatprep.subr.bf16.mxu0 0
    %3006 = vmatpush1.bf16.msra.mxu0 %v2998
    %3007 = vmatprep.subr.bf16.mxu0 0
    %3008 = vmatpush1.bf16.msra.mxu0 %v2999
    %3009 = vmatprep.subr.bf16.mxu0 0
    %3010 = vmatpush1.bf16.msra.mxu0 0
    %3011 = vmatprep.subr.bf16.mxu0 0
    %3012 = vmatpush1.bf16.msra.mxu0 0
    %3013 = vmatprep.subr.bf16.mxu0 0
    %3014 = vmatpush1.bf16.msra.mxu0 0
    %3015 = vmatprep.subr.bf16.mxu0 0
    %3016 = vmatpush1.bf16.msra.mxu0 0
    %3017 = vmatprep.subr.bf16.mxu0 0
    %3018 = vmatpush1.bf16.msra.mxu0 0
    %3019 = vmatprep.subr.bf16.mxu0 0
    %3020 = vmatpush1.bf16.msra.mxu0 0
    %3021 = vmatprep.subr.bf16.mxu0 0
    %3022 = vmatpush1.bf16.msra.mxu0 0
    %3023 = vmatprep.subr.bf16.mxu0 0
    %3024 = vmatpush1.bf16.msra.mxu0 0
    %3025 = vmatprep.subr.bf16.mxu0 0
    %3026 = vmatpush1.bf16.msra.mxu0 0
    %3027 = vmatprep.subr.bf16.mxu0 0
    %3028 = vmatpush1.bf16.msra.mxu0 0
    %3029 = vmatprep.subr.bf16.mxu0 0
    %3030 = vmatpush1.bf16.msra.mxu0 0
    %3031 = vmatprep.subr.bf16.mxu0 0
    %3032 = vmatpush1.bf16.msra.mxu0 0
    %3033 = vmatprep.subr.bf16.mxu0 0
    %3034 = vmatpush1.bf16.msra.mxu0 0
    %3035 = vmatprep.subr.bf16.mxu0 0
    %3036 = vmatpush1.bf16.msra.mxu0 0
    %3037 = vmatprep.mubr.bf16.mxu0 0
    %3038 = vmatmul.mubr.bf16.gmra.mrb[0].mxu0 %v3003
    %v3039 = vpop.f32.mrb[0].mxu0
    %v3040 = vadd.f32 0.0, %v3039
    %v3041 = vpop.f32.mrb[0].mxu0
    %v3042 = vpop.f32.mrb[0].mxu0
    %v3043 = vpop.f32.mrb[0].mxu0
    %3044 = vdwg.mxu0
    %v3049 = vunpack.c.l.b16 %v2868
    %v3050 = vunpack.c.l.b16 %v2869
    %v3051 = vunpack.c.l.b16 %v2870
    %v3052 = vunpack.c.l.b16 %v2871
    %v3053 = vpack.c.b16 %v3050, %v3049
    %v3054 = vpack.c.b16 %v3052, %v3051
    %v3058 = vsel %vm701, %v2867, 0
    %3060 = vmatprep.subr.bf16.mxu0 0
    %3061 = vmatpush1.bf16.msra.mxu0 %v3053
    %3062 = vmatprep.subr.bf16.mxu0 0
    %3063 = vmatpush1.bf16.msra.mxu0 %v3054
    %3064 = vmatprep.subr.bf16.mxu0 0
    %3065 = vmatpush1.bf16.msra.mxu0 0
    %3066 = vmatprep.subr.bf16.mxu0 0
    %3067 = vmatpush1.bf16.msra.mxu0 0
    %3068 = vmatprep.subr.bf16.mxu0 0
    %3069 = vmatpush1.bf16.msra.mxu0 0
    %3070 = vmatprep.subr.bf16.mxu0 0
    %3071 = vmatpush1.bf16.msra.mxu0 0
    %3072 = vmatprep.subr.bf16.mxu0 0
    %3073 = vmatpush1.bf16.msra.mxu0 0
    %3074 = vmatprep.subr.bf16.mxu0 0
    %3075 = vmatpush1.bf16.msra.mxu0 0
    %3076 = vmatprep.subr.bf16.mxu0 0
    %3077 = vmatpush1.bf16.msra.mxu0 0
    %3078 = vmatprep.subr.bf16.mxu0 0
    %3079 = vmatpush1.bf16.msra.mxu0 0
    %3080 = vmatprep.subr.bf16.mxu0 0
    %3081 = vmatpush1.bf16.msra.mxu0 0
    %3082 = vmatprep.subr.bf16.mxu0 0
    %3083 = vmatpush1.bf16.msra.mxu0 0
    %3084 = vmatprep.subr.bf16.mxu0 0
    %3085 = vmatpush1.bf16.msra.mxu0 0
    %3086 = vmatprep.subr.bf16.mxu0 0
    %3087 = vmatpush1.bf16.msra.mxu0 0
    %3088 = vmatprep.subr.bf16.mxu0 0
    %3089 = vmatpush1.bf16.msra.mxu0 0
    %3090 = vmatprep.subr.bf16.mxu0 0
    %3091 = vmatpush1.bf16.msra.mxu0 0
    %3092 = vmatprep.mubr.bf16.mxu0 0
    %3093 = vmatmul.mubr.bf16.gmra.mrb[0].mxu0 %v3058
    %v3094 = vpop.f32.mrb[0].mxu0
    %v3095 = vadd.f32 %v3040, %v3094
    %v3096 = vpop.f32.mrb[0].mxu0
    %v3097 = vpop.f32.mrb[0].mxu0
    %v3098 = vpop.f32.mrb[0].mxu0
    %3099 = vdwg.mxu0
    %3100 = vrot.lane.b32.xlu0 %v2760, 64
    %v3101 = vpop.permute.xlu0 %3100
    %3102 = vrot.lane.b32.xlu0 %v2761, 64
    %v3103 = vpop.permute.xlu0 %3102
    %v3105 = vsel %vm701, %v3101, 0
    %v3108 = vsel %vm701, %v3103, 0
    %3110 = vmatprep.subr.bf16.mxu0 0
    %3111 = vmatpush1.bf16.xpose.msra.mxu0 %v3108
    %3112 = vmatprep.subr.bf16.mxu0 0
    %3113 = vmatpush1.bf16.xpose.msra.mxu0 0
    %3114 = vmatprep.subr.bf16.mxu0 0
    %3115 = vmatpush1.bf16.xpose.msra.mxu0 0
    %3116 = vmatprep.subr.bf16.mxu0 0
    %3117 = vmatpush1.bf16.xpose.msra.mxu0 0
    %3118 = vmatprep.subr.bf16.mxu0 0
    %3119 = vmatpush1.bf16.xpose.msra.mxu0 0
    %3120 = vmatprep.subr.bf16.mxu0 0
    %3121 = vmatpush1.bf16.xpose.msra.mxu0 0
    %3122 = vmatprep.subr.bf16.mxu0 0
    %3123 = vmatpush1.bf16.xpose.msra.mxu0 0
    %3124 = vmatprep.subr.bf16.mxu0 0
    %3125 = vmatpush1.bf16.xpose.msra.mxu0 0
    %3126 = vmatprep.subr.bf16.mxu0 0
    %3127 = vmatpush1.bf16.xpose.msra.mxu0 0
    %3128 = vmatprep.subr.bf16.mxu0 0
    %3129 = vmatpush1.bf16.xpose.msra.mxu0 0
    %3130 = vmatprep.subr.bf16.mxu0 0
    %3131 = vmatpush1.bf16.xpose.msra.mxu0 0
    %3132 = vmatprep.subr.bf16.mxu0 0
    %3133 = vmatpush1.bf16.xpose.msra.mxu0 0
    %3134 = vmatprep.subr.bf16.mxu0 0
    %3135 = vmatpush1.bf16.xpose.msra.mxu0 0
    %3136 = vmatprep.subr.bf16.mxu0 0
    %3137 = vmatpush1.bf16.xpose.msra.mxu0 0
    %3138 = vmatprep.subr.bf16.mxu0 0
    %3139 = vmatpush1.bf16.xpose.msra.mxu0 0
    %3140 = vmatprep.subr.bf16.mxu0 0
    %3141 = vmatpush1.bf16.xpose.msra.mxu0 0
    %3142 = vmatprep.mubr.bf16.mxu0 0
    %3143 = vmatmul.mubr.bf16.gmra.mrb[0].mxu0 %v3105
    %v3144 = vpop.f32.mrb[0].mxu0
    %v3145 = vadd.f32 0.0, %v3144
    %v3146 = vpop.f32.mrb[0].mxu0
    %v3147 = vpop.f32.mrb[0].mxu0
    %v3148 = vpop.f32.mrb[0].mxu0
    %3149 = vdwg.mxu0
    %v3150 = vsel %vm748, %v3145, -inf
    %3151 = vmax.xlane.f32.xlu0 %v3150
    %v3152 = vpop.xlane.xlu0 %3151
    %v3153 = vsub.f32 %v3145, %v3152
    %v3154 = vmul.f32 %v3153, 1.442695
    %v3155 = vpow.pop %v3154
    %v3156 = vsel %vm748, %v3155, 0.0
    %3157 = vadd.xlane.f32.xlu0 %v3156
    %v3158 = vpop.xlane.xlu0 %3157
    %v3159 = vrcp.pop %v3158
    %v3160 = vmul.f32 %v3155, %v3159
    %v3161 = vpack.c.bf16 %v3160, %v3160
    %3162 = vrot.lane.b32.xlu0 %v2762, 64
    %v3163 = vpop.permute.xlu0 %3162
    %v3165 = vsel %vm748, %v3161, 0
    %v3168 = vsel %vm764, %v3163, 0
    %3170 = vmatprep.subr.bf16.mxu0 0
    %3171 = vmatpush1.bf16.msra.mxu0 %v3168
    %3172 = vmatprep.subr.bf16.mxu0 0
    %3173 = vmatpush1.bf16.msra.mxu0 0
    %3174 = vmatprep.subr.bf16.mxu0 0
    %3175 = vmatpush1.bf16.msra.mxu0 0
    %3176 = vmatprep.subr.bf16.mxu0 0
    %3177 = vmatpush1.bf16.msra.mxu0 0
    %3178 = vmatprep.subr.bf16.mxu0 0
    %3179 = vmatpush1.bf16.msra.mxu0 0
    %3180 = vmatprep.subr.bf16.mxu0 0
    %3181 = vmatpush1.bf16.msra.mxu0 0
    %3182 = vmatprep.subr.bf16.mxu0 0
    %3183 = vmatpush1.bf16.msra.mxu0 0
    %3184 = vmatprep.subr.bf16.mxu0 0
    %3185 = vmatpush1.bf16.msra.mxu0 0
    %3186 = vmatprep.subr.bf16.mxu0 0
    %3187 = vmatpush1.bf16.msra.mxu0 0
    %3188 = vmatprep.subr.bf16.mxu0 0
    %3189 = vmatpush1.bf16.msra.mxu0 0
    %3190 = vmatprep.subr.bf16.mxu0 0
    %3191 = vmatpush1.bf16.msra.mxu0 0
    %3192 = vmatprep.subr.bf16.mxu0 0
    %3193 = vmatpush1.bf16.msra.mxu0 0
    %3194 = vmatprep.subr.bf16.mxu0 0
    %3195 = vmatpush1.bf16.msra.mxu0 0
    %3196 = vmatprep.subr.bf16.mxu0 0
    %3197 = vmatpush1.bf16.msra.mxu0 0
    %3198 = vmatprep.subr.bf16.mxu0 0
    %3199 = vmatpush1.bf16.msra.mxu0 0
    %3200 = vmatprep.subr.bf16.mxu0 0
    %3201 = vmatpush1.bf16.msra.mxu0 0
    %3202 = vmatprep.mubr.bf16.mxu0 0
    %3203 = vmatmul.mubr.bf16.gmra.mrb[0].mxu0 %v3165
    %v3204 = vpop.f32.mrb[0].mxu0
    %v3205 = vadd.f32 0.0, %v3204
    %v3206 = vpop.f32.mrb[0].mxu0
    %v3207 = vpop.f32.mrb[0].mxu0
    %v3208 = vpop.f32.mrb[0].mxu0
    %3209 = vdwg.mxu0
    %v3210 = vpack.c.bf16 %v3205, %v3205
    %v3211 = vld [vmem:[%s2527] sm:$0xf]
    %v3212 = vld [vmem:[%s2527 + $0x4] sm:$0xf]
    %v3213 = vld [vmem:[%s2527 + $0x8] sm:$0xf]
    %v3214 = vld [vmem:[%s2527 + $0xc] sm:$0xf]
    %v3219 = vunpack.c.l.b16 %v3211
    %v3220 = vunpack.c.l.b16 %v3212
    %v3221 = vunpack.c.l.b16 %v3213
    %v3222 = vunpack.c.l.b16 %v3214
    %v3223 = vpack.c.b16 %v3220, %v3219
    %v3224 = vpack.c.b16 %v3222, %v3221
    %v3228 = vsel %vm701, %v3210, 0
    %3230 = vmatprep.subr.bf16.mxu0 0
    %3231 = vmatpush1.bf16.msra.mxu0 %v3223
    %3232 = vmatprep.subr.bf16.mxu0 0
    %3233 = vmatpush1.bf16.msra.mxu0 %v3224
    %3234 = vmatprep.subr.bf16.mxu0 0
    %3235 = vmatpush1.bf16.msra.mxu0 0
    %3236 = vmatprep.subr.bf16.mxu0 0
    %3237 = vmatpush1.bf16.msra.mxu0 0
    %3238 = vmatprep.subr.bf16.mxu0 0
    %3239 = vmatpush1.bf16.msra.mxu0 0
    %3240 = vmatprep.subr.bf16.mxu0 0
    %3241 = vmatpush1.bf16.msra.mxu0 0
    %3242 = vmatprep.subr.bf16.mxu0 0
    %3243 = vmatpush1.bf16.msra.mxu0 0
    %3244 = vmatprep.subr.bf16.mxu0 0
    %3245 = vmatpush1.bf16.msra.mxu0 0
    %3246 = vmatprep.subr.bf16.mxu0 0
    %3247 = vmatpush1.bf16.msra.mxu0 0
    %3248 = vmatprep.subr.bf16.mxu0 0
    %3249 = vmatpush1.bf16.msra.mxu0 0
    %3250 = vmatprep.subr.bf16.mxu0 0
    %3251 = vmatpush1.bf16.msra.mxu0 0
    %3252 = vmatprep.subr.bf16.mxu0 0
    %3253 = vmatpush1.bf16.msra.mxu0 0
    %3254 = vmatprep.subr.bf16.mxu0 0
    %3255 = vmatpush1.bf16.msra.mxu0 0
    %3256 = vmatprep.subr.bf16.mxu0 0
    %3257 = vmatpush1.bf16.msra.mxu0 0
    %3258 = vmatprep.subr.bf16.mxu0 0
    %3259 = vmatpush1.bf16.msra.mxu0 0
    %3260 = vmatprep.subr.bf16.mxu0 0
    %3261 = vmatpush1.bf16.msra.mxu0 0
    %3262 = vmatprep.mubr.bf16.mxu0 0
    %3263 = vmatmul.mubr.bf16.gmra.mrb[0].mxu0 %v3228
    %v3264 = vpop.f32.mrb[0].mxu0
    %v3265 = vadd.f32 0.0, %v3264
    %v3266 = vpop.f32.mrb[0].mxu0
    %v3267 = vpop.f32.mrb[0].mxu0
    %v3268 = vpop.f32.mrb[0].mxu0
    %3269 = vdwg.mxu0
    %v3270 = vadd.f32 %v3095, %v3265
    %3271 = vrot.lane.b32.xlu0 %v2760, 32
    %v3272 = vpop.permute.xlu0 %3271
    %3273 = vrot.lane.b32.xlu0 %v2761, 32
    %v3274 = vpop.permute.xlu0 %3273
    %v3276 = vsel %vm701, %v3272, 0
    %v3279 = vsel %vm701, %v3274, 0
    %3281 = vmatprep.subr.bf16.mxu0 0
    %3282 = vmatpush1.bf16.xpose.msra.mxu0 %v3279
    %3283 = vmatprep.subr.bf16.mxu0 0
    %3284 = vmatpush1.bf16.xpose.msra.mxu0 0
    %3285 = vmatprep.subr.bf16.mxu0 0
    %3286 = vmatpush1.bf16.xpose.msra.mxu0 0
    %3287 = vmatprep.subr.bf16.mxu0 0
    %3288 = vmatpush1.bf16.xpose.msra.mxu0 0
    %3289 = vmatprep.subr.bf16.mxu0 0
    %3290 = vmatpush1.bf16.xpose.msra.mxu0 0
    %3291 = vmatprep.subr.bf16.mxu0 0
    %3292 = vmatpush1.bf16.xpose.msra.mxu0 0
    %3293 = vmatprep.subr.bf16.mxu0 0
    %3294 = vmatpush1.bf16.xpose.msra.mxu0 0
    %3295 = vmatprep.subr.bf16.mxu0 0
    %3296 = vmatpush1.bf16.xpose.msra.mxu0 0
    %3297 = vmatprep.subr.bf16.mxu0 0
    %3298 = vmatpush1.bf16.xpose.msra.mxu0 0
    %3299 = vmatprep.subr.bf16.mxu0 0
    %3300 = vmatpush1.bf16.xpose.msra.mxu0 0
    %3301 = vmatprep.subr.bf16.mxu0 0
    %3302 = vmatpush1.bf16.xpose.msra.mxu0 0
    %3303 = vmatprep.subr.bf16.mxu0 0
    %3304 = vmatpush1.bf16.xpose.msra.mxu0 0
    %3305 = vmatprep.subr.bf16.mxu0 0
    %3306 = vmatpush1.bf16.xpose.msra.mxu0 0
    %3307 = vmatprep.subr.bf16.mxu0 0
    %3308 = vmatpush1.bf16.xpose.msra.mxu0 0
    %3309 = vmatprep.subr.bf16.mxu0 0
    %3310 = vmatpush1.bf16.xpose.msra.mxu0 0
    %3311 = vmatprep.subr.bf16.mxu0 0
    %3312 = vmatpush1.bf16.xpose.msra.mxu0 0
    %3313 = vmatprep.mubr.bf16.mxu0 0
    %3314 = vmatmul.mubr.bf16.gmra.mrb[0].mxu0 %v3276
    %v3315 = vpop.f32.mrb[0].mxu0
    %v3316 = vadd.f32 0.0, %v3315
    %v3317 = vpop.f32.mrb[0].mxu0
    %v3318 = vpop.f32.mrb[0].mxu0
    %v3319 = vpop.f32.mrb[0].mxu0
    %3320 = vdwg.mxu0
    %v3321 = vsel %vm748, %v3316, -inf
    %3322 = vmax.xlane.f32.xlu0 %v3321
    %v3323 = vpop.xlane.xlu0 %3322
    %v3324 = vsub.f32 %v3316, %v3323
    %v3325 = vmul.f32 %v3324, 1.442695
    %v3326 = vpow.pop %v3325
    %v3327 = vsel %vm748, %v3326, 0.0
    %3328 = vadd.xlane.f32.xlu0 %v3327
    %v3329 = vpop.xlane.xlu0 %3328
    %v3330 = vrcp.pop %v3329
    %v3331 = vmul.f32 %v3326, %v3330
    %v3332 = vpack.c.bf16 %v3331, %v3331
    %3333 = vrot.lane.b32.xlu0 %v2762, 32
    %v3334 = vpop.permute.xlu0 %3333
    %v3336 = vsel %vm748, %v3332, 0
    %v3339 = vsel %vm764, %v3334, 0
    %3341 = vmatprep.subr.bf16.mxu0 0
    %3342 = vmatpush1.bf16.msra.mxu0 %v3339
    %3343 = vmatprep.subr.bf16.mxu0 0
    %3344 = vmatpush1.bf16.msra.mxu0 0
    %3345 = vmatprep.subr.bf16.mxu0 0
    %3346 = vmatpush1.bf16.msra.mxu0 0
    %3347 = vmatprep.subr.bf16.mxu0 0
    %3348 = vmatpush1.bf16.msra.mxu0 0
    %3349 = vmatprep.subr.bf16.mxu0 0
    %3350 = vmatpush1.bf16.msra.mxu0 0
    %3351 = vmatprep.subr.bf16.mxu0 0
    %3352 = vmatpush1.bf16.msra.mxu0 0
    %3353 = vmatprep.subr.bf16.mxu0 0
    %3354 = vmatpush1.bf16.msra.mxu0 0
    %3355 = vmatprep.subr.bf16.mxu0 0
    %3356 = vmatpush1.bf16.msra.mxu0 0
    %3357 = vmatprep.subr.bf16.mxu0 0
    %3358 = vmatpush1.bf16.msra.mxu0 0
    %3359 = vmatprep.subr.bf16.mxu0 0
    %3360 = vmatpush1.bf16.msra.mxu0 0
    %3361 = vmatprep.subr.bf16.mxu0 0
    %3362 = vmatpush1.bf16.msra.mxu0 0
    %3363 = vmatprep.subr.bf16.mxu0 0
    %3364 = vmatpush1.bf16.msra.mxu0 0
    %3365 = vmatprep.subr.bf16.mxu0 0
    %3366 = vmatpush1.bf16.msra.mxu0 0
    %3367 = vmatprep.subr.bf16.mxu0 0
    %3368 = vmatpush1.bf16.msra.mxu0 0
    %3369 = vmatprep.subr.bf16.mxu0 0
    %3370 = vmatpush1.bf16.msra.mxu0 0
    %3371 = vmatprep.subr.bf16.mxu0 0
    %3372 = vmatpush1.bf16.msra.mxu0 0
    %3373 = vmatprep.mubr.bf16.mxu0 0
    %3374 = vmatmul.mubr.bf16.gmra.mrb[0].mxu0 %v3336
    %v3375 = vpop.f32.mrb[0].mxu0
    %v3376 = vadd.f32 0.0, %v3375
    %v3377 = vpop.f32.mrb[0].mxu0
    %v3378 = vpop.f32.mrb[0].mxu0
    %v3379 = vpop.f32.mrb[0].mxu0
    %3380 = vdwg.mxu0
    %v3381 = vpack.c.bf16 %v3376, %v3376
    %v3382 = vld [vmem:[%s2699] sm:$0xf]
    %v3383 = vld [vmem:[%s2699 + $0x4] sm:$0xf]
    %v3384 = vld [vmem:[%s2699 + $0x8] sm:$0xf]
    %v3385 = vld [vmem:[%s2699 + $0xc] sm:$0xf]
    %v3390 = vunpack.c.l.b16 %v3382
    %v3391 = vunpack.c.l.b16 %v3383
    %v3392 = vunpack.c.l.b16 %v3384
    %v3393 = vunpack.c.l.b16 %v3385
    %v3394 = vpack.c.b16 %v3391, %v3390
    %v3395 = vpack.c.b16 %v3393, %v3392
    %v3399 = vsel %vm701, %v3381, 0
    %3401 = vmatprep.subr.bf16.mxu0 0
    %3402 = vmatpush1.bf16.msra.mxu0 %v3394
    %3403 = vmatprep.subr.bf16.mxu0 0
    %3404 = vmatpush1.bf16.msra.mxu0 %v3395
    %3405 = vmatprep.subr.bf16.mxu0 0
    %3406 = vmatpush1.bf16.msra.mxu0 0
    %3407 = vmatprep.subr.bf16.mxu0 0
    %3408 = vmatpush1.bf16.msra.mxu0 0
    %3409 = vmatprep.subr.bf16.mxu0 0
    %3410 = vmatpush1.bf16.msra.mxu0 0
    %3411 = vmatprep.subr.bf16.mxu0 0
    %3412 = vmatpush1.bf16.msra.mxu0 0
    %3413 = vmatprep.subr.bf16.mxu0 0
    %3414 = vmatpush1.bf16.msra.mxu0 0
    %3415 = vmatprep.subr.bf16.mxu0 0
    %3416 = vmatpush1.bf16.msra.mxu0 0
    %3417 = vmatprep.subr.bf16.mxu0 0
    %3418 = vmatpush1.bf16.msra.mxu0 0
    %3419 = vmatprep.subr.bf16.mxu0 0
    %3420 = vmatpush1.bf16.msra.mxu0 0
    %3421 = vmatprep.subr.bf16.mxu0 0
    %3422 = vmatpush1.bf16.msra.mxu0 0
    %3423 = vmatprep.subr.bf16.mxu0 0
    %3424 = vmatpush1.bf16.msra.mxu0 0
    %3425 = vmatprep.subr.bf16.mxu0 0
    %3426 = vmatpush1.bf16.msra.mxu0 0
    %3427 = vmatprep.subr.bf16.mxu0 0
    %3428 = vmatpush1.bf16.msra.mxu0 0
    %3429 = vmatprep.subr.bf16.mxu0 0
    %3430 = vmatpush1.bf16.msra.mxu0 0
    %3431 = vmatprep.subr.bf16.mxu0 0
    %3432 = vmatpush1.bf16.msra.mxu0 0
    %3433 = vmatprep.mubr.bf16.mxu0 0
    %3434 = vmatmul.mubr.bf16.gmra.mrb[0].mxu0 %v3399
    %v3435 = vpop.f32.mrb[0].mxu0
    %v3436 = vadd.f32 0.0, %v3435
    %v3437 = vpop.f32.mrb[0].mxu0
    %v3438 = vpop.f32.mrb[0].mxu0
    %v3439 = vpop.f32.mrb[0].mxu0
    %3440 = vdwg.mxu0
    %v3441 = vadd.f32 %v3270, %v3436
    %v3442 = vlaneseq
    %v3443 = vshrl.u32 %v3442, 7
    %v3444 = vsub.s32 1, %v3443
    %v3445 = vrot.slane %v127, %v3444
    %v3446 = vadd.f32 %v2759, %v3445
    %v3447 = vadd.f32 %v3441, %v3445
    %v3448 = vadd.f32 %v122, %v2072
    %v3449 = vadd.f32 %v123, %v2073
    %v3450 = vadd.f32 %v124, %v3446
    %v3451 = vadd.f32 %v125, %v3447
    %3452 = vadd.xlane.f32.xlu0 %v3448
    %v3453 = vpop.xlane.xlu0 %3452
    %3454 = vadd.xlane.f32.xlu0 %v3449
    %v3455 = vpop.xlane.xlu0 %3454
    %v3456 = vmul.f32 %v3453, %v134
    %v3457 = vmul.f32 %v3455, %v134
    %v3458 = vmul.f32 %v3448, %v3448
    %v3459 = vmul.f32 %v3449, %v3449
    %3460 = vadd.xlane.f32.xlu0 %v3458
    %v3461 = vpop.xlane.xlu0 %3460
    %3462 = vadd.xlane.f32.xlu0 %v3459
    %v3463 = vpop.xlane.xlu0 %3462
    %v3464 = vmul.f32 %v3461, %v134
    %v3465 = vmul.f32 %v3463, %v134
    %v3466 = vmul.f32 %v3456, %v3456
    %v3467 = vmul.f32 %v3457, %v3457
    %v3468 = vsub.f32 %v3464, %v3466
    %v3469 = vsub.f32 %v3465, %v3467
    %v3470 = vsub.f32 %v3448, %v3456
    %v3471 = vsub.f32 %v3449, %v3457
    %v3472 = vadd.f32 %v3468, 1e-05
    %v3473 = vadd.f32 %v3469, 1e-05
    %v3474 = vrsqrt.pop %v3472
    %v3475 = vrsqrt.pop %v3473
    %v3476 = vmul.f32 %v3470, %v3474
    %v3477 = vmul.f32 %v3471, %v3475
    %v3478 = vlaneseq
    %v3479 = vshrl.u32 %v3478, 7
    %v3480 = vsub.s32 4, %v3479
    %v3481 = vrot.slane %v126, %v3480
    %v3482 = vmul.f32 %v3476, %v3481
    %v3483 = vmul.f32 %v3477, %v3481
    %v3484 = vlaneseq
    %v3485 = vshrl.u32 %v3484, 7
    %v3486 = vsub.s32 5, %v3485
    %v3487 = vrot.slane %v126, %v3486
    %v3488 = vadd.f32 %v3482, %v3487
    %v3489 = vadd.f32 %v3483, %v3487
    %3490 = vadd.xlane.f32.xlu0 %v3450
    %v3491 = vpop.xlane.xlu0 %3490
    %3492 = vadd.xlane.f32.xlu0 %v3451
    %v3493 = vpop.xlane.xlu0 %3492
    %v3494 = vmul.f32 %v3491, %v134
    %v3495 = vmul.f32 %v3493, %v134
    %v3496 = vmul.f32 %v3450, %v3450
    %v3497 = vmul.f32 %v3451, %v3451
    %3498 = vadd.xlane.f32.xlu0 %v3496
    %v3499 = vpop.xlane.xlu0 %3498
    %3500 = vadd.xlane.f32.xlu0 %v3497
    %v3501 = vpop.xlane.xlu0 %3500
    %v3502 = vmul.f32 %v3499, %v134
    %v3503 = vmul.f32 %v3501, %v134
    %v3504 = vmul.f32 %v3494, %v3494
    %v3505 = vmul.f32 %v3495, %v3495
    %v3506 = vsub.f32 %v3502, %v3504
    %v3507 = vsub.f32 %v3503, %v3505
    %v3508 = vsub.f32 %v3450, %v3494
    %v3509 = vsub.f32 %v3451, %v3495
    %v3510 = vadd.f32 %v3506, 1e-05
    %v3511 = vadd.f32 %v3507, 1e-05
    %v3512 = vrsqrt.pop %v3510
    %v3513 = vrsqrt.pop %v3511
    %v3514 = vmul.f32 %v3508, %v3512
    %v3515 = vmul.f32 %v3509, %v3513
    %v3516 = vlaneseq
    %v3517 = vshrl.u32 %v3516, 7
    %v3518 = vsub.s32 6, %v3517
    %v3519 = vrot.slane %v126, %v3518
    %v3520 = vmul.f32 %v3514, %v3519
    %v3521 = vmul.f32 %v3515, %v3519
    %v3522 = vlaneseq
    %v3523 = vshrl.u32 %v3522, 7
    %v3524 = vsub.s32 7, %v3523
    %v3525 = vrot.slane %v126, %v3524
    %v3526 = vadd.f32 %v3520, %v3525
    %v3527 = vadd.f32 %v3521, %v3525
    %v3528 = vpack.c.bf16 %v3489, %v3488
    %v3529 = vld [vmem:[#allocation10] sm:$0xff]
    %v3530 = vld [vmem:[#allocation10 + $0x8] sm:$0xff]
    %v3531 = vld [vmem:[#allocation10 + $0x10] sm:$0xff]
    %v3532 = vld [vmem:[#allocation10 + $0x18] sm:$0xff]
    %v3533 = vld [vmem:[#allocation10 + $0x20] sm:$0xff]
    %v3534 = vld [vmem:[#allocation10 + $0x28] sm:$0xff]
    %v3535 = vld [vmem:[#allocation10 + $0x30] sm:$0xff]
    %v3536 = vld [vmem:[#allocation10 + $0x38] sm:$0xff]
    %v3537 = vld [vmem:[#allocation10 + $0x40] sm:$0xff]
    %v3538 = vld [vmem:[#allocation10 + $0x48] sm:$0xff]
    %v3539 = vld [vmem:[#allocation10 + $0x50] sm:$0xff]
    %v3540 = vld [vmem:[#allocation10 + $0x58] sm:$0xff]
    %v3541 = vld [vmem:[#allocation10 + $0x60] sm:$0xff]
    %v3542 = vld [vmem:[#allocation10 + $0x68] sm:$0xff]
    %v3543 = vld [vmem:[#allocation10 + $0x70] sm:$0xff]
    %v3544 = vld [vmem:[#allocation10 + $0x78] sm:$0xff]
    %v3545 = vld [vmem:[#allocation10 + $0x80] sm:$0xff]
    %v3546 = vld [vmem:[#allocation10 + $0x88] sm:$0xff]
    %v3547 = vld [vmem:[#allocation10 + $0x90] sm:$0xff]
    %v3548 = vld [vmem:[#allocation10 + $0x98] sm:$0xff]
    %v3549 = vld [vmem:[#allocation10 + $0xa0] sm:$0xff]
    %v3550 = vld [vmem:[#allocation10 + $0xa8] sm:$0xff]
    %v3551 = vld [vmem:[#allocation10 + $0xb0] sm:$0xff]
    %v3552 = vld [vmem:[#allocation10 + $0xb8] sm:$0xff]
    %v3553 = vld [vmem:[#allocation10 + $0xc0] sm:$0xff]
    %v3554 = vld [vmem:[#allocation10 + $0xc8] sm:$0xff]
    %v3555 = vld [vmem:[#allocation10 + $0xd0] sm:$0xff]
    %v3556 = vld [vmem:[#allocation10 + $0xd8] sm:$0xff]
    %v3557 = vld [vmem:[#allocation10 + $0xe0] sm:$0xff]
    %v3558 = vld [vmem:[#allocation10 + $0xe8] sm:$0xff]
    %v3559 = vld [vmem:[#allocation10 + $0xf0] sm:$0xff]
    %v3560 = vld [vmem:[#allocation10 + $0xf8] sm:$0xff]
    %v3562 = vlaneseq
    %v3563 = vshrl.u32 %v3562, 7
    %v3564 = vsub.s32 0, %v3563
    %v3565 = vrot.slane %v128, %v3564
    %v3566 = vlaneseq
    %v3567 = vshrl.u32 %v3566, 7
    %v3568 = vsub.s32 2, %v3567
    %v3569 = vrot.slane %v128, %v3568
    %v3570 = vlaneseq
    %v3571 = vshrl.u32 %v3570, 7
    %v3572 = vsub.s32 4, %v3571
    %v3573 = vrot.slane %v128, %v3572
    %v3574 = vlaneseq
    %v3575 = vshrl.u32 %v3574, 7
    %v3576 = vsub.s32 6, %v3575
    %v3577 = vrot.slane %v128, %v3576
    %v3582 = vlaneseq
    %v3583 = vshrl.u32 %v3582, 7
    %v3584 = vsub.s32 0, %v3583
    %v3585 = vrot.slane %v3565, %v3584
    %v3586 = vlaneseq
    %v3587 = vshrl.u32 %v3586, 7
    %v3588 = vsub.s32 0, %v3587
    %v3589 = vrot.slane %v3569, %v3588
    %v3590 = vlaneseq
    %v3591 = vshrl.u32 %v3590, 7
    %v3592 = vsub.s32 0, %v3591
    %v3593 = vrot.slane %v3573, %v3592
    %v3594 = vlaneseq
    %v3595 = vshrl.u32 %v3594, 7
    %v3596 = vsub.s32 0, %v3595
    %v3597 = vrot.slane %v3577, %v3596
    %v3630 = vunpack.c.l.b16 %v3529
    %v3631 = vunpack.c.h.b16 %v3529
    %v3632 = vunpack.c.l.b16 %v3530
    %v3633 = vunpack.c.h.b16 %v3530
    %v3634 = vunpack.c.l.b16 %v3531
    %v3635 = vunpack.c.h.b16 %v3531
    %v3636 = vunpack.c.l.b16 %v3532
    %v3637 = vunpack.c.h.b16 %v3532
    %v3638 = vunpack.c.l.b16 %v3533
    %v3639 = vunpack.c.h.b16 %v3533
    %v3640 = vunpack.c.l.b16 %v3534
    %v3641 = vunpack.c.h.b16 %v3534
    %v3642 = vunpack.c.l.b16 %v3535
    %v3643 = vunpack.c.h.b16 %v3535
    %v3644 = vunpack.c.l.b16 %v3536
    %v3645 = vunpack.c.h.b16 %v3536
    %v3646 = vunpack.c.l.b16 %v3537
    %v3647 = vunpack.c.h.b16 %v3537
    %v3648 = vunpack.c.l.b16 %v3538
    %v3649 = vunpack.c.h.b16 %v3538
    %v3650 = vunpack.c.l.b16 %v3539
    %v3651 = vunpack.c.h.b16 %v3539
    %v3652 = vunpack.c.l.b16 %v3540
    %v3653 = vunpack.c.h.b16 %v3540
    %v3654 = vunpack.c.l.b16 %v3541
    %v3655 = vunpack.c.h.b16 %v3541
    %v3656 = vunpack.c.l.b16 %v3542
    %v3657 = vunpack.c.h.b16 %v3542
    %v3658 = vunpack.c.l.b16 %v3543
    %v3659 = vunpack.c.h.b16 %v3543
    %v3660 = vunpack.c.l.b16 %v3544
    %v3661 = vunpack.c.h.b16 %v3544
    %v3662 = vunpack.c.l.b16 %v3545
    %v3663 = vunpack.c.h.b16 %v3545
    %v3664 = vunpack.c.l.b16 %v3546
    %v3665 = vunpack.c.h.b16 %v3546
    %v3666 = vunpack.c.l.b16 %v3547
    %v3667 = vunpack.c.h.b16 %v3547
    %v3668 = vunpack.c.l.b16 %v3548
    %v3669 = vunpack.c.h.b16 %v3548
    %v3670 = vunpack.c.l.b16 %v3549
    %v3671 = vunpack.c.h.b16 %v3549
    %v3672 = vunpack.c.l.b16 %v3550
    %v3673 = vunpack.c.h.b16 %v3550
    %v3674 = vunpack.c.l.b16 %v3551
    %v3675 = vunpack.c.h.b16 %v3551
    %v3676 = vunpack.c.l.b16 %v3552
    %v3677 = vunpack.c.h.b16 %v3552
    %v3678 = vunpack.c.l.b16 %v3553
    %v3679 = vunpack.c.h.b16 %v3553
    %v3680 = vunpack.c.l.b16 %v3554
    %v3681 = vunpack.c.h.b16 %v3554
    %v3682 = vunpack.c.l.b16 %v3555
    %v3683 = vunpack.c.h.b16 %v3555
    %v3684 = vunpack.c.l.b16 %v3556
    %v3685 = vunpack.c.h.b16 %v3556
    %v3686 = vunpack.c.l.b16 %v3557
    %v3687 = vunpack.c.h.b16 %v3557
    %v3688 = vunpack.c.l.b16 %v3558
    %v3689 = vunpack.c.h.b16 %v3558
    %v3690 = vunpack.c.l.b16 %v3559
    %v3691 = vunpack.c.h.b16 %v3559
    %v3692 = vunpack.c.l.b16 %v3560
    %v3693 = vunpack.c.h.b16 %v3560
    %v3694 = vpack.c.b16 %v3634, %v3630
    %v3695 = vpack.c.b16 %v3635, %v3631
    %v3696 = vpack.c.b16 %v3636, %v3632
    %v3697 = vpack.c.b16 %v3637, %v3633
    %v3698 = vpack.c.b16 %v3642, %v3638
    %v3699 = vpack.c.b16 %v3643, %v3639
    %v3700 = vpack.c.b16 %v3644, %v3640
    %v3701 = vpack.c.b16 %v3645, %v3641
    %v3702 = vpack.c.b16 %v3650, %v3646
    %v3703 = vpack.c.b16 %v3651, %v3647
    %v3704 = vpack.c.b16 %v3652, %v3648
    %v3705 = vpack.c.b16 %v3653, %v3649
    %v3706 = vpack.c.b16 %v3658, %v3654
    %v3707 = vpack.c.b16 %v3659, %v3655
    %v3708 = vpack.c.b16 %v3660, %v3656
    %v3709 = vpack.c.b16 %v3661, %v3657
    %v3710 = vpack.c.b16 %v3666, %v3662
    %v3711 = vpack.c.b16 %v3667, %v3663
    %v3712 = vpack.c.b16 %v3668, %v3664
    %v3713 = vpack.c.b16 %v3669, %v3665
    %v3714 = vpack.c.b16 %v3674, %v3670
    %v3715 = vpack.c.b16 %v3675, %v3671
    %v3716 = vpack.c.b16 %v3676, %v3672
    %v3717 = vpack.c.b16 %v3677, %v3673
    %v3718 = vpack.c.b16 %v3682, %v3678
    %v3719 = vpack.c.b16 %v3683, %v3679
    %v3720 = vpack.c.b16 %v3684, %v3680
    %v3721 = vpack.c.b16 %v3685, %v3681
    %v3722 = vpack.c.b16 %v3690, %v3686
    %v3723 = vpack.c.b16 %v3691, %v3687
    %v3724 = vpack.c.b16 %v3692, %v3688
    %v3725 = vpack.c.b16 %v3693, %v3689
    %3758 = vmatprep.subr.bf16.mxu0 %v3695
    %3759 = vmatpush1.bf16.msra.mxu0 %v3694
    %3760 = vmatprep.subr.bf16.mxu0 %v3699
    %3761 = vmatpush1.bf16.msra.mxu0 %v3698
    %3762 = vmatprep.subr.bf16.mxu0 %v3703
    %3763 = vmatpush1.bf16.msra.mxu0 %v3702
    %3764 = vmatprep.subr.bf16.mxu0 %v3707
    %3765 = vmatpush1.bf16.msra.mxu0 %v3706
    %3766 = vmatprep.subr.bf16.mxu0 %v3711
    %3767 = vmatpush1.bf16.msra.mxu0 %v3710
    %3768 = vmatprep.subr.bf16.mxu0 %v3715
    %3769 = vmatpush1.bf16.msra.mxu0 %v3714
    %3770 = vmatprep.subr.bf16.mxu0 %v3719
    %3771 = vmatpush1.bf16.msra.mxu0 %v3718
    %3772 = vmatprep.subr.bf16.mxu0 %v3723
    %3773 = vmatpush1.bf16.msra.mxu0 %v3722
    %3774 = vmatprep.subr.bf16.mxu0 0
    %3775 = vmatpush1.bf16.msra.mxu0 0
    %3776 = vmatprep.subr.bf16.mxu0 0
    %3777 = vmatpush1.bf16.msra.mxu0 0
    %3778 = vmatprep.subr.bf16.mxu0 0
    %3779 = vmatpush1.bf16.msra.mxu0 0
    %3780 = vmatprep.subr.bf16.mxu0 0
    %3781 = vmatpush1.bf16.msra.mxu0 0
    %3782 = vmatprep.subr.bf16.mxu0 0
    %3783 = vmatpush1.bf16.msra.mxu0 0
    %3784 = vmatprep.subr.bf16.mxu0 0
    %3785 = vmatpush1.bf16.msra.mxu0 0
    %3786 = vmatprep.subr.bf16.mxu0 0
    %3787 = vmatpush1.bf16.msra.mxu0 0
    %3788 = vmatprep.subr.bf16.mxu0 0
    %3789 = vmatpush1.bf16.msra.mxu0 0
    %3790 = vmatprep.mubr.bf16.mxu0 0
    %3791 = vmatmul.mubr.bf16.gmra.mrb[0].mxu0 %v3528
    %v3792 = vpop.f32.mrb[0].mxu0
    %v3793 = vadd.f32 %v3585, %v3792
    %v3794 = vpop.f32.mrb[0].mxu0
    %v3795 = vadd.f32 %v3589, %v3794
    %v3796 = vpop.f32.mrb[0].mxu0
    %v3797 = vadd.f32 %v3585, %v3796
    %v3798 = vpop.f32.mrb[0].mxu0
    %v3799 = vadd.f32 %v3589, %v3798
    %3800 = vdwg.mxu0
    %3801 = vmatprep.subr.bf16.mxu0 %v3697
    %3802 = vmatpush1.bf16.msra.mxu0 %v3696
    %3803 = vmatprep.subr.bf16.mxu0 %v3701
    %3804 = vmatpush1.bf16.msra.mxu0 %v3700
    %3805 = vmatprep.subr.bf16.mxu0 %v3705
    %3806 = vmatpush1.bf16.msra.mxu0 %v3704
    %3807 = vmatprep.subr.bf16.mxu0 %v3709
    %3808 = vmatpush1.bf16.msra.mxu0 %v3708
    %3809 = vmatprep.subr.bf16.mxu0 %v3713
    %3810 = vmatpush1.bf16.msra.mxu0 %v3712
    %3811 = vmatprep.subr.bf16.mxu0 %v3717
    %3812 = vmatpush1.bf16.msra.mxu0 %v3716
    %3813 = vmatprep.subr.bf16.mxu0 %v3721
    %3814 = vmatpush1.bf16.msra.mxu0 %v3720
    %3815 = vmatprep.subr.bf16.mxu0 %v3725
    %3816 = vmatpush1.bf16.msra.mxu0 %v3724
    %3817 = vmatprep.subr.bf16.mxu0 0
    %3818 = vmatpush1.bf16.msra.mxu0 0
    %3819 = vmatprep.subr.bf16.mxu0 0
    %3820 = vmatpush1.bf16.msra.mxu0 0
    %3821 = vmatprep.subr.bf16.mxu0 0
    %3822 = vmatpush1.bf16.msra.mxu0 0
    %3823 = vmatprep.subr.bf16.mxu0 0
    %3824 = vmatpush1.bf16.msra.mxu0 0
    %3825 = vmatprep.subr.bf16.mxu0 0
    %3826 = vmatpush1.bf16.msra.mxu0 0
    %3827 = vmatprep.subr.bf16.mxu0 0
    %3828 = vmatpush1.bf16.msra.mxu0 0
    %3829 = vmatprep.subr.bf16.mxu0 0
    %3830 = vmatpush1.bf16.msra.mxu0 0
    %3831 = vmatprep.subr.bf16.mxu0 0
    %3832 = vmatpush1.bf16.msra.mxu0 0
    %3833 = vmatprep.mubr.bf16.mxu0 0
    %3834 = vmatmul.mubr.bf16.gmra.mrb[0].mxu0 %v3528
    %v3835 = vpop.f32.mrb[0].mxu0
    %v3836 = vadd.f32 %v3593, %v3835
    %v3837 = vpop.f32.mrb[0].mxu0
    %v3838 = vadd.f32 %v3597, %v3837
    %v3839 = vpop.f32.mrb[0].mxu0
    %v3840 = vadd.f32 %v3593, %v3839
    %v3841 = vpop.f32.mrb[0].mxu0
    %v3842 = vadd.f32 %v3597, %v3841
    %3843 = vdwg.mxu0
    %v3844 = vmul.f32 %v3793, 0.5
    %v3845 = vmul.f32 %v3795, 0.5
    %v3846 = vmul.f32 %v3836, 0.5
    %v3847 = vmul.f32 %v3838, 0.5
    %v3848 = vmul.f32 %v3797, 0.5
    %v3849 = vmul.f32 %v3799, 0.5
    %v3850 = vmul.f32 %v3840, 0.5
    %v3851 = vmul.f32 %v3842, 0.5
    %v3852 = vmul.f32 %v3793, 0.044715
    %v3853 = vmul.f32 %v3795, 0.044715
    %v3854 = vmul.f32 %v3836, 0.044715
    %v3855 = vmul.f32 %v3838, 0.044715
    %v3856 = vmul.f32 %v3797, 0.044715
    %v3857 = vmul.f32 %v3799, 0.044715
    %v3858 = vmul.f32 %v3840, 0.044715
    %v3859 = vmul.f32 %v3842, 0.044715
    %v3860 = vmul.f32 %v3852, %v3793
    %v3861 = vmul.f32 %v3853, %v3795
    %v3862 = vmul.f32 %v3854, %v3836
    %v3863 = vmul.f32 %v3855, %v3838
    %v3864 = vmul.f32 %v3856, %v3797
    %v3865 = vmul.f32 %v3857, %v3799
    %v3866 = vmul.f32 %v3858, %v3840
    %v3867 = vmul.f32 %v3859, %v3842
    %v3868 = vmul.f32 %v3860, %v3793
    %v3869 = vmul.f32 %v3861, %v3795
    %v3870 = vmul.f32 %v3862, %v3836
    %v3871 = vmul.f32 %v3863, %v3838
    %v3872 = vmul.f32 %v3864, %v3797
    %v3873 = vmul.f32 %v3865, %v3799
    %v3874 = vmul.f32 %v3866, %v3840
    %v3875 = vmul.f32 %v3867, %v3842
    %v3876 = vadd.f32 %v3793, %v3868
    %v3877 = vadd.f32 %v3795, %v3869
    %v3878 = vadd.f32 %v3836, %v3870
    %v3879 = vadd.f32 %v3838, %v3871
    %v3880 = vadd.f32 %v3797, %v3872
    %v3881 = vadd.f32 %v3799, %v3873
    %v3882 = vadd.f32 %v3840, %v3874
    %v3883 = vadd.f32 %v3842, %v3875
    %v3884 = vmul.f32 %v3876, 0.7978846
    %v3885 = vmul.f32 %v3877, 0.7978846
    %v3886 = vmul.f32 %v3878, 0.7978846
    %v3887 = vmul.f32 %v3879, 0.7978846
    %v3888 = vmul.f32 %v3880, 0.7978846
    %v3889 = vmul.f32 %v3881, 0.7978846
    %v3890 = vmul.f32 %v3882, 0.7978846
    %v3891 = vmul.f32 %v3883, 0.7978846
    %v3892 = vtanh.pop %v3884
    %v3893 = vtanh.pop %v3885
    %v3894 = vtanh.pop %v3886
    %v3895 = vtanh.pop %v3887
    %v3896 = vtanh.pop %v3888
    %v3897 = vtanh.pop %v3889
    %v3898 = vtanh.pop %v3890
    %v3899 = vtanh.pop %v3891
    %v3900 = vadd.f32 %v3892, 1.0
    %v3901 = vadd.f32 %v3893, 1.0
    %v3902 = vadd.f32 %v3894, 1.0
    %v3903 = vadd.f32 %v3895, 1.0
    %v3904 = vadd.f32 %v3896, 1.0
    %v3905 = vadd.f32 %v3897, 1.0
    %v3906 = vadd.f32 %v3898, 1.0
    %v3907 = vadd.f32 %v3899, 1.0
    %v3908 = vmul.f32 %v3844, %v3900
    %v3909 = vmul.f32 %v3845, %v3901
    %v3910 = vmul.f32 %v3846, %v3902
    %v3911 = vmul.f32 %v3847, %v3903
    %v3912 = vmul.f32 %v3848, %v3904
    %v3913 = vmul.f32 %v3849, %v3905
    %v3914 = vmul.f32 %v3850, %v3906
    %v3915 = vmul.f32 %v3851, %v3907
    %v3916 = vpack.c.bf16 %v3912, %v3908
    %v3917 = vpack.c.bf16 %v3913, %v3909
    %v3918 = vpack.c.bf16 %v3914, %v3910
    %v3919 = vpack.c.bf16 %v3915, %v3911
    %v3920 = vld [vmem:[#allocation11] sm:$0xf]
    %v3921 = vld [vmem:[#allocation11 + $0x4] sm:$0xf]
    %v3922 = vld [vmem:[#allocation11 + $0x8] sm:$0xf]
    %v3923 = vld [vmem:[#allocation11 + $0xc] sm:$0xf]
    %v3924 = vld [vmem:[#allocation11 + $0x10] sm:$0xf]
    %v3925 = vld [vmem:[#allocation11 + $0x14] sm:$0xf]
    %v3926 = vld [vmem:[#allocation11 + $0x18] sm:$0xf]
    %v3927 = vld [vmem:[#allocation11 + $0x1c] sm:$0xf]
    %v3928 = vld [vmem:[#allocation11 + $0x20] sm:$0xf]
    %v3929 = vld [vmem:[#allocation11 + $0x24] sm:$0xf]
    %v3930 = vld [vmem:[#allocation11 + $0x28] sm:$0xf]
    %v3931 = vld [vmem:[#allocation11 + $0x2c] sm:$0xf]
    %v3932 = vld [vmem:[#allocation11 + $0x30] sm:$0xf]
    %v3933 = vld [vmem:[#allocation11 + $0x34] sm:$0xf]
    %v3934 = vld [vmem:[#allocation11 + $0x38] sm:$0xf]
    %v3935 = vld [vmem:[#allocation11 + $0x3c] sm:$0xf]
    %v3936 = vld [vmem:[#allocation11 + $0x40] sm:$0xf]
    %v3937 = vld [vmem:[#allocation11 + $0x44] sm:$0xf]
    %v3938 = vld [vmem:[#allocation11 + $0x48] sm:$0xf]
    %v3939 = vld [vmem:[#allocation11 + $0x4c] sm:$0xf]
    %v3940 = vld [vmem:[#allocation11 + $0x50] sm:$0xf]
    %v3941 = vld [vmem:[#allocation11 + $0x54] sm:$0xf]
    %v3942 = vld [vmem:[#allocation11 + $0x58] sm:$0xf]
    %v3943 = vld [vmem:[#allocation11 + $0x5c] sm:$0xf]
    %v3944 = vld [vmem:[#allocation11 + $0x60] sm:$0xf]
    %v3945 = vld [vmem:[#allocation11 + $0x64] sm:$0xf]
    %v3946 = vld [vmem:[#allocation11 + $0x68] sm:$0xf]
    %v3947 = vld [vmem:[#allocation11 + $0x6c] sm:$0xf]
    %v3948 = vld [vmem:[#allocation11 + $0x70] sm:$0xf]
    %v3949 = vld [vmem:[#allocation11 + $0x74] sm:$0xf]
    %v3950 = vld [vmem:[#allocation11 + $0x78] sm:$0xf]
    %v3951 = vld [vmem:[#allocation11 + $0x7c] sm:$0xf]
    %v3952 = vld [vmem:[#allocation11 + $0x80] sm:$0xf]
    %v3953 = vld [vmem:[#allocation11 + $0x84] sm:$0xf]
    %v3954 = vld [vmem:[#allocation11 + $0x88] sm:$0xf]
    %v3955 = vld [vmem:[#allocation11 + $0x8c] sm:$0xf]
    %v3956 = vld [vmem:[#allocation11 + $0x90] sm:$0xf]
    %v3957 = vld [vmem:[#allocation11 + $0x94] sm:$0xf]
    %v3958 = vld [vmem:[#allocation11 + $0x98] sm:$0xf]
    %v3959 = vld [vmem:[#allocation11 + $0x9c] sm:$0xf]
    %v3960 = vld [vmem:[#allocation11 + $0xa0] sm:$0xf]
    %v3961 = vld [vmem:[#allocation11 + $0xa4] sm:$0xf]
    %v3962 = vld [vmem:[#allocation11 + $0xa8] sm:$0xf]
    %v3963 = vld [vmem:[#allocation11 + $0xac] sm:$0xf]
    %v3964 = vld [vmem:[#allocation11 + $0xb0] sm:$0xf]
    %v3965 = vld [vmem:[#allocation11 + $0xb4] sm:$0xf]
    %v3966 = vld [vmem:[#allocation11 + $0xb8] sm:$0xf]
    %v3967 = vld [vmem:[#allocation11 + $0xbc] sm:$0xf]
    %v3968 = vld [vmem:[#allocation11 + $0xc0] sm:$0xf]
    %v3969 = vld [vmem:[#allocation11 + $0xc4] sm:$0xf]
    %v3970 = vld [vmem:[#allocation11 + $0xc8] sm:$0xf]
    %v3971 = vld [vmem:[#allocation11 + $0xcc] sm:$0xf]
    %v3972 = vld [vmem:[#allocation11 + $0xd0] sm:$0xf]
    %v3973 = vld [vmem:[#allocation11 + $0xd4] sm:$0xf]
    %v3974 = vld [vmem:[#allocation11 + $0xd8] sm:$0xf]
    %v3975 = vld [vmem:[#allocation11 + $0xdc] sm:$0xf]
    %v3976 = vld [vmem:[#allocation11 + $0xe0] sm:$0xf]
    %v3977 = vld [vmem:[#allocation11 + $0xe4] sm:$0xf]
    %v3978 = vld [vmem:[#allocation11 + $0xe8] sm:$0xf]
    %v3979 = vld [vmem:[#allocation11 + $0xec] sm:$0xf]
    %v3980 = vld [vmem:[#allocation11 + $0xf0] sm:$0xf]
    %v3981 = vld [vmem:[#allocation11 + $0xf4] sm:$0xf]
    %v3982 = vld [vmem:[#allocation11 + $0xf8] sm:$0xf]
    %v3983 = vld [vmem:[#allocation11 + $0xfc] sm:$0xf]
    %v3984 = vlaneseq
    %v3985 = vshrl.u32 %v3984, 7
    %v3986 = vsub.s32 0, %v3985
    %v3987 = vrot.slane %v129, %v3986
    %v4052 = vunpack.c.l.b16 %v3920
    %v4053 = vunpack.c.l.b16 %v3921
    %v4054 = vunpack.c.l.b16 %v3922
    %v4055 = vunpack.c.l.b16 %v3923
    %v4056 = vunpack.c.l.b16 %v3924
    %v4057 = vunpack.c.l.b16 %v3925
    %v4058 = vunpack.c.l.b16 %v3926
    %v4059 = vunpack.c.l.b16 %v3927
    %v4060 = vunpack.c.l.b16 %v3928
    %v4061 = vunpack.c.l.b16 %v3929
    %v4062 = vunpack.c.l.b16 %v3930
    %v4063 = vunpack.c.l.b16 %v3931
    %v4064 = vunpack.c.l.b16 %v3932
    %v4065 = vunpack.c.l.b16 %v3933
    %v4066 = vunpack.c.l.b16 %v3934
    %v4067 = vunpack.c.l.b16 %v3935
    %v4068 = vunpack.c.l.b16 %v3936
    %v4069 = vunpack.c.l.b16 %v3937
    %v4070 = vunpack.c.l.b16 %v3938
    %v4071 = vunpack.c.l.b16 %v3939
    %v4072 = vunpack.c.l.b16 %v3940
    %v4073 = vunpack.c.l.b16 %v3941
    %v4074 = vunpack.c.l.b16 %v3942
    %v4075 = vunpack.c.l.b16 %v3943
    %v4076 = vunpack.c.l.b16 %v3944
    %v4077 = vunpack.c.l.b16 %v3945
    %v4078 = vunpack.c.l.b16 %v3946
    %v4079 = vunpack.c.l.b16 %v3947
    %v4080 = vunpack.c.l.b16 %v3948
    %v4081 = vunpack.c.l.b16 %v3949
    %v4082 = vunpack.c.l.b16 %v3950
    %v4083 = vunpack.c.l.b16 %v3951
    %v4084 = vunpack.c.l.b16 %v3952
    %v4085 = vunpack.c.l.b16 %v3953
    %v4086 = vunpack.c.l.b16 %v3954
    %v4087 = vunpack.c.l.b16 %v3955
    %v4088 = vunpack.c.l.b16 %v3956
    %v4089 = vunpack.c.l.b16 %v3957
    %v4090 = vunpack.c.l.b16 %v3958
    %v4091 = vunpack.c.l.b16 %v3959
    %v4092 = vunpack.c.l.b16 %v3960
    %v4093 = vunpack.c.l.b16 %v3961
    %v4094 = vunpack.c.l.b16 %v3962
    %v4095 = vunpack.c.l.b16 %v3963
    %v4096 = vunpack.c.l.b16 %v3964
    %v4097 = vunpack.c.l.b16 %v3965
    %v4098 = vunpack.c.l.b16 %v3966
    %v4099 = vunpack.c.l.b16 %v3967
    %v4100 = vunpack.c.l.b16 %v3968
    %v4101 = vunpack.c.l.b16 %v3969
    %v4102 = vunpack.c.l.b16 %v3970
    %v4103 = vunpack.c.l.b16 %v3971
    %v4104 = vunpack.c.l.b16 %v3972
    %v4105 = vunpack.c.l.b16 %v3973
    %v4106 = vunpack.c.l.b16 %v3974
    %v4107 = vunpack.c.l.b16 %v3975
    %v4108 = vunpack.c.l.b16 %v3976
    %v4109 = vunpack.c.l.b16 %v3977
    %v4110 = vunpack.c.l.b16 %v3978
    %v4111 = vunpack.c.l.b16 %v3979
    %v4112 = vunpack.c.l.b16 %v3980
    %v4113 = vunpack.c.l.b16 %v3981
    %v4114 = vunpack.c.l.b16 %v3982
    %v4115 = vunpack.c.l.b16 %v3983
    %v4116 = vpack.c.b16 %v4053, %v4052
    %v4117 = vpack.c.b16 %v4055, %v4054
    %v4118 = vpack.c.b16 %v4057, %v4056
    %v4119 = vpack.c.b16 %v4059, %v4058
    %v4120 = vpack.c.b16 %v4061, %v4060
    %v4121 = vpack.c.b16 %v4063, %v4062
    %v4122 = vpack.c.b16 %v4065, %v4064
    %v4123 = vpack.c.b16 %v4067, %v4066
    %v4124 = vpack.c.b16 %v4069, %v4068
    %v4125 = vpack.c.b16 %v4071, %v4070
    %v4126 = vpack.c.b16 %v4073, %v4072
    %v4127 = vpack.c.b16 %v4075, %v4074
    %v4128 = vpack.c.b16 %v4077, %v4076
    %v4129 = vpack.c.b16 %v4079, %v4078
    %v4130 = vpack.c.b16 %v4081, %v4080
    %v4131 = vpack.c.b16 %v4083, %v4082
    %v4132 = vpack.c.b16 %v4085, %v4084
    %v4133 = vpack.c.b16 %v4087, %v4086
    %v4134 = vpack.c.b16 %v4089, %v4088
    %v4135 = vpack.c.b16 %v4091, %v4090
    %v4136 = vpack.c.b16 %v4093, %v4092
    %v4137 = vpack.c.b16 %v4095, %v4094
    %v4138 = vpack.c.b16 %v4097, %v4096
    %v4139 = vpack.c.b16 %v4099, %v4098
    %v4140 = vpack.c.b16 %v4101, %v4100
    %v4141 = vpack.c.b16 %v4103, %v4102
    %v4142 = vpack.c.b16 %v4105, %v4104
    %v4143 = vpack.c.b16 %v4107, %v4106
    %v4144 = vpack.c.b16 %v4109, %v4108
    %v4145 = vpack.c.b16 %v4111, %v4110
    %v4146 = vpack.c.b16 %v4113, %v4112
    %v4147 = vpack.c.b16 %v4115, %v4114
    %4180 = vmatprep.subr.bf16.mxu0 0
    %4181 = vmatpush1.bf16.msra.mxu0 %v4116
    %4182 = vmatprep.subr.bf16.mxu0 0
    %4183 = vmatpush1.bf16.msra.mxu0 %v4117
    %4184 = vmatprep.subr.bf16.mxu0 0
    %4185 = vmatpush1.bf16.msra.mxu0 %v4118
    %4186 = vmatprep.subr.bf16.mxu0 0
    %4187 = vmatpush1.bf16.msra.mxu0 %v4119
    %4188 = vmatprep.subr.bf16.mxu0 0
    %4189 = vmatpush1.bf16.msra.mxu0 %v4120
    %4190 = vmatprep.subr.bf16.mxu0 0
    %4191 = vmatpush1.bf16.msra.mxu0 %v4121
    %4192 = vmatprep.subr.bf16.mxu0 0
    %4193 = vmatpush1.bf16.msra.mxu0 %v4122
    %4194 = vmatprep.subr.bf16.mxu0 0
    %4195 = vmatpush1.bf16.msra.mxu0 %v4123
    %4196 = vmatprep.subr.bf16.mxu0 0
    %4197 = vmatpush1.bf16.msra.mxu0 %v4124
    %4198 = vmatprep.subr.bf16.mxu0 0
    %4199 = vmatpush1.bf16.msra.mxu0 %v4125
    %4200 = vmatprep.subr.bf16.mxu0 0
    %4201 = vmatpush1.bf16.msra.mxu0 %v4126
    %4202 = vmatprep.subr.bf16.mxu0 0
    %4203 = vmatpush1.bf16.msra.mxu0 %v4127
    %4204 = vmatprep.subr.bf16.mxu0 0
    %4205 = vmatpush1.bf16.msra.mxu0 %v4128
    %4206 = vmatprep.subr.bf16.mxu0 0
    %4207 = vmatpush1.bf16.msra.mxu0 %v4129
    %4208 = vmatprep.subr.bf16.mxu0 0
    %4209 = vmatpush1.bf16.msra.mxu0 %v4130
    %4210 = vmatprep.subr.bf16.mxu0 0
    %4211 = vmatpush1.bf16.msra.mxu0 %v4131
    %4212 = vmatprep.mubr.bf16.mxu0 %v3917
    %4213 = vmatmul.mubr.bf16.gmra.mrb[0].mxu0 %v3916
    %v4214 = vpop.f32.mrb[0].mxu0
    %v4215 = vadd.f32 %v3987, %v4214
    %v4216 = vpop.f32.mrb[0].mxu0
    %v4217 = vpop.f32.mrb[0].mxu0
    %v4218 = vadd.f32 %v3987, %v4217
    %v4219 = vpop.f32.mrb[0].mxu0
    %4220 = vdwg.mxu0
    %4221 = vmatprep.subr.bf16.mxu0 0
    %4222 = vmatpush1.bf16.msra.mxu0 %v4132
    %4223 = vmatprep.subr.bf16.mxu0 0
    %4224 = vmatpush1.bf16.msra.mxu0 %v4133
    %4225 = vmatprep.subr.bf16.mxu0 0
    %4226 = vmatpush1.bf16.msra.mxu0 %v4134
    %4227 = vmatprep.subr.bf16.mxu0 0
    %4228 = vmatpush1.bf16.msra.mxu0 %v4135
    %4229 = vmatprep.subr.bf16.mxu0 0
    %4230 = vmatpush1.bf16.msra.mxu0 %v4136
    %4231 = vmatprep.subr.bf16.mxu0 0
    %4232 = vmatpush1.bf16.msra.mxu0 %v4137
    %4233 = vmatprep.subr.bf16.mxu0 0
    %4234 = vmatpush1.bf16.msra.mxu0 %v4138
    %4235 = vmatprep.subr.bf16.mxu0 0
    %4236 = vmatpush1.bf16.msra.mxu0 %v4139
    %4237 = vmatprep.subr.bf16.mxu0 0
    %4238 = vmatpush1.bf16.msra.mxu0 %v4140
    %4239 = vmatprep.subr.bf16.mxu0 0
    %4240 = vmatpush1.bf16.msra.mxu0 %v4141
    %4241 = vmatprep.subr.bf16.mxu0 0
    %4242 = vmatpush1.bf16.msra.mxu0 %v4142
    %4243 = vmatprep.subr.bf16.mxu0 0
    %4244 = vmatpush1.bf16.msra.mxu0 %v4143
    %4245 = vmatprep.subr.bf16.mxu0 0
    %4246 = vmatpush1.bf16.msra.mxu0 %v4144
    %4247 = vmatprep.subr.bf16.mxu0 0
    %4248 = vmatpush1.bf16.msra.mxu0 %v4145
    %4249 = vmatprep.subr.bf16.mxu0 0
    %4250 = vmatpush1.bf16.msra.mxu0 %v4146
    %4251 = vmatprep.subr.bf16.mxu0 0
    %4252 = vmatpush1.bf16.msra.mxu0 %v4147
    %4253 = vmatprep.mubr.bf16.mxu0 %v3919
    %4254 = vmatmul.mubr.bf16.gmra.mrb[0].mxu0 %v3918
    %v4255 = vpop.f32.mrb[0].mxu0
    %v4256 = vadd.f32 %v4215, %v4255
    %v4257 = vpop.f32.mrb[0].mxu0
    %v4258 = vpop.f32.mrb[0].mxu0
    %v4259 = vadd.f32 %v4218, %v4258
    %v4260 = vpop.f32.mrb[0].mxu0
    %4261 = vdwg.mxu0
    %v4262 = vadd.f32 %v3448, %v4256
    %v4263 = vadd.f32 %v3449, %v4259
    %4264 = vst [vmem:[#allocation13] sm:$0xff] %v4262
    %4265 = vst [vmem:[#allocation13 + $0x8] sm:$0xff] %v4263
    %v4266 = vpack.c.bf16 %v3527, %v3526
    %s4267 = scalar_lea.vmem [#allocation10], 256
    %v4268 = vld [vmem:[%s4267] sm:$0xff]
    %v4269 = vld [vmem:[%s4267 + $0x8] sm:$0xff]
    %v4270 = vld [vmem:[%s4267 + $0x10] sm:$0xff]
    %v4271 = vld [vmem:[%s4267 + $0x18] sm:$0xff]
    %v4272 = vld [vmem:[%s4267 + $0x20] sm:$0xff]
    %v4273 = vld [vmem:[%s4267 + $0x28] sm:$0xff]
    %v4274 = vld [vmem:[%s4267 + $0x30] sm:$0xff]
    %v4275 = vld [vmem:[%s4267 + $0x38] sm:$0xff]
    %v4276 = vld [vmem:[%s4267 + $0x40] sm:$0xff]
    %v4277 = vld [vmem:[%s4267 + $0x48] sm:$0xff]
    %v4278 = vld [vmem:[%s4267 + $0x50] sm:$0xff]
    %v4279 = vld [vmem:[%s4267 + $0x58] sm:$0xff]
    %v4280 = vld [vmem:[%s4267 + $0x60] sm:$0xff]
    %v4281 = vld [vmem:[%s4267 + $0x68] sm:$0xff]
    %v4282 = vld [vmem:[%s4267 + $0x70] sm:$0xff]
    %v4283 = vld [vmem:[%s4267 + $0x78] sm:$0xff]
    %v4284 = vld [vmem:[%s4267 + $0x80] sm:$0xff]
    %v4285 = vld [vmem:[%s4267 + $0x88] sm:$0xff]
    %v4286 = vld [vmem:[%s4267 + $0x90] sm:$0xff]
    %v4287 = vld [vmem:[%s4267 + $0x98] sm:$0xff]
    %v4288 = vld [vmem:[%s4267 + $0xa0] sm:$0xff]
    %v4289 = vld [vmem:[%s4267 + $0xa8] sm:$0xff]
    %v4290 = vld [vmem:[%s4267 + $0xb0] sm:$0xff]
    %v4291 = vld [vmem:[%s4267 + $0xb8] sm:$0xff]
    %v4292 = vld [vmem:[%s4267 + $0xc0] sm:$0xff]
    %v4293 = vld [vmem:[%s4267 + $0xc8] sm:$0xff]
    %v4294 = vld [vmem:[%s4267 + $0xd0] sm:$0xff]
    %v4295 = vld [vmem:[%s4267 + $0xd8] sm:$0xff]
    %v4296 = vld [vmem:[%s4267 + $0xe0] sm:$0xff]
    %v4297 = vld [vmem:[%s4267 + $0xe8] sm:$0xff]
    %v4298 = vld [vmem:[%s4267 + $0xf0] sm:$0xff]
    %v4299 = vld [vmem:[%s4267 + $0xf8] sm:$0xff]
    %v4300 = vlaneseq
    %v4301 = vshrl.u32 %v4300, 7
    %v4302 = vsub.s32 1, %v4301
    %v4303 = vrot.slane %v128, %v4302
    %v4304 = vlaneseq
    %v4305 = vshrl.u32 %v4304, 7
    %v4306 = vsub.s32 3, %v4305
    %v4307 = vrot.slane %v128, %v4306
    %v4308 = vlaneseq
    %v4309 = vshrl.u32 %v4308, 7
    %v4310 = vsub.s32 5, %v4309
    %v4311 = vrot.slane %v128, %v4310
    %v4312 = vlaneseq
    %v4313 = vshrl.u32 %v4312, 7
    %v4314 = vsub.s32 7, %v4313
    %v4315 = vrot.slane %v128, %v4314
    %v4320 = vlaneseq
    %v4321 = vshrl.u32 %v4320, 7
    %v4322 = vsub.s32 1, %v4321
    %v4323 = vrot.slane %v4303, %v4322
    %v4324 = vlaneseq
    %v4325 = vshrl.u32 %v4324, 7
    %v4326 = vsub.s32 1, %v4325
    %v4327 = vrot.slane %v4307, %v4326
    %v4328 = vlaneseq
    %v4329 = vshrl.u32 %v4328, 7
    %v4330 = vsub.s32 1, %v4329
    %v4331 = vrot.slane %v4311, %v4330
    %v4332 = vlaneseq
    %v4333 = vshrl.u32 %v4332, 7
    %v4334 = vsub.s32 1, %v4333
    %v4335 = vrot.slane %v4315, %v4334
    %v4368 = vunpack.c.l.b16 %v4268
    %v4369 = vunpack.c.h.b16 %v4268
    %v4370 = vunpack.c.l.b16 %v4269
    %v4371 = vunpack.c.h.b16 %v4269
    %v4372 = vunpack.c.l.b16 %v4270
    %v4373 = vunpack.c.h.b16 %v4270
    %v4374 = vunpack.c.l.b16 %v4271
    %v4375 = vunpack.c.h.b16 %v4271
    %v4376 = vunpack.c.l.b16 %v4272
    %v4377 = vunpack.c.h.b16 %v4272
    %v4378 = vunpack.c.l.b16 %v4273
    %v4379 = vunpack.c.h.b16 %v4273
    %v4380 = vunpack.c.l.b16 %v4274
    %v4381 = vunpack.c.h.b16 %v4274
    %v4382 = vunpack.c.l.b16 %v4275
    %v4383 = vunpack.c.h.b16 %v4275
    %v4384 = vunpack.c.l.b16 %v4276
    %v4385 = vunpack.c.h.b16 %v4276
    %v4386 = vunpack.c.l.b16 %v4277
    %v4387 = vunpack.c.h.b16 %v4277
    %v4388 = vunpack.c.l.b16 %v4278
    %v4389 = vunpack.c.h.b16 %v4278
    %v4390 = vunpack.c.l.b16 %v4279
    %v4391 = vunpack.c.h.b16 %v4279
    %v4392 = vunpack.c.l.b16 %v4280
    %v4393 = vunpack.c.h.b16 %v4280
    %v4394 = vunpack.c.l.b16 %v4281
    %v4395 = vunpack.c.h.b16 %v4281
    %v4396 = vunpack.c.l.b16 %v4282
    %v4397 = vunpack.c.h.b16 %v4282
    %v4398 = vunpack.c.l.b16 %v4283
    %v4399 = vunpack.c.h.b16 %v4283
    %v4400 = vunpack.c.l.b16 %v4284
    %v4401 = vunpack.c.h.b16 %v4284
    %v4402 = vunpack.c.l.b16 %v4285
    %v4403 = vunpack.c.h.b16 %v4285
    %v4404 = vunpack.c.l.b16 %v4286
    %v4405 = vunpack.c.h.b16 %v4286
    %v4406 = vunpack.c.l.b16 %v4287
    %v4407 = vunpack.c.h.b16 %v4287
    %v4408 = vunpack.c.l.b16 %v4288
    %v4409 = vunpack.c.h.b16 %v4288
    %v4410 = vunpack.c.l.b16 %v4289
    %v4411 = vunpack.c.h.b16 %v4289
    %v4412 = vunpack.c.l.b16 %v4290
    %v4413 = vunpack.c.h.b16 %v4290
    %v4414 = vunpack.c.l.b16 %v4291
    %v4415 = vunpack.c.h.b16 %v4291
    %v4416 = vunpack.c.l.b16 %v4292
    %v4417 = vunpack.c.h.b16 %v4292
    %v4418 = vunpack.c.l.b16 %v4293
    %v4419 = vunpack.c.h.b16 %v4293
    %v4420 = vunpack.c.l.b16 %v4294
    %v4421 = vunpack.c.h.b16 %v4294
    %v4422 = vunpack.c.l.b16 %v4295
    %v4423 = vunpack.c.h.b16 %v4295
    %v4424 = vunpack.c.l.b16 %v4296
    %v4425 = vunpack.c.h.b16 %v4296
    %v4426 = vunpack.c.l.b16 %v4297
    %v4427 = vunpack.c.h.b16 %v4297
    %v4428 = vunpack.c.l.b16 %v4298
    %v4429 = vunpack.c.h.b16 %v4298
    %v4430 = vunpack.c.l.b16 %v4299
    %v4431 = vunpack.c.h.b16 %v4299
    %v4432 = vpack.c.b16 %v4372, %v4368
    %v4433 = vpack.c.b16 %v4373, %v4369
    %v4434 = vpack.c.b16 %v4374, %v4370
    %v4435 = vpack.c.b16 %v4375, %v4371
    %v4436 = vpack.c.b16 %v4380, %v4376
    %v4437 = vpack.c.b16 %v4381, %v4377
    %v4438 = vpack.c.b16 %v4382, %v4378
    %v4439 = vpack.c.b16 %v4383, %v4379
    %v4440 = vpack.c.b16 %v4388, %v4384
    %v4441 = vpack.c.b16 %v4389, %v4385
    %v4442 = vpack.c.b16 %v4390, %v4386
    %v4443 = vpack.c.b16 %v4391, %v4387
    %v4444 = vpack.c.b16 %v4396, %v4392
    %v4445 = vpack.c.b16 %v4397, %v4393
    %v4446 = vpack.c.b16 %v4398, %v4394
    %v4447 = vpack.c.b16 %v4399, %v4395
    %v4448 = vpack.c.b16 %v4404, %v4400
    %v4449 = vpack.c.b16 %v4405, %v4401
    %v4450 = vpack.c.b16 %v4406, %v4402
    %v4451 = vpack.c.b16 %v4407, %v4403
    %v4452 = vpack.c.b16 %v4412, %v4408
    %v4453 = vpack.c.b16 %v4413, %v4409
    %v4454 = vpack.c.b16 %v4414, %v4410
    %v4455 = vpack.c.b16 %v4415, %v4411
    %v4456 = vpack.c.b16 %v4420, %v4416
    %v4457 = vpack.c.b16 %v4421, %v4417
    %v4458 = vpack.c.b16 %v4422, %v4418
    %v4459 = vpack.c.b16 %v4423, %v4419
    %v4460 = vpack.c.b16 %v4428, %v4424
    %v4461 = vpack.c.b16 %v4429, %v4425
    %v4462 = vpack.c.b16 %v4430, %v4426
    %v4463 = vpack.c.b16 %v4431, %v4427
    %4496 = vmatprep.subr.bf16.mxu0 %v4433
    %4497 = vmatpush1.bf16.msra.mxu0 %v4432
    %4498 = vmatprep.subr.bf16.mxu0 %v4437
    %4499 = vmatpush1.bf16.msra.mxu0 %v4436
    %4500 = vmatprep.subr.bf16.mxu0 %v4441
    %4501 = vmatpush1.bf16.msra.mxu0 %v4440
    %4502 = vmatprep.subr.bf16.mxu0 %v4445
    %4503 = vmatpush1.bf16.msra.mxu0 %v4444
    %4504 = vmatprep.subr.bf16.mxu0 %v4449
    %4505 = vmatpush1.bf16.msra.mxu0 %v4448
    %4506 = vmatprep.subr.bf16.mxu0 %v4453
    %4507 = vmatpush1.bf16.msra.mxu0 %v4452
    %4508 = vmatprep.subr.bf16.mxu0 %v4457
    %4509 = vmatpush1.bf16.msra.mxu0 %v4456
    %4510 = vmatprep.subr.bf16.mxu0 %v4461
    %4511 = vmatpush1.bf16.msra.mxu0 %v4460
    %4512 = vmatprep.subr.bf16.mxu0 0
    %4513 = vmatpush1.bf16.msra.mxu0 0
    %4514 = vmatprep.subr.bf16.mxu0 0
    %4515 = vmatpush1.bf16.msra.mxu0 0
    %4516 = vmatprep.subr.bf16.mxu0 0
    %4517 = vmatpush1.bf16.msra.mxu0 0
    %4518 = vmatprep.subr.bf16.mxu0 0
    %4519 = vmatpush1.bf16.msra.mxu0 0
    %4520 = vmatprep.subr.bf16.mxu0 0
    %4521 = vmatpush1.bf16.msra.mxu0 0
    %4522 = vmatprep.subr.bf16.mxu0 0
    %4523 = vmatpush1.bf16.msra.mxu0 0
    %4524 = vmatprep.subr.bf16.mxu0 0
    %4525 = vmatpush1.bf16.msra.mxu0 0
    %4526 = vmatprep.subr.bf16.mxu0 0
    %4527 = vmatpush1.bf16.msra.mxu0 0
    %4528 = vmatprep.mubr.bf16.mxu0 0
    %4529 = vmatmul.mubr.bf16.gmra.mrb[0].mxu0 %v4266
    %v4530 = vpop.f32.mrb[0].mxu0
    %v4531 = vadd.f32 %v4323, %v4530
    %v4532 = vpop.f32.mrb[0].mxu0
    %v4533 = vadd.f32 %v4327, %v4532
    %v4534 = vpop.f32.mrb[0].mxu0
    %v4535 = vadd.f32 %v4323, %v4534
    %v4536 = vpop.f32.mrb[0].mxu0
    %v4537 = vadd.f32 %v4327, %v4536
    %4538 = vdwg.mxu0
    %4539 = vmatprep.subr.bf16.mxu0 %v4435
    %4540 = vmatpush1.bf16.msra.mxu0 %v4434
    %4541 = vmatprep.subr.bf16.mxu0 %v4439
    %4542 = vmatpush1.bf16.msra.mxu0 %v4438
    %4543 = vmatprep.subr.bf16.mxu0 %v4443
    %4544 = vmatpush1.bf16.msra.mxu0 %v4442
    %4545 = vmatprep.subr.bf16.mxu0 %v4447
    %4546 = vmatpush1.bf16.msra.mxu0 %v4446
    %4547 = vmatprep.subr.bf16.mxu0 %v4451
    %4548 = vmatpush1.bf16.msra.mxu0 %v4450
    %4549 = vmatprep.subr.bf16.mxu0 %v4455
    %4550 = vmatpush1.bf16.msra.mxu0 %v4454
    %4551 = vmatprep.subr.bf16.mxu0 %v4459
    %4552 = vmatpush1.bf16.msra.mxu0 %v4458
    %4553 = vmatprep.subr.bf16.mxu0 %v4463
    %4554 = vmatpush1.bf16.msra.mxu0 %v4462
    %4555 = vmatprep.subr.bf16.mxu0 0
    %4556 = vmatpush1.bf16.msra.mxu0 0
    %4557 = vmatprep.subr.bf16.mxu0 0
    %4558 = vmatpush1.bf16.msra.mxu0 0
    %4559 = vmatprep.subr.bf16.mxu0 0
    %4560 = vmatpush1.bf16.msra.mxu0 0
    %4561 = vmatprep.subr.bf16.mxu0 0
    %4562 = vmatpush1.bf16.msra.mxu0 0
    %4563 = vmatprep.subr.bf16.mxu0 0
    %4564 = vmatpush1.bf16.msra.mxu0 0
    %4565 = vmatprep.subr.bf16.mxu0 0
    %4566 = vmatpush1.bf16.msra.mxu0 0
    %4567 = vmatprep.subr.bf16.mxu0 0
    %4568 = vmatpush1.bf16.msra.mxu0 0
    %4569 = vmatprep.subr.bf16.mxu0 0
    %4570 = vmatpush1.bf16.msra.mxu0 0
    %4571 = vmatprep.mubr.bf16.mxu0 0
    %4572 = vmatmul.mubr.bf16.gmra.mrb[0].mxu0 %v4266
    %v4573 = vpop.f32.mrb[0].mxu0
    %v4574 = vadd.f32 %v4331, %v4573
    %v4575 = vpop.f32.mrb[0].mxu0
    %v4576 = vadd.f32 %v4335, %v4575
    %v4577 = vpop.f32.mrb[0].mxu0
    %v4578 = vadd.f32 %v4331, %v4577
    %v4579 = vpop.f32.mrb[0].mxu0
    %v4580 = vadd.f32 %v4335, %v4579
    %4581 = vdwg.mxu0
    %v4582 = vmul.f32 %v4531, 0.5
    %v4583 = vmul.f32 %v4533, 0.5
    %v4584 = vmul.f32 %v4574, 0.5
    %v4585 = vmul.f32 %v4576, 0.5
    %v4586 = vmul.f32 %v4535, 0.5
    %v4587 = vmul.f32 %v4537, 0.5
    %v4588 = vmul.f32 %v4578, 0.5
    %v4589 = vmul.f32 %v4580, 0.5
    %v4590 = vmul.f32 %v4531, 0.044715
    %v4591 = vmul.f32 %v4533, 0.044715
    %v4592 = vmul.f32 %v4574, 0.044715
    %v4593 = vmul.f32 %v4576, 0.044715
    %v4594 = vmul.f32 %v4535, 0.044715
    %v4595 = vmul.f32 %v4537, 0.044715
    %v4596 = vmul.f32 %v4578, 0.044715
    %v4597 = vmul.f32 %v4580, 0.044715
    %v4598 = vmul.f32 %v4590, %v4531
    %v4599 = vmul.f32 %v4591, %v4533
    %v4600 = vmul.f32 %v4592, %v4574
    %v4601 = vmul.f32 %v4593, %v4576
    %v4602 = vmul.f32 %v4594, %v4535
    %v4603 = vmul.f32 %v4595, %v4537
    %v4604 = vmul.f32 %v4596, %v4578
    %v4605 = vmul.f32 %v4597, %v4580
    %v4606 = vmul.f32 %v4598, %v4531
    %v4607 = vmul.f32 %v4599, %v4533
    %v4608 = vmul.f32 %v4600, %v4574
    %v4609 = vmul.f32 %v4601, %v4576
    %v4610 = vmul.f32 %v4602, %v4535
    %v4611 = vmul.f32 %v4603, %v4537
    %v4612 = vmul.f32 %v4604, %v4578
    %v4613 = vmul.f32 %v4605, %v4580
    %v4614 = vadd.f32 %v4531, %v4606
    %v4615 = vadd.f32 %v4533, %v4607
    %v4616 = vadd.f32 %v4574, %v4608
    %v4617 = vadd.f32 %v4576, %v4609
    %v4618 = vadd.f32 %v4535, %v4610
    %v4619 = vadd.f32 %v4537, %v4611
    %v4620 = vadd.f32 %v4578, %v4612
    %v4621 = vadd.f32 %v4580, %v4613
    %v4622 = vmul.f32 %v4614, 0.7978846
    %v4623 = vmul.f32 %v4615, 0.7978846
    %v4624 = vmul.f32 %v4616, 0.7978846
    %v4625 = vmul.f32 %v4617, 0.7978846
    %v4626 = vmul.f32 %v4618, 0.7978846
    %v4627 = vmul.f32 %v4619, 0.7978846
    %v4628 = vmul.f32 %v4620, 0.7978846
    %v4629 = vmul.f32 %v4621, 0.7978846
    %v4630 = vtanh.pop %v4622
    %v4631 = vtanh.pop %v4623
    %v4632 = vtanh.pop %v4624
    %v4633 = vtanh.pop %v4625
    %v4634 = vtanh.pop %v4626
    %v4635 = vtanh.pop %v4627
    %v4636 = vtanh.pop %v4628
    %v4637 = vtanh.pop %v4629
    %v4638 = vadd.f32 %v4630, 1.0
    %v4639 = vadd.f32 %v4631, 1.0
    %v4640 = vadd.f32 %v4632, 1.0
    %v4641 = vadd.f32 %v4633, 1.0
    %v4642 = vadd.f32 %v4634, 1.0
    %v4643 = vadd.f32 %v4635, 1.0
    %v4644 = vadd.f32 %v4636, 1.0
    %v4645 = vadd.f32 %v4637, 1.0
    %v4646 = vmul.f32 %v4582, %v4638
    %v4647 = vmul.f32 %v4583, %v4639
    %v4648 = vmul.f32 %v4584, %v4640
    %v4649 = vmul.f32 %v4585, %v4641
    %v4650 = vmul.f32 %v4586, %v4642
    %v4651 = vmul.f32 %v4587, %v4643
    %v4652 = vmul.f32 %v4588, %v4644
    %v4653 = vmul.f32 %v4589, %v4645
    %v4654 = vpack.c.bf16 %v4650, %v4646
    %v4655 = vpack.c.bf16 %v4651, %v4647
    %v4656 = vpack.c.bf16 %v4652, %v4648
    %v4657 = vpack.c.bf16 %v4653, %v4649
    %s4658 = scalar_lea.vmem [#allocation11], 256
    %v4659 = vld [vmem:[%s4658] sm:$0xf]
    %v4660 = vld [vmem:[%s4658 + $0x4] sm:$0xf]
    %v4661 = vld [vmem:[%s4658 + $0x8] sm:$0xf]
    %v4662 = vld [vmem:[%s4658 + $0xc] sm:$0xf]
    %v4663 = vld [vmem:[%s4658 + $0x10] sm:$0xf]
    %v4664 = vld [vmem:[%s4658 + $0x14] sm:$0xf]
    %v4665 = vld [vmem:[%s4658 + $0x18] sm:$0xf]
    %v4666 = vld [vmem:[%s4658 + $0x1c] sm:$0xf]
    %v4667 = vld [vmem:[%s4658 + $0x20] sm:$0xf]
    %v4668 = vld [vmem:[%s4658 + $0x24] sm:$0xf]
    %v4669 = vld [vmem:[%s4658 + $0x28] sm:$0xf]
    %v4670 = vld [vmem:[%s4658 + $0x2c] sm:$0xf]
    %v4671 = vld [vmem:[%s4658 + $0x30] sm:$0xf]
    %v4672 = vld [vmem:[%s4658 + $0x34] sm:$0xf]
    %v4673 = vld [vmem:[%s4658 + $0x38] sm:$0xf]
    %v4674 = vld [vmem:[%s4658 + $0x3c] sm:$0xf]
    %v4675 = vld [vmem:[%s4658 + $0x40] sm:$0xf]
    %v4676 = vld [vmem:[%s4658 + $0x44] sm:$0xf]
    %v4677 = vld [vmem:[%s4658 + $0x48] sm:$0xf]
    %v4678 = vld [vmem:[%s4658 + $0x4c] sm:$0xf]
    %v4679 = vld [vmem:[%s4658 + $0x50] sm:$0xf]
    %v4680 = vld [vmem:[%s4658 + $0x54] sm:$0xf]
    %v4681 = vld [vmem:[%s4658 + $0x58] sm:$0xf]
    %v4682 = vld [vmem:[%s4658 + $0x5c] sm:$0xf]
    %v4683 = vld [vmem:[%s4658 + $0x60] sm:$0xf]
    %v4684 = vld [vmem:[%s4658 + $0x64] sm:$0xf]
    %v4685 = vld [vmem:[%s4658 + $0x68] sm:$0xf]
    %v4686 = vld [vmem:[%s4658 + $0x6c] sm:$0xf]
    %v4687 = vld [vmem:[%s4658 + $0x70] sm:$0xf]
    %v4688 = vld [vmem:[%s4658 + $0x74] sm:$0xf]
    %v4689 = vld [vmem:[%s4658 + $0x78] sm:$0xf]
    %v4690 = vld [vmem:[%s4658 + $0x7c] sm:$0xf]
    %v4691 = vld [vmem:[%s4658 + $0x80] sm:$0xf]
    %v4692 = vld [vmem:[%s4658 + $0x84] sm:$0xf]
    %v4693 = vld [vmem:[%s4658 + $0x88] sm:$0xf]
    %v4694 = vld [vmem:[%s4658 + $0x8c] sm:$0xf]
    %v4695 = vld [vmem:[%s4658 + $0x90] sm:$0xf]
    %v4696 = vld [vmem:[%s4658 + $0x94] sm:$0xf]
    %v4697 = vld [vmem:[%s4658 + $0x98] sm:$0xf]
    %v4698 = vld [vmem:[%s4658 + $0x9c] sm:$0xf]
    %v4699 = vld [vmem:[%s4658 + $0xa0] sm:$0xf]
    %v4700 = vld [vmem:[%s4658 + $0xa4] sm:$0xf]
    %v4701 = vld [vmem:[%s4658 + $0xa8] sm:$0xf]
    %v4702 = vld [vmem:[%s4658 + $0xac] sm:$0xf]
    %v4703 = vld [vmem:[%s4658 + $0xb0] sm:$0xf]
    %v4704 = vld [vmem:[%s4658 + $0xb4] sm:$0xf]
    %v4705 = vld [vmem:[%s4658 + $0xb8] sm:$0xf]
    %v4706 = vld [vmem:[%s4658 + $0xbc] sm:$0xf]
    %v4707 = vld [vmem:[%s4658 + $0xc0] sm:$0xf]
    %v4708 = vld [vmem:[%s4658 + $0xc4] sm:$0xf]
    %v4709 = vld [vmem:[%s4658 + $0xc8] sm:$0xf]
    %v4710 = vld [vmem:[%s4658 + $0xcc] sm:$0xf]
    %v4711 = vld [vmem:[%s4658 + $0xd0] sm:$0xf]
    %v4712 = vld [vmem:[%s4658 + $0xd4] sm:$0xf]
    %v4713 = vld [vmem:[%s4658 + $0xd8] sm:$0xf]
    %v4714 = vld [vmem:[%s4658 + $0xdc] sm:$0xf]
    %v4715 = vld [vmem:[%s4658 + $0xe0] sm:$0xf]
    %v4716 = vld [vmem:[%s4658 + $0xe4] sm:$0xf]
    %v4717 = vld [vmem:[%s4658 + $0xe8] sm:$0xf]
    %v4718 = vld [vmem:[%s4658 + $0xec] sm:$0xf]
    %v4719 = vld [vmem:[%s4658 + $0xf0] sm:$0xf]
    %v4720 = vld [vmem:[%s4658 + $0xf4] sm:$0xf]
    %v4721 = vld [vmem:[%s4658 + $0xf8] sm:$0xf]
    %v4722 = vld [vmem:[%s4658 + $0xfc] sm:$0xf]
    %v4723 = vlaneseq
    %v4724 = vshrl.u32 %v4723, 7
    %v4725 = vsub.s32 1, %v4724
    %v4726 = vrot.slane %v129, %v4725
    %v4791 = vunpack.c.l.b16 %v4659
    %v4792 = vunpack.c.l.b16 %v4660
    %v4793 = vunpack.c.l.b16 %v4661
    %v4794 = vunpack.c.l.b16 %v4662
    %v4795 = vunpack.c.l.b16 %v4663
    %v4796 = vunpack.c.l.b16 %v4664
    %v4797 = vunpack.c.l.b16 %v4665
    %v4798 = vunpack.c.l.b16 %v4666
    %v4799 = vunpack.c.l.b16 %v4667
    %v4800 = vunpack.c.l.b16 %v4668
    %v4801 = vunpack.c.l.b16 %v4669
    %v4802 = vunpack.c.l.b16 %v4670
    %v4803 = vunpack.c.l.b16 %v4671
    %v4804 = vunpack.c.l.b16 %v4672
    %v4805 = vunpack.c.l.b16 %v4673
    %v4806 = vunpack.c.l.b16 %v4674
    %v4807 = vunpack.c.l.b16 %v4675
    %v4808 = vunpack.c.l.b16 %v4676
    %v4809 = vunpack.c.l.b16 %v4677
    %v4810 = vunpack.c.l.b16 %v4678
    %v4811 = vunpack.c.l.b16 %v4679
    %v4812 = vunpack.c.l.b16 %v4680
    %v4813 = vunpack.c.l.b16 %v4681
    %v4814 = vunpack.c.l.b16 %v4682
    %v4815 = vunpack.c.l.b16 %v4683
    %v4816 = vunpack.c.l.b16 %v4684
    %v4817 = vunpack.c.l.b16 %v4685
    %v4818 = vunpack.c.l.b16 %v4686
    %v4819 = vunpack.c.l.b16 %v4687
    %v4820 = vunpack.c.l.b16 %v4688
    %v4821 = vunpack.c.l.b16 %v4689
    %v4822 = vunpack.c.l.b16 %v4690
    %v4823 = vunpack.c.l.b16 %v4691
    %v4824 = vunpack.c.l.b16 %v4692
    %v4825 = vunpack.c.l.b16 %v4693
    %v4826 = vunpack.c.l.b16 %v4694
    %v4827 = vunpack.c.l.b16 %v4695
    %v4828 = vunpack.c.l.b16 %v4696
    %v4829 = vunpack.c.l.b16 %v4697
    %v4830 = vunpack.c.l.b16 %v4698
    %v4831 = vunpack.c.l.b16 %v4699
    %v4832 = vunpack.c.l.b16 %v4700
    %v4833 = vunpack.c.l.b16 %v4701
    %v4834 = vunpack.c.l.b16 %v4702
    %v4835 = vunpack.c.l.b16 %v4703
    %v4836 = vunpack.c.l.b16 %v4704
    %v4837 = vunpack.c.l.b16 %v4705
    %v4838 = vunpack.c.l.b16 %v4706
    %v4839 = vunpack.c.l.b16 %v4707
    %v4840 = vunpack.c.l.b16 %v4708
    %v4841 = vunpack.c.l.b16 %v4709
    %v4842 = vunpack.c.l.b16 %v4710
    %v4843 = vunpack.c.l.b16 %v4711
    %v4844 = vunpack.c.l.b16 %v4712
    %v4845 = vunpack.c.l.b16 %v4713
    %v4846 = vunpack.c.l.b16 %v4714
    %v4847 = vunpack.c.l.b16 %v4715
    %v4848 = vunpack.c.l.b16 %v4716
    %v4849 = vunpack.c.l.b16 %v4717
    %v4850 = vunpack.c.l.b16 %v4718
    %v4851 = vunpack.c.l.b16 %v4719
    %v4852 = vunpack.c.l.b16 %v4720
    %v4853 = vunpack.c.l.b16 %v4721
    %v4854 = vunpack.c.l.b16 %v4722
    %v4855 = vpack.c.b16 %v4792, %v4791
    %v4856 = vpack.c.b16 %v4794, %v4793
    %v4857 = vpack.c.b16 %v4796, %v4795
    %v4858 = vpack.c.b16 %v4798, %v4797
    %v4859 = vpack.c.b16 %v4800, %v4799
    %v4860 = vpack.c.b16 %v4802, %v4801
    %v4861 = vpack.c.b16 %v4804, %v4803
    %v4862 = vpack.c.b16 %v4806, %v4805
    %v4863 = vpack.c.b16 %v4808, %v4807
    %v4864 = vpack.c.b16 %v4810, %v4809
    %v4865 = vpack.c.b16 %v4812, %v4811
    %v4866 = vpack.c.b16 %v4814, %v4813
    %v4867 = vpack.c.b16 %v4816, %v4815
    %v4868 = vpack.c.b16 %v4818, %v4817
    %v4869 = vpack.c.b16 %v4820, %v4819
    %v4870 = vpack.c.b16 %v4822, %v4821
    %v4871 = vpack.c.b16 %v4824, %v4823
    %v4872 = vpack.c.b16 %v4826, %v4825
    %v4873 = vpack.c.b16 %v4828, %v4827
    %v4874 = vpack.c.b16 %v4830, %v4829
    %v4875 = vpack.c.b16 %v4832, %v4831
    %v4876 = vpack.c.b16 %v4834, %v4833
    %v4877 = vpack.c.b16 %v4836, %v4835
    %v4878 = vpack.c.b16 %v4838, %v4837
    %v4879 = vpack.c.b16 %v4840, %v4839
    %v4880 = vpack.c.b16 %v4842, %v4841
    %v4881 = vpack.c.b16 %v4844, %v4843
    %v4882 = vpack.c.b16 %v4846, %v4845
    %v4883 = vpack.c.b16 %v4848, %v4847
    %v4884 = vpack.c.b16 %v4850, %v4849
    %v4885 = vpack.c.b16 %v4852, %v4851
    %v4886 = vpack.c.b16 %v4854, %v4853
    %4919 = vmatprep.subr.bf16.mxu0 0
    %4920 = vmatpush1.bf16.msra.mxu0 %v4855
    %4921 = vmatprep.subr.bf16.mxu0 0
    %4922 = vmatpush1.bf16.msra.mxu0 %v4856
    %4923 = vmatprep.subr.bf16.mxu0 0
    %4924 = vmatpush1.bf16.msra.mxu0 %v4857
    %4925 = vmatprep.subr.bf16.mxu0 0
    %4926 = vmatpush1.bf16.msra.mxu0 %v4858
    %4927 = vmatprep.subr.bf16.mxu0 0
    %4928 = vmatpush1.bf16.msra.mxu0 %v4859
    %4929 = vmatprep.subr.bf16.mxu0 0
    %4930 = vmatpush1.bf16.msra.mxu0 %v4860
    %4931 = vmatprep.subr.bf16.mxu0 0
    %4932 = vmatpush1.bf16.msra.mxu0 %v4861
    %4933 = vmatprep.subr.bf16.mxu0 0
    %4934 = vmatpush1.bf16.msra.mxu0 %v4862
    %4935 = vmatprep.subr.bf16.mxu0 0
    %4936 = vmatpush1.bf16.msra.mxu0 %v4863
    %4937 = vmatprep.subr.bf16.mxu0 0
    %4938 = vmatpush1.bf16.msra.mxu0 %v4864
    %4939 = vmatprep.subr.bf16.mxu0 0
    %4940 = vmatpush1.bf16.msra.mxu0 %v4865
    %4941 = vmatprep.subr.bf16.mxu0 0
    %4942 = vmatpush1.bf16.msra.mxu0 %v4866
    %4943 = vmatprep.subr.bf16.mxu0 0
    %4944 = vmatpush1.bf16.msra.mxu0 %v4867
    %4945 = vmatprep.subr.bf16.mxu0 0
    %4946 = vmatpush1.bf16.msra.mxu0 %v4868
    %4947 = vmatprep.subr.bf16.mxu0 0
    %4948 = vmatpush1.bf16.msra.mxu0 %v4869
    %4949 = vmatprep.subr.bf16.mxu0 0
    %4950 = vmatpush1.bf16.msra.mxu0 %v4870
    %4951 = vmatprep.mubr.bf16.mxu0 %v4655
    %4952 = vmatmul.mubr.bf16.gmra.mrb[0].mxu0 %v4654
    %v4953 = vpop.f32.mrb[0].mxu0
    %v4954 = vadd.f32 %v4726, %v4953
    %v4955 = vpop.f32.mrb[0].mxu0
    %v4956 = vpop.f32.mrb[0].mxu0
    %v4957 = vadd.f32 %v4726, %v4956
    %v4958 = vpop.f32.mrb[0].mxu0
    %4959 = vdwg.mxu0
    %4960 = vmatprep.subr.bf16.mxu0 0
    %4961 = vmatpush1.bf16.msra.mxu0 %v4871
    %4962 = vmatprep.subr.bf16.mxu0 0
    %4963 = vmatpush1.bf16.msra.mxu0 %v4872
    %4964 = vmatprep.subr.bf16.mxu0 0
    %4965 = vmatpush1.bf16.msra.mxu0 %v4873
    %4966 = vmatprep.subr.bf16.mxu0 0
    %4967 = vmatpush1.bf16.msra.mxu0 %v4874
    %4968 = vmatprep.subr.bf16.mxu0 0
    %4969 = vmatpush1.bf16.msra.mxu0 %v4875
    %4970 = vmatprep.subr.bf16.mxu0 0
    %4971 = vmatpush1.bf16.msra.mxu0 %v4876
    %4972 = vmatprep.subr.bf16.mxu0 0
    %4973 = vmatpush1.bf16.msra.mxu0 %v4877
    %4974 = vmatprep.subr.bf16.mxu0 0
    %4975 = vmatpush1.bf16.msra.mxu0 %v4878
    %4976 = vmatprep.subr.bf16.mxu0 0
    %4977 = vmatpush1.bf16.msra.mxu0 %v4879
    %4978 = vmatprep.subr.bf16.mxu0 0
    %4979 = vmatpush1.bf16.msra.mxu0 %v4880
    %4980 = vmatprep.subr.bf16.mxu0 0
    %4981 = vmatpush1.bf16.msra.mxu0 %v4881
    %4982 = vmatprep.subr.bf16.mxu0 0
    %4983 = vmatpush1.bf16.msra.mxu0 %v4882
    %4984 = vmatprep.subr.bf16.mxu0 0
    %4985 = vmatpush1.bf16.msra.mxu0 %v4883
    %4986 = vmatprep.subr.bf16.mxu0 0
    %4987 = vmatpush1.bf16.msra.mxu0 %v4884
    %4988 = vmatprep.subr.bf16.mxu0 0
    %4989 = vmatpush1.bf16.msra.mxu0 %v4885
    %4990 = vmatprep.subr.bf16.mxu0 0
    %4991 = vmatpush1.bf16.msra.mxu0 %v4886
    %4992 = vmatprep.mubr.bf16.mxu0 %v4657
    %4993 = vmatmul.mubr.bf16.gmra.mrb[0].mxu0 %v4656
    %v4994 = vpop.f32.mrb[0].mxu0
    %v4995 = vadd.f32 %v4954, %v4994
    %v4996 = vpop.f32.mrb[0].mxu0
    %v4997 = vpop.f32.mrb[0].mxu0
    %v4998 = vadd.f32 %v4957, %v4997
    %v4999 = vpop.f32.mrb[0].mxu0
    %5000 = vdwg.mxu0
    %v5001 = vadd.f32 %v3450, %v4995
    %v5002 = vadd.f32 %v3451, %v4998
    %5003 = vst [vmem:[#allocation14] sm:$0xff] %v5001
    %5004 = vst [vmem:[#allocation14 + $0x8] sm:$0xff] %v5002
    // Predicated region
    $region66: #{tpu_custom_call.1} parent=1 // pred_check
      _
    $region67: #{tpu_custom_call.1} parent=1 // pred_check_branch
      %5006 = sbr.rel (0) target = $region69
    $region68: #{tpu_custom_call.1} parent=1 // pred_region
      %s5008 = ssub.s32 256, 256
      %5009 = vsyncadd [#allocation4], %s5008
      %s5010 = sshll.u32 [#allocation13], 4
      %s5011 = int_to_ptr.vmem [resolvable:$true] %s5010
      %5016 = dma.vmem_to_hbm [thread:$0]  %s5011, 256, %s10, [#allocation4], 128, 128, 8
    $region69: #{tpu_custom_call.1} parent=1 // pred_fallthru
      _
    // Predicated region
    $region70: #{tpu_custom_call.1} parent=1 // pred_check
      _
    $region71: #{tpu_custom_call.1} parent=1 // pred_check_branch
      %5018 = sbr.rel (0) target = $region73
    $region72: #{tpu_custom_call.1} parent=1 // pred_region
      %s5020 = ssub.s32 256, 256
      %5021 = vsyncadd [#allocation15], %s5020
      %s5022 = sshll.u32 [#allocation14], 4
      %s5023 = int_to_ptr.vmem [resolvable:$true] %s5022
      %5028 = dma.vmem_to_hbm [thread:$0]  %s5023, 256, %s11, [#allocation15], 128, 128, 8
    $region73: #{tpu_custom_call.1} parent=1 // pred_fallthru
      _
    // Predicated region
    $region74: #{tpu_custom_call.1} parent=1 // pred_check
      _
    $region75: #{tpu_custom_call.1} parent=1 // pred_check_branch
      %5030 = sbr.rel (0) target = $region77
    $region76: #{tpu_custom_call.1} parent=1 // pred_region
      %5031 = dma.done [#allocation4], 256
    $region77: #{tpu_custom_call.1} parent=1 // pred_fallthru
      _
    // Predicated region
    $region78: #{tpu_custom_call.1} parent=1 // pred_check
      _
    $region79: #{tpu_custom_call.1} parent=1 // pred_check_branch
      %5033 = sbr.rel (0) target = $region81
    $region80: #{tpu_custom_call.1} parent=1 // pred_region
      %5034 = dma.done [#allocation15], 256
    $region81: #{tpu_custom_call.1} parent=1 // pred_fallthru
      _
    %5035 = vsyncpa [#allocation3], 1
    %5036 = vsyncpa [#allocation6], 1
    %5037 = vsyncpa [#allocation9], 1
    %5038 = vsyncpa [#allocation12], 1
    %5039 = vsyncpa [#allocation4], 1
    %5040 = vsyncpa [#allocation15], 1

</llo_original>
